<compile_context>
chip_gen: v5e
topology: v5e:2x2
jax: 0.10.0
libtpu: 0.0.40
codegen_flags: <defaults>
</compile_context>

<pallas_src>
import functools

import numpy as np
import jax
import jax.numpy as jnp
from jax import lax
from jax.experimental import pallas as pl
from jax.experimental.pallas import tpu as pltpu

LN_EPS = 1e-5  # nn.LayerNorm default


# ---------------------------------------------------------------------------
# Kernel 1: x + attn(LN1(x)) + attn1(LN11(x))     (block_b batch items per step)
# ---------------------------------------------------------------------------
def _attn_pair_kernel(x_ref,
                      g1_ref, b1_ref, g11_ref, b11_ref,
                      wq_a_ref, wk_a_ref, wv_a_ref, wproj_a_ref, bproj_a_ref,
                      wq_b_ref, wk_b_ref, wv_b_ref, wproj_b_ref, bproj_b_ref,
                      out_ref,
                      q_scr, k_scr, v_scr, o_scr,          # VMEM (bt*n, c) bf16
                      *, bt, n, c, h, n_valid):
    hd = c // h
    m = bt * n
    x = x_ref[...].reshape(m, c)                           # (M, C) f32 residual

    # ---- shared LayerNorm statistics (independent of gamma/beta) ----
    mu = jnp.mean(x, axis=-1, keepdims=True)
    xc = x - mu
    var = jnp.mean(xc * xc, axis=-1, keepdims=True)
    xhat = xc * lax.rsqrt(var + LN_EPS)                    # f32, reused by both branches

    # mask for padded key columns (only materialized if padding was added)
    if n_valid < n:
        key_mask = lax.broadcasted_iota(jnp.int32, (n, n), 1) < n_valid
    else:
        key_mask = None

    def attn_branch(g_ref, b_ref, wq_ref, wk_ref, wv_ref, wproj_ref, bproj_ref):
        hln = (xhat * g_ref[0] + b_ref[0]).astype(jnp.bfloat16)
        # three full-depth (M,C)@(C,C) projections; softmax scale already folded into Wq
        q_scr[...] = jnp.dot(hln, wq_ref[...],
                             preferred_element_type=jnp.float32).astype(jnp.bfloat16)
        k_scr[...] = jnp.dot(hln, wk_ref[...],
                             preferred_element_type=jnp.float32).astype(jnp.bfloat16)
        v_scr[...] = jnp.dot(hln, wv_ref[...],
                             preferred_element_type=jnp.float32).astype(jnp.bfloat16)

        def item_body(bi, carry):
            row = pl.multiple_of(bi * n, 8)                # n is padded to a multiple of 8
            for hh in range(h):                            # static unroll over heads only
                qh = q_scr[pl.ds(row, n), hh * hd:(hh + 1) * hd]
                kh = k_scr[pl.ds(row, n), hh * hd:(hh + 1) * hd]
                vh = v_scr[pl.ds(row, n), hh * hd:(hh + 1) * hd]
                # q @ k^T without materializing a transpose
                logits = lax.dot_general(qh, kh, (((1,), (1,)), ((), ())),
                                         preferred_element_type=jnp.float32)   # (N, N)
                if key_mask is not None:
                    logits = jnp.where(key_mask, logits, -jnp.inf)
                logits = logits - jnp.max(logits, axis=-1, keepdims=True)
                p = jnp.exp(logits)
                p = p * pl.reciprocal(jnp.sum(p, axis=-1, keepdims=True), approx=True)
                o = jnp.dot(p.astype(jnp.bfloat16), vh,
                            preferred_element_type=jnp.float32)                # (N, hd)
                # lane-offset store into the head-output slab (no per-head projection)
                o_scr[pl.ds(row, n), hh * hd:(hh + 1) * hd] = o.astype(jnp.bfloat16)
            return carry

        lax.fori_loop(0, bt, item_body, 0)
        # single full-depth output projection on the whole (M, C) slab
        out = jnp.dot(o_scr[...], wproj_ref[...], preferred_element_type=jnp.float32)
        return out + bproj_ref[0]

    a = attn_branch(g1_ref, b1_ref, wq_a_ref, wk_a_ref, wv_a_ref, wproj_a_ref, bproj_a_ref)
    b = attn_branch(g11_ref, b11_ref, wq_b_ref, wk_b_ref, wv_b_ref, wproj_b_ref, bproj_b_ref)
    out_ref[...] = (x + a + b).reshape(bt, n, c).astype(out_ref.dtype)


# ---------------------------------------------------------------------------
# Kernel 2: x + mlp(LN2(x)) + mlp1(LN21(x))        (block_b batch items per step)
# ---------------------------------------------------------------------------
def _mlp_pair_kernel(x_ref,
                     g2_ref, b2_ref, g21_ref, b21_ref,
                     w1_a_ref, bb1_a_ref, w2_a_ref, bb2_a_ref,
                     w1_b_ref, bb1_b_ref, w2_b_ref, bb2_b_ref,
                     out_ref, *, bt, n, c):
    m = bt * n
    x = x_ref[...].reshape(m, c)                           # (M, C)

    # ---- shared LayerNorm statistics ----
    mu = jnp.mean(x, axis=-1, keepdims=True)
    xc = x - mu
    var = jnp.mean(xc * xc, axis=-1, keepdims=True)
    xhat = xc * lax.rsqrt(var + LN_EPS)

    def mlp_branch(g_ref, b_ref, w1_ref, b1_ref, w2_ref, b2_ref):
        hln = (xhat * g_ref[0] + b_ref[0]).astype(jnp.bfloat16)
        y = jnp.dot(hln, w1_ref[...], preferred_element_type=jnp.float32) + b1_ref[0]
        # exact erf GELU to match nn.GELU default; approximate='tanh' would route
        # through the (otherwise idle) EUP but changes numerics slightly.
        y = jax.nn.gelu(y, approximate=False).astype(jnp.bfloat16)
        return jnp.dot(y, w2_ref[...], preferred_element_type=jnp.float32) + b2_ref[0]

    ma = mlp_branch(g2_ref, b2_ref, w1_a_ref, bb1_a_ref, w2_a_ref, bb2_a_ref)
    mb = mlp_branch(g21_ref, b21_ref, w1_b_ref, bb1_b_ref, w2_b_ref, bb2_b_ref)
    out_ref[...] = (x + ma + mb).reshape(bt, n, c).astype(out_ref.dtype)


# ---------------------------------------------------------------------------
# Wrapper helpers
# ---------------------------------------------------------------------------
def _const_spec(shape, single_buffer):
    """Whole-array block with a constant index map (never changes across the grid)."""
    nd = len(shape)
    idx = lambda i, _nd=nd: (0,) * _nd
    if single_buffer:
        # constant blocks never change -> a single buffer is enough (halves weight VMEM)
        return pl.BlockSpec(shape, idx, pipeline_mode=pl.Buffered(1))
    return pl.BlockSpec(shape, idx)


def _vmem_budget_bytes():
    """Generation-aware scoped-VMEM budget (leave compiler/internal-scratch headroom)."""
    try:
        cap = int(getattr(pltpu.get_tpu_info(), "vmem_capacity_bytes", 128 << 20))
    except Exception:
        cap = 128 << 20
    if cap <= (64 << 20):                       # v7x-class: 64 MiB physical per TensorCore
        return min(cap - (12 << 20), 52 << 20)
    return min(cap - (28 << 20), 100 << 20)     # v5e / v6e: 128 MiB physical


def _attn_vmem_need(block_b, n, c, weight_bufs):
    m = block_b * n
    weights = weight_bufs * (8 * c * c * 2 + 8 * c * 4)   # 6 qkv + 2 proj (C,C) bf16 + LN/bias
    act_io = 2 * 2 * m * c * 4                            # x in + out blocks, double-buffered
    scratch = 4 * m * c * 2                               # q/k/v/o bf16 slabs
    tmp = 3 * m * c * 4 + 2 * n * n * 4                   # xhat / branch sums + logits
    return weights + act_io + scratch + tmp


def _mlp_vmem_need(block_b, n, c, hidden, weight_bufs):
    m = block_b * n
    weights = weight_bufs * (4 * c * hidden * 2 + (2 * hidden + 6 * c) * 4)
    act_io = 2 * 2 * m * c * 4
    tmp = 3 * m * c * 4 + m * hidden * (4 + 2)            # xhat/sums + f32 hidden + bf16 hidden
    return weights + act_io + tmp


def _pick_block_b(B, n, c, hidden, budget, weight_bufs):
    cands = [cb for cb in (8, 4, 2, 1) if B % cb == 0]
    fit = [cb for cb in cands
           if max(_attn_vmem_need(cb, n, c, weight_bufs),
                  _mlp_vmem_need(cb, n, c, hidden, weight_bufs)) * 1.25 <= budget]
    if not fit:
        return 1
    # prefer the largest block that still leaves >= 2 (ideally even) grid steps (v7x megacore)
    for cb in fit:
        g = B // cb
        if g >= 2 and g % 2 == 0:
            return cb
    for cb in fit:
        if B // cb >= 2:
            return cb
    return fit[0]


# ---------------------------------------------------------------------------
# Forward
# ---------------------------------------------------------------------------
def block_paralx2_forward(x, params, num_heads, block_b=None, single_buffer_weights=True):
    """x: (B, N, C) float32. params: dict of f32 JAX arrays (see init_params)."""
    B, N, C = x.shape
    assert C % num_heads == 0
    hd = C // num_heads
    hidden = params["w1_a"].shape[1]

    # pad sequence length to a sublane multiple (unmasked stores, layout-free reshape)
    n_pad = -(-N // 8) * 8
    xp = x if n_pad == N else jnp.pad(x, ((0, 0), (0, n_pad - N), (0, 0)))

    budget = _vmem_budget_bytes()
    wb = 1 if single_buffer_weights else 2
    if block_b is None:
        block_b = _pick_block_b(B, n_pad, C, hidden, budget, wb)
    assert B % block_b == 0, "batch must be divisible by block_b"
    grid = (B // block_b,)

    bf16 = lambda a: a.astype(jnp.bfloat16)   # matmul weights -> bf16 once, outside kernels
    f32 = lambda a: a.astype(jnp.float32)     # LN affine + biases stay f32
    scale = float(hd) ** (-0.5)

    # pre-split qkv into Q/K/V and fold the softmax scale into Wq (f32, then bf16)
    def split_qkv(w):
        w = f32(w)
        return bf16(w[:, :C] * scale), bf16(w[:, C:2 * C]), bf16(w[:, 2 * C:])

    wq_a, wk_a, wv_a = split_qkv(params["wqkv_a"])
    wq_b, wk_b, wv_b = split_qkv(params["wqkv_b"])

    x_spec = pl.BlockSpec((block_b, n_pad, C), lambda i: (i, 0, 0))
    out_shape = jax.ShapeDtypeStruct((B, n_pad, C), x.dtype)
    cspec = lambda a: _const_spec(a.shape, single_buffer_weights)

    # --- attention pair ---
    attn_args = (f32(params["g1"]), f32(params["b1"]),
                 f32(params["g11"]), f32(params["b11"]),
                 wq_a, wk_a, wv_a, bf16(params["wproj_a"]), f32(params["bproj_a"]),
                 wq_b, wk_b, wv_b, bf16(params["wproj_b"]), f32(params["bproj_b"]))
    attn_need = int(_attn_vmem_need(block_b, n_pad, C, wb) * 1.25) + (2 << 20)
    x1 = pl.pallas_call(
        functools.partial(_attn_pair_kernel, bt=block_b, n=n_pad, c=C,
                          h=num_heads, n_valid=N),
        out_shape=out_shape,
        grid_spec=pltpu.PrefetchScalarGridSpec(
            num_scalar_prefetch=0, grid=grid,
            in_specs=[x_spec] + [cspec(a) for a in attn_args],
            out_specs=x_spec,
            scratch_shapes=[pltpu.VMEM((block_b * n_pad, C), jnp.bfloat16)] * 4),
        compiler_params=pltpu.CompilerParams(
            dimension_semantics=("parallel",),
            vmem_limit_bytes=int(min(max(attn_need, 32 << 20), budget))),
    )(xp, *attn_args)

    # --- mlp pair ---
    mlp_args = (f32(params["g2"]), f32(params["b2"]),
                f32(params["g21"]), f32(params["b21"]),
                bf16(params["w1_a"]), f32(params["bb1_a"]),
                bf16(params["w2_a"]), f32(params["bb2_a"]),
                bf16(params["w1_b"]), f32(params["bb1_b"]),
                bf16(params["w2_b"]), f32(params["bb2_b"]))
    mlp_need = int(_mlp_vmem_need(block_b, n_pad, C, hidden, wb) * 1.25) + (2 << 20)
    x2 = pl.pallas_call(
        functools.partial(_mlp_pair_kernel, bt=block_b, n=n_pad, c=C),
        out_shape=out_shape,
        grid_spec=pltpu.PrefetchScalarGridSpec(
            num_scalar_prefetch=0, grid=grid,
            in_specs=[x_spec] + [cspec(a) for a in mlp_args],
            out_specs=x_spec),
        compiler_params=pltpu.CompilerParams(
            dimension_semantics=("parallel",),
            vmem_limit_bytes=int(min(max(mlp_need, 32 << 20), budget))),
    )(x1, *mlp_args)

    return x2 if n_pad == N else x2[:, :N, :]


# ---------------------------------------------------------------------------
# Pure-JAX f32 reference (mirrors the PyTorch forward) for correctness checking
# ---------------------------------------------------------------------------
def _reference(x, p, num_heads):
    B, N, C = x.shape
    hd = C // num_heads
    scale = hd ** (-0.5)

    def ln(h, g, b):
        mu = jnp.mean(h, axis=-1, keepdims=True)
        var = jnp.mean((h - mu) ** 2, axis=-1, keepdims=True)
        return (h - mu) / jnp.sqrt(var + LN_EPS) * g[0] + b[0]

    def attn(h, wqkv, wproj, bproj):
        qkv = h @ wqkv
        q, k, v = qkv[..., :C], qkv[..., C:2 * C], qkv[..., 2 * C:]
        q = q.reshape(B, N, num_heads, hd).transpose(0, 2, 1, 3) * scale
        k = k.reshape(B, N, num_heads, hd).transpose(0, 2, 1, 3)
        v = v.reshape(B, N, num_heads, hd).transpose(0, 2, 1, 3)
        a = jax.nn.softmax(q @ k.transpose(0, 1, 3, 2), axis=-1)
        o = (a @ v).transpose(0, 2, 1, 3).reshape(B, N, C)
        return o @ wproj + bproj[0]

    def mlp(h, w1, b1, w2, b2):
        return jax.nn.gelu(h @ w1 + b1[0], approximate=False) @ w2 + b2[0]

    x = x + attn(ln(x, p["g1"], p["b1"]), p["wqkv_a"], p["wproj_a"], p["bproj_a"]) \
          + attn(ln(x, p["g11"], p["b11"]), p["wqkv_b"], p["wproj_b"], p["bproj_b"])
    x = x + mlp(ln(x, p["g2"], p["b2"]), p["w1_a"], p["bb1_a"], p["w2_a"], p["bb2_a"]) \
          + mlp(ln(x, p["g21"], p["b21"]), p["w1_b"], p["bb1_b"], p["w2_b"], p["bb2_b"])
    return x


def init_params(key, dim, num_heads, mlp_ratio=4.0):
    hidden = int(dim * mlp_ratio)
    ks = jax.random.split(key, 24)
    r = lambda k, shape, s=0.02: (s * jax.random.normal(k, shape)).astype(jnp.float32)
    ones = lambda shape: jnp.ones(shape, jnp.float32)
    # Linear weights stored pre-transposed: (in_features, out_features),
    # i.e. y = x @ W matches PyTorch's x @ weight.T.
    return {
        "g1":  ones((1, dim)) + r(ks[0], (1, dim)),  "b1":  r(ks[1], (1, dim)),
        "g11": ones((1, dim)) + r(ks[2], (1, dim)),  "b11": r(ks[3], (1, dim)),
        "g2":  ones((1, dim)) + r(ks[4], (1, dim)),  "b2":  r(ks[5], (1, dim)),
        "g21": ones((1, dim)) + r(ks[6], (1, dim)),  "b21": r(ks[7], (1, dim)),
        # Attention branch A (qkv has no bias: qkv_bias=False default)
        "wqkv_a":  r(ks[8], (dim, 3 * dim)),
        "wproj_a": r(ks[9], (dim, dim)),  "bproj_a": r(ks[10], (1, dim)),
        # Attention branch B
        "wqkv_b":  r(ks[11], (dim, 3 * dim)),
        "wproj_b": r(ks[12], (dim, dim)), "bproj_b": r(ks[13], (1, dim)),
        # MLP branch A
        "w1_a": r(ks[14], (dim, hidden)), "bb1_a": r(ks[15], (1, hidden)),
        "w2_a": r(ks[16], (hidden, dim)), "bb2_a": r(ks[17], (1, dim)),
        # MLP branch B
        "w1_b": r(ks[18], (dim, hidden)), "bb1_b": r(ks[19], (1, hidden)),
        "w2_b": r(ks[20], (hidden, dim)), "bb2_b": r(ks[21], (1, dim)),
    }


if __name__ == "__main__":
    B, N, C, H = 2, 8, 32, 4          # batch, seq, dim, heads  (head_dim = 8)
    key = jax.random.PRNGKey(0)
    kx, kp = jax.random.split(key)
    x = jax.random.normal(kx, (B, N, C), dtype=jnp.float32)
    params = init_params(kp, C, H, mlp_ratio=4.0)

    def run(xx):
        try:
            return jax.block_until_ready(block_paralx2_forward(xx, params, num_heads=H))
        except Exception:
            # Fallback in case this jax build rejects single-buffered constant blocks
            # (pl.Buffered(1)); rerun with default double-buffered weights.
            return jax.block_until_ready(
                block_paralx2_forward(xx, params, num_heads=H, single_buffer_weights=False))

    out = run(x)
    ref = _reference(x, params, H)
    # bf16 matmul inputs (f32 accumulate) + approx reciprocal -> compare at 1e-2
    np.testing.assert_allclose(np.asarray(out), np.asarray(ref), rtol=1e-2, atol=1e-2)

    # also exercise the sequence-padding + padded-key-mask path (N not a multiple of 8)
    x6 = x[:, :6, :]
    out6 = run(x6)
    ref6 = _reference(x6, params, H)
    np.testing.assert_allclose(np.asarray(out6), np.asarray(ref6), rtol=1e-2, atol=1e-2)

    print("KERNEL_OK")
</pallas_src>

<mosaic_0001>
module attributes {stable_mosaic.version = 11 : i64} {
  func.func @_attn_pair_kernel(%arg0: i32, %arg1: memref<1x8x32xf32, #tpu.memory_space<vmem>>, %arg2: memref<1x32xf32, #tpu.memory_space<vmem>>, %arg3: memref<1x32xf32, #tpu.memory_space<vmem>>, %arg4: memref<1x32xf32, #tpu.memory_space<vmem>>, %arg5: memref<1x32xf32, #tpu.memory_space<vmem>>, %arg6: memref<32x32xbf16, #tpu.memory_space<vmem>>, %arg7: memref<32x32xbf16, #tpu.memory_space<vmem>>, %arg8: memref<32x32xbf16, #tpu.memory_space<vmem>>, %arg9: memref<32x32xbf16, #tpu.memory_space<vmem>>, %arg10: memref<1x32xf32, #tpu.memory_space<vmem>>, %arg11: memref<32x32xbf16, #tpu.memory_space<vmem>>, %arg12: memref<32x32xbf16, #tpu.memory_space<vmem>>, %arg13: memref<32x32xbf16, #tpu.memory_space<vmem>>, %arg14: memref<32x32xbf16, #tpu.memory_space<vmem>>, %arg15: memref<1x32xf32, #tpu.memory_space<vmem>>, %arg16: memref<1x8x32xf32, #tpu.memory_space<vmem>>, %arg17: memref<8x32xbf16, #tpu.memory_space<vmem>>, %arg18: memref<8x32xbf16, #tpu.memory_space<vmem>>, %arg19: memref<8x32xbf16, #tpu.memory_space<vmem>>, %arg20: memref<8x32xbf16, #tpu.memory_space<vmem>>) attributes {dimension_semantics = [#tpu.dimension_semantics<parallel>], iteration_bounds = array<i64: 2>, scalar_prefetch = 0 : i64, scratch_operands = 4 : i64, tpu.core_type = #tpu.core_type<tc>, window_params = [{transform_indices = @transform_0, window_bounds = array<i64: 1, 8, 32>}, {pipeline_mode = #tpu.pipeline_mode<synchronous>, transform_indices = @transform_1, window_bounds = array<i64: 1, 32>}, {pipeline_mode = #tpu.pipeline_mode<synchronous>, transform_indices = @transform_2, window_bounds = array<i64: 1, 32>}, {pipeline_mode = #tpu.pipeline_mode<synchronous>, transform_indices = @transform_3, window_bounds = array<i64: 1, 32>}, {pipeline_mode = #tpu.pipeline_mode<synchronous>, transform_indices = @transform_4, window_bounds = array<i64: 1, 32>}, {pipeline_mode = #tpu.pipeline_mode<synchronous>, transform_indices = @transform_5, window_bounds = array<i64: 32, 32>}, {pipeline_mode = #tpu.pipeline_mode<synchronous>, transform_indices = @transform_6, window_bounds = array<i64: 32, 32>}, {pipeline_mode = #tpu.pipeline_mode<synchronous>, transform_indices = @transform_7, window_bounds = array<i64: 32, 32>}, {pipeline_mode = #tpu.pipeline_mode<synchronous>, transform_indices = @transform_8, window_bounds = array<i64: 32, 32>}, {pipeline_mode = #tpu.pipeline_mode<synchronous>, transform_indices = @transform_9, window_bounds = array<i64: 1, 32>}, {pipeline_mode = #tpu.pipeline_mode<synchronous>, transform_indices = @transform_10, window_bounds = array<i64: 32, 32>}, {pipeline_mode = #tpu.pipeline_mode<synchronous>, transform_indices = @transform_11, window_bounds = array<i64: 32, 32>}, {pipeline_mode = #tpu.pipeline_mode<synchronous>, transform_indices = @transform_12, window_bounds = array<i64: 32, 32>}, {pipeline_mode = #tpu.pipeline_mode<synchronous>, transform_indices = @transform_13, window_bounds = array<i64: 32, 32>}, {pipeline_mode = #tpu.pipeline_mode<synchronous>, transform_indices = @transform_14, window_bounds = array<i64: 1, 32>}, {transform_indices = @transform_15, window_bounds = array<i64: 1, 8, 32>}]} {
    %c0 = arith.constant 0 : index
    %c0_0 = arith.constant 0 : index
    %c0_1 = arith.constant 0 : index
    %0 = vector.load %arg1[%c0, %c0_0, %c0_1] : memref<1x8x32xf32, #tpu.memory_space<vmem>>, vector<1x8x32xf32>
    %1 = vector.shape_cast %0 : vector<1x8x32xf32> to vector<8x32xf32>
    %cst = arith.constant dense<0.000000e+00> : vector<8xf32>
    %2 = vector.multi_reduction <add>, %1, %cst [1] : vector<8x32xf32> to vector<8xf32>
    %3 = vector.shape_cast %2 : vector<8xf32> to vector<8x1xf32>
    %cst_2 = arith.constant 3.200000e+01 : f32
    %4 = vector.broadcast %cst_2 : f32 to vector<8x1xf32>
    %5 = arith.divf %3, %4 : vector<8x1xf32>
    %6 = vector.broadcast %5 : vector<8x1xf32> to vector<8x32xf32>
    %7 = arith.subf %1, %6 : vector<8x32xf32>
    %8 = arith.mulf %7, %7 : vector<8x32xf32>
    %cst_3 = arith.constant dense<0.000000e+00> : vector<8xf32>
    %9 = vector.multi_reduction <add>, %8, %cst_3 [1] : vector<8x32xf32> to vector<8xf32>
    %10 = vector.shape_cast %9 : vector<8xf32> to vector<8x1xf32>
    %cst_4 = arith.constant 3.200000e+01 : f32
    %11 = vector.broadcast %cst_4 : f32 to vector<8x1xf32>
    %12 = arith.divf %10, %11 : vector<8x1xf32>
    %cst_5 = arith.constant 9.99999974E-6 : f32
    %13 = vector.broadcast %cst_5 : f32 to vector<8x1xf32>
    %14 = arith.addf %12, %13 : vector<8x1xf32>
    %15 = math.rsqrt %14 : vector<8x1xf32>
    %16 = vector.broadcast %15 : vector<8x1xf32> to vector<8x32xf32>
    %17 = arith.mulf %7, %16 : vector<8x32xf32>
    %c0_6 = arith.constant 0 : index
    %c0_7 = arith.constant 0 : index
    %18 = vector.load %arg2[%c0_6, %c0_7] : memref<1x32xf32, #tpu.memory_space<vmem>>, vector<1x32xf32>
    %19 = vector.shape_cast %18 : vector<1x32xf32> to vector<32xf32>
    %20 = vector.shape_cast %19 : vector<32xf32> to vector<1x32xf32>
    %21 = vector.broadcast %20 : vector<1x32xf32> to vector<8x32xf32>
    %22 = arith.mulf %17, %21 : vector<8x32xf32>
    %c0_8 = arith.constant 0 : index
    %c0_9 = arith.constant 0 : index
    %23 = vector.load %arg3[%c0_8, %c0_9] : memref<1x32xf32, #tpu.memory_space<vmem>>, vector<1x32xf32>
    %24 = vector.shape_cast %23 : vector<1x32xf32> to vector<32xf32>
    %25 = vector.shape_cast %24 : vector<32xf32> to vector<1x32xf32>
    %26 = vector.broadcast %25 : vector<1x32xf32> to vector<8x32xf32>
    %27 = arith.addf %22, %26 : vector<8x32xf32>
    %28 = arith.truncf %27 : vector<8x32xf32> to vector<8x32xbf16>
    %c0_10 = arith.constant 0 : index
    %c0_11 = arith.constant 0 : index
    %29 = vector.load %arg6[%c0_10, %c0_11] : memref<32x32xbf16, #tpu.memory_space<vmem>>, vector<32x32xbf16>
    %cst_12 = arith.constant dense<0.000000e+00> : vector<8x32xf32>
    %30 = tpu.matmul %28, %29, %cst_12 {dimension_numbers = #tpu.dot_dimension_numbers<[1], [0], [0], [1], [0, 0, 1, 1], [], []>} : vector<8x32xbf16>, vector<32x32xbf16>, vector<8x32xf32> -> vector<8x32xf32>
    %31 = arith.truncf %30 : vector<8x32xf32> to vector<8x32xbf16>
    %c0_13 = arith.constant 0 : index
    %c0_14 = arith.constant 0 : index
    %32 = vector.load %arg17[%c0_13, %c0_14] : memref<8x32xbf16, #tpu.memory_space<vmem>>, vector<8x32xbf16>
    tpu.vector_store %arg17[%c0_13, %c0_14], %31 {strides = array<i32>} : memref<8x32xbf16, #tpu.memory_space<vmem>>, vector<8x32xbf16>,
    %c0_15 = arith.constant 0 : index
    %c0_16 = arith.constant 0 : index
    %33 = vector.load %arg7[%c0_15, %c0_16] : memref<32x32xbf16, #tpu.memory_space<vmem>>, vector<32x32xbf16>
    %cst_17 = arith.constant dense<0.000000e+00> : vector<8x32xf32>
    %34 = tpu.matmul %28, %33, %cst_17 {dimension_numbers = #tpu.dot_dimension_numbers<[1], [0], [0], [1], [0, 0, 1, 1], [], []>} : vector<8x32xbf16>, vector<32x32xbf16>, vector<8x32xf32> -> vector<8x32xf32>
    %35 = arith.truncf %34 : vector<8x32xf32> to vector<8x32xbf16>
    %c0_18 = arith.constant 0 : index
    %c0_19 = arith.constant 0 : index
    %36 = vector.load %arg18[%c0_18, %c0_19] : memref<8x32xbf16, #tpu.memory_space<vmem>>, vector<8x32xbf16>
    tpu.vector_store %arg18[%c0_18, %c0_19], %35 {strides = array<i32>} : memref<8x32xbf16, #tpu.memory_space<vmem>>, vector<8x32xbf16>,
    %c0_20 = arith.constant 0 : index
    %c0_21 = arith.constant 0 : index
    %37 = vector.load %arg8[%c0_20, %c0_21] : memref<32x32xbf16, #tpu.memory_space<vmem>>, vector<32x32xbf16>
    %cst_22 = arith.constant dense<0.000000e+00> : vector<8x32xf32>
    %38 = tpu.matmul %28, %37, %cst_22 {dimension_numbers = #tpu.dot_dimension_numbers<[1], [0], [0], [1], [0, 0, 1, 1], [], []>} : vector<8x32xbf16>, vector<32x32xbf16>, vector<8x32xf32> -> vector<8x32xf32>
    %39 = arith.truncf %38 : vector<8x32xf32> to vector<8x32xbf16>
    %c0_23 = arith.constant 0 : index
    %c0_24 = arith.constant 0 : index
    %40 = vector.load %arg19[%c0_23, %c0_24] : memref<8x32xbf16, #tpu.memory_space<vmem>>, vector<8x32xbf16>
    tpu.vector_store %arg19[%c0_23, %c0_24], %39 {strides = array<i32>} : memref<8x32xbf16, #tpu.memory_space<vmem>>, vector<8x32xbf16>,
    %c0_i32 = arith.constant 0 : i32
    %c8_i32 = arith.constant 8 : i32
    %41 = arith.muli %c0_i32, %c8_i32 : i32
    %42 = tpu.assume_multiple %41, 8 : i32
    %43 = arith.index_cast %42 : i32 to index
    %c0_25 = arith.constant 0 : index
    %44 = vector.load %arg17[%43, %c0_25] : memref<8x32xbf16, #tpu.memory_space<vmem>>, vector<8x8xbf16>
    %45 = arith.index_cast %42 : i32 to index
    %c0_26 = arith.constant 0 : index
    %46 = vector.load %arg18[%45, %c0_26] : memref<8x32xbf16, #tpu.memory_space<vmem>>, vector<8x8xbf16>
    %47 = arith.index_cast %42 : i32 to index
    %c0_27 = arith.constant 0 : index
    %48 = vector.load %arg19[%47, %c0_27] : memref<8x32xbf16, #tpu.memory_space<vmem>>, vector<8x8xbf16>
    %cst_28 = arith.constant dense<0.000000e+00> : vector<8x8xf32>
    %49 = tpu.matmul %44, %46, %cst_28 {dimension_numbers = #tpu.dot_dimension_numbers<[1], [1], [0], [0], [0, 0, 1, 0], [], []>} : vector<8x8xbf16>, vector<8x8xbf16>, vector<8x8xf32> -> vector<8x8xf32>
    %cst_29 = arith.constant dense<0xFF800000> : vector<8xf32>
    %50 = vector.multi_reduction <maximumf>, %49, %cst_29 [1] : vector<8x8xf32> to vector<8xf32>
    %51 = vector.shape_cast %50 : vector<8xf32> to vector<8x1xf32>
    %52 = vector.broadcast %51 : vector<8x1xf32> to vector<8x8xf32>
    %53 = arith.subf %49, %52 : vector<8x8xf32>
    %54 = math.exp %53 : vector<8x8xf32>
    %cst_30 = arith.constant dense<0.000000e+00> : vector<8xf32>
    %55 = vector.multi_reduction <add>, %54, %cst_30 [1] : vector<8x8xf32> to vector<8xf32>
    %56 = vector.shape_cast %55 : vector<8xf32> to vector<8x1xf32>
    %57 = tpu.reciprocal %56 {approx = true} : vector<8x1xf32> -> vector<8x1xf32>
    %58 = vector.broadcast %57 : vector<8x1xf32> to vector<8x8xf32>
    %59 = arith.mulf %54, %58 : vector<8x8xf32>
    %60 = arith.truncf %59 : vector<8x8xf32> to vector<8x8xbf16>
    %cst_31 = arith.constant dense<0.000000e+00> : vector<8x8xf32>
    %61 = tpu.matmul %60, %48, %cst_31 {dimension_numbers = #tpu.dot_dimension_numbers<[1], [0], [0], [1], [0, 0, 1, 1], [], []>} : vector<8x8xbf16>, vector<8x8xbf16>, vector<8x8xf32> -> vector<8x8xf32>
    %62 = arith.truncf %61 : vector<8x8xf32> to vector<8x8xbf16>
    %63 = arith.index_cast %42 : i32 to index
    %c0_32 = arith.constant 0 : index
    %64 = vector.load %arg20[%63, %c0_32] : memref<8x32xbf16, #tpu.memory_space<vmem>>, vector<8x8xbf16>
    tpu.vector_store %arg20[%63, %c0_32], %62 {strides = array<i32>} : memref<8x32xbf16, #tpu.memory_space<vmem>>, vector<8x8xbf16>,
    %65 = arith.index_cast %42 : i32 to index
    %c8 = arith.constant 8 : index
    %66 = vector.load %arg17[%65, %c8] : memref<8x32xbf16, #tpu.memory_space<vmem>>, vector<8x8xbf16>
    %67 = arith.index_cast %42 : i32 to index
    %c8_33 = arith.constant 8 : index
    %68 = vector.load %arg18[%67, %c8_33] : memref<8x32xbf16, #tpu.memory_space<vmem>>, vector<8x8xbf16>
    %69 = arith.index_cast %42 : i32 to index
    %c8_34 = arith.constant 8 : index
    %70 = vector.load %arg19[%69, %c8_34] : memref<8x32xbf16, #tpu.memory_space<vmem>>, vector<8x8xbf16>
    %cst_35 = arith.constant dense<0.000000e+00> : vector<8x8xf32>
    %71 = tpu.matmul %66, %68, %cst_35 {dimension_numbers = #tpu.dot_dimension_numbers<[1], [1], [0], [0], [0, 0, 1, 0], [], []>} : vector<8x8xbf16>, vector<8x8xbf16>, vector<8x8xf32> -> vector<8x8xf32>
    %cst_36 = arith.constant dense<0xFF800000> : vector<8xf32>
    %72 = vector.multi_reduction <maximumf>, %71, %cst_36 [1] : vector<8x8xf32> to vector<8xf32>
    %73 = vector.shape_cast %72 : vector<8xf32> to vector<8x1xf32>
    %74 = vector.broadcast %73 : vector<8x1xf32> to vector<8x8xf32>
    %75 = arith.subf %71, %74 : vector<8x8xf32>
    %76 = math.exp %75 : vector<8x8xf32>
    %cst_37 = arith.constant dense<0.000000e+00> : vector<8xf32>
    %77 = vector.multi_reduction <add>, %76, %cst_37 [1] : vector<8x8xf32> to vector<8xf32>
    %78 = vector.shape_cast %77 : vector<8xf32> to vector<8x1xf32>
    %79 = tpu.reciprocal %78 {approx = true} : vector<8x1xf32> -> vector<8x1xf32>
    %80 = vector.broadcast %79 : vector<8x1xf32> to vector<8x8xf32>
    %81 = arith.mulf %76, %80 : vector<8x8xf32>
    %82 = arith.truncf %81 : vector<8x8xf32> to vector<8x8xbf16>
    %cst_38 = arith.constant dense<0.000000e+00> : vector<8x8xf32>
    %83 = tpu.matmul %82, %70, %cst_38 {dimension_numbers = #tpu.dot_dimension_numbers<[1], [0], [0], [1], [0, 0, 1, 1], [], []>} : vector<8x8xbf16>, vector<8x8xbf16>, vector<8x8xf32> -> vector<8x8xf32>
    %84 = arith.truncf %83 : vector<8x8xf32> to vector<8x8xbf16>
    %85 = arith.index_cast %42 : i32 to index
    %c8_39 = arith.constant 8 : index
    %86 = vector.load %arg20[%85, %c8_39] : memref<8x32xbf16, #tpu.memory_space<vmem>>, vector<8x8xbf16>
    tpu.vector_store %arg20[%85, %c8_39], %84 {strides = array<i32>} : memref<8x32xbf16, #tpu.memory_space<vmem>>, vector<8x8xbf16>,
    %87 = arith.index_cast %42 : i32 to index
    %c16 = arith.constant 16 : index
    %88 = vector.load %arg17[%87, %c16] : memref<8x32xbf16, #tpu.memory_space<vmem>>, vector<8x8xbf16>
    %89 = arith.index_cast %42 : i32 to index
    %c16_40 = arith.constant 16 : index
    %90 = vector.load %arg18[%89, %c16_40] : memref<8x32xbf16, #tpu.memory_space<vmem>>, vector<8x8xbf16>
    %91 = arith.index_cast %42 : i32 to index
    %c16_41 = arith.constant 16 : index
    %92 = vector.load %arg19[%91, %c16_41] : memref<8x32xbf16, #tpu.memory_space<vmem>>, vector<8x8xbf16>
    %cst_42 = arith.constant dense<0.000000e+00> : vector<8x8xf32>
    %93 = tpu.matmul %88, %90, %cst_42 {dimension_numbers = #tpu.dot_dimension_numbers<[1], [1], [0], [0], [0, 0, 1, 0], [], []>} : vector<8x8xbf16>, vector<8x8xbf16>, vector<8x8xf32> -> vector<8x8xf32>
    %cst_43 = arith.constant dense<0xFF800000> : vector<8xf32>
    %94 = vector.multi_reduction <maximumf>, %93, %cst_43 [1] : vector<8x8xf32> to vector<8xf32>
    %95 = vector.shape_cast %94 : vector<8xf32> to vector<8x1xf32>
    %96 = vector.broadcast %95 : vector<8x1xf32> to vector<8x8xf32>
    %97 = arith.subf %93, %96 : vector<8x8xf32>
    %98 = math.exp %97 : vector<8x8xf32>
    %cst_44 = arith.constant dense<0.000000e+00> : vector<8xf32>
    %99 = vector.multi_reduction <add>, %98, %cst_44 [1] : vector<8x8xf32> to vector<8xf32>
    %100 = vector.shape_cast %99 : vector<8xf32> to vector<8x1xf32>
    %101 = tpu.reciprocal %100 {approx = true} : vector<8x1xf32> -> vector<8x1xf32>
    %102 = vector.broadcast %101 : vector<8x1xf32> to vector<8x8xf32>
    %103 = arith.mulf %98, %102 : vector<8x8xf32>
    %104 = arith.truncf %103 : vector<8x8xf32> to vector<8x8xbf16>
    %cst_45 = arith.constant dense<0.000000e+00> : vector<8x8xf32>
    %105 = tpu.matmul %104, %92, %cst_45 {dimension_numbers = #tpu.dot_dimension_numbers<[1], [0], [0], [1], [0, 0, 1, 1], [], []>} : vector<8x8xbf16>, vector<8x8xbf16>, vector<8x8xf32> -> vector<8x8xf32>
    %106 = arith.truncf %105 : vector<8x8xf32> to vector<8x8xbf16>
    %107 = arith.index_cast %42 : i32 to index
    %c16_46 = arith.constant 16 : index
    %108 = vector.load %arg20[%107, %c16_46] : memref<8x32xbf16, #tpu.memory_space<vmem>>, vector<8x8xbf16>
    tpu.vector_store %arg20[%107, %c16_46], %106 {strides = array<i32>} : memref<8x32xbf16, #tpu.memory_space<vmem>>, vector<8x8xbf16>,
    %109 = arith.index_cast %42 : i32 to index
    %c24 = arith.constant 24 : index
    %110 = vector.load %arg17[%109, %c24] : memref<8x32xbf16, #tpu.memory_space<vmem>>, vector<8x8xbf16>
    %111 = arith.index_cast %42 : i32 to index
    %c24_47 = arith.constant 24 : index
    %112 = vector.load %arg18[%111, %c24_47] : memref<8x32xbf16, #tpu.memory_space<vmem>>, vector<8x8xbf16>
    %113 = arith.index_cast %42 : i32 to index
    %c24_48 = arith.constant 24 : index
    %114 = vector.load %arg19[%113, %c24_48] : memref<8x32xbf16, #tpu.memory_space<vmem>>, vector<8x8xbf16>
    %cst_49 = arith.constant dense<0.000000e+00> : vector<8x8xf32>
    %115 = tpu.matmul %110, %112, %cst_49 {dimension_numbers = #tpu.dot_dimension_numbers<[1], [1], [0], [0], [0, 0, 1, 0], [], []>} : vector<8x8xbf16>, vector<8x8xbf16>, vector<8x8xf32> -> vector<8x8xf32>
    %cst_50 = arith.constant dense<0xFF800000> : vector<8xf32>
    %116 = vector.multi_reduction <maximumf>, %115, %cst_50 [1] : vector<8x8xf32> to vector<8xf32>
    %117 = vector.shape_cast %116 : vector<8xf32> to vector<8x1xf32>
    %118 = vector.broadcast %117 : vector<8x1xf32> to vector<8x8xf32>
    %119 = arith.subf %115, %118 : vector<8x8xf32>
    %120 = math.exp %119 : vector<8x8xf32>
    %cst_51 = arith.constant dense<0.000000e+00> : vector<8xf32>
    %121 = vector.multi_reduction <add>, %120, %cst_51 [1] : vector<8x8xf32> to vector<8xf32>
    %122 = vector.shape_cast %121 : vector<8xf32> to vector<8x1xf32>
    %123 = tpu.reciprocal %122 {approx = true} : vector<8x1xf32> -> vector<8x1xf32>
    %124 = vector.broadcast %123 : vector<8x1xf32> to vector<8x8xf32>
    %125 = arith.mulf %120, %124 : vector<8x8xf32>
    %126 = arith.truncf %125 : vector<8x8xf32> to vector<8x8xbf16>
    %cst_52 = arith.constant dense<0.000000e+00> : vector<8x8xf32>
    %127 = tpu.matmul %126, %114, %cst_52 {dimension_numbers = #tpu.dot_dimension_numbers<[1], [0], [0], [1], [0, 0, 1, 1], [], []>} : vector<8x8xbf16>, vector<8x8xbf16>, vector<8x8xf32> -> vector<8x8xf32>
    %128 = arith.truncf %127 : vector<8x8xf32> to vector<8x8xbf16>
    %129 = arith.index_cast %42 : i32 to index
    %c24_53 = arith.constant 24 : index
    %130 = vector.load %arg20[%129, %c24_53] : memref<8x32xbf16, #tpu.memory_space<vmem>>, vector<8x8xbf16>
    tpu.vector_store %arg20[%129, %c24_53], %128 {strides = array<i32>} : memref<8x32xbf16, #tpu.memory_space<vmem>>, vector<8x8xbf16>,
    %c1_i32 = arith.constant 1 : i32
    %c0_54 = arith.constant 0 : index
    %c0_55 = arith.constant 0 : index
    %131 = vector.load %arg20[%c0_54, %c0_55] : memref<8x32xbf16, #tpu.memory_space<vmem>>, vector<8x32xbf16>
    %c0_56 = arith.constant 0 : index
    %c0_57 = arith.constant 0 : index
    %132 = vector.load %arg9[%c0_56, %c0_57] : memref<32x32xbf16, #tpu.memory_space<vmem>>, vector<32x32xbf16>
    %cst_58 = arith.constant dense<0.000000e+00> : vector<8x32xf32>
    %133 = tpu.matmul %131, %132, %cst_58 {dimension_numbers = #tpu.dot_dimension_numbers<[1], [0], [0], [1], [0, 0, 1, 1], [], []>} : vector<8x32xbf16>, vector<32x32xbf16>, vector<8x32xf32> -> vector<8x32xf32>
    %c0_59 = arith.constant 0 : index
    %c0_60 = arith.constant 0 : index
    %134 = vector.load %arg10[%c0_59, %c0_60] : memref<1x32xf32, #tpu.memory_space<vmem>>, vector<1x32xf32>
    %135 = vector.shape_cast %134 : vector<1x32xf32> to vector<32xf32>
    %136 = vector.shape_cast %135 : vector<32xf32> to vector<1x32xf32>
    %137 = vector.broadcast %136 : vector<1x32xf32> to vector<8x32xf32>
    %138 = arith.addf %133, %137 : vector<8x32xf32>
    %c0_61 = arith.constant 0 : index
    %c0_62 = arith.constant 0 : index
    %139 = vector.load %arg4[%c0_61, %c0_62] : memref<1x32xf32, #tpu.memory_space<vmem>>, vector<1x32xf32>
    %140 = vector.shape_cast %139 : vector<1x32xf32> to vector<32xf32>
    %141 = vector.shape_cast %140 : vector<32xf32> to vector<1x32xf32>
    %142 = vector.broadcast %141 : vector<1x32xf32> to vector<8x32xf32>
    %143 = arith.mulf %17, %142 : vector<8x32xf32>
    %c0_63 = arith.constant 0 : index
    %c0_64 = arith.constant 0 : index
    %144 = vector.load %arg5[%c0_63, %c0_64] : memref<1x32xf32, #tpu.memory_space<vmem>>, vector<1x32xf32>
    %145 = vector.shape_cast %144 : vector<1x32xf32> to vector<32xf32>
    %146 = vector.shape_cast %145 : vector<32xf32> to vector<1x32xf32>
    %147 = vector.broadcast %146 : vector<1x32xf32> to vector<8x32xf32>
    %148 = arith.addf %143, %147 : vector<8x32xf32>
    %149 = arith.truncf %148 : vector<8x32xf32> to vector<8x32xbf16>
    %c0_65 = arith.constant 0 : index
    %c0_66 = arith.constant 0 : index
    %150 = vector.load %arg11[%c0_65, %c0_66] : memref<32x32xbf16, #tpu.memory_space<vmem>>, vector<32x32xbf16>
    %cst_67 = arith.constant dense<0.000000e+00> : vector<8x32xf32>
    %151 = tpu.matmul %149, %150, %cst_67 {dimension_numbers = #tpu.dot_dimension_numbers<[1], [0], [0], [1], [0, 0, 1, 1], [], []>} : vector<8x32xbf16>, vector<32x32xbf16>, vector<8x32xf32> -> vector<8x32xf32>
    %152 = arith.truncf %151 : vector<8x32xf32> to vector<8x32xbf16>
    %c0_68 = arith.constant 0 : index
    %c0_69 = arith.constant 0 : index
    %153 = vector.load %arg17[%c0_68, %c0_69] : memref<8x32xbf16, #tpu.memory_space<vmem>>, vector<8x32xbf16>
    tpu.vector_store %arg17[%c0_68, %c0_69], %152 {strides = array<i32>} : memref<8x32xbf16, #tpu.memory_space<vmem>>, vector<8x32xbf16>,
    %c0_70 = arith.constant 0 : index
    %c0_71 = arith.constant 0 : index
    %154 = vector.load %arg12[%c0_70, %c0_71] : memref<32x32xbf16, #tpu.memory_space<vmem>>, vector<32x32xbf16>
    %cst_72 = arith.constant dense<0.000000e+00> : vector<8x32xf32>
    %155 = tpu.matmul %149, %154, %cst_72 {dimension_numbers = #tpu.dot_dimension_numbers<[1], [0], [0], [1], [0, 0, 1, 1], [], []>} : vector<8x32xbf16>, vector<32x32xbf16>, vector<8x32xf32> -> vector<8x32xf32>
    %156 = arith.truncf %155 : vector<8x32xf32> to vector<8x32xbf16>
    %c0_73 = arith.constant 0 : index
    %c0_74 = arith.constant 0 : index
    %157 = vector.load %arg18[%c0_73, %c0_74] : memref<8x32xbf16, #tpu.memory_space<vmem>>, vector<8x32xbf16>
    tpu.vector_store %arg18[%c0_73, %c0_74], %156 {strides = array<i32>} : memref<8x32xbf16, #tpu.memory_space<vmem>>, vector<8x32xbf16>,
    %c0_75 = arith.constant 0 : index
    %c0_76 = arith.constant 0 : index
    %158 = vector.load %arg13[%c0_75, %c0_76] : memref<32x32xbf16, #tpu.memory_space<vmem>>, vector<32x32xbf16>
    %cst_77 = arith.constant dense<0.000000e+00> : vector<8x32xf32>
    %159 = tpu.matmul %149, %158, %cst_77 {dimension_numbers = #tpu.dot_dimension_numbers<[1], [0], [0], [1], [0, 0, 1, 1], [], []>} : vector<8x32xbf16>, vector<32x32xbf16>, vector<8x32xf32> -> vector<8x32xf32>
    %160 = arith.truncf %159 : vector<8x32xf32> to vector<8x32xbf16>
    %c0_78 = arith.constant 0 : index
    %c0_79 = arith.constant 0 : index
    %161 = vector.load %arg19[%c0_78, %c0_79] : memref<8x32xbf16, #tpu.memory_space<vmem>>, vector<8x32xbf16>
    tpu.vector_store %arg19[%c0_78, %c0_79], %160 {strides = array<i32>} : memref<8x32xbf16, #tpu.memory_space<vmem>>, vector<8x32xbf16>,
    %c0_i32_80 = arith.constant 0 : i32
    %c8_i32_81 = arith.constant 8 : i32
    %162 = arith.muli %c0_i32_80, %c8_i32_81 : i32
    %163 = tpu.assume_multiple %162, 8 : i32
    %164 = arith.index_cast %163 : i32 to index
    %c0_82 = arith.constant 0 : index
    %165 = vector.load %arg17[%164, %c0_82] : memref<8x32xbf16, #tpu.memory_space<vmem>>, vector<8x8xbf16>
    %166 = arith.index_cast %163 : i32 to index
    %c0_83 = arith.constant 0 : index
    %167 = vector.load %arg18[%166, %c0_83] : memref<8x32xbf16, #tpu.memory_space<vmem>>, vector<8x8xbf16>
    %168 = arith.index_cast %163 : i32 to index
    %c0_84 = arith.constant 0 : index
    %169 = vector.load %arg19[%168, %c0_84] : memref<8x32xbf16, #tpu.memory_space<vmem>>, vector<8x8xbf16>
    %cst_85 = arith.constant dense<0.000000e+00> : vector<8x8xf32>
    %170 = tpu.matmul %165, %167, %cst_85 {dimension_numbers = #tpu.dot_dimension_numbers<[1], [1], [0], [0], [0, 0, 1, 0], [], []>} : vector<8x8xbf16>, vector<8x8xbf16>, vector<8x8xf32> -> vector<8x8xf32>
    %cst_86 = arith.constant dense<0xFF800000> : vector<8xf32>
    %171 = vector.multi_reduction <maximumf>, %170, %cst_86 [1] : vector<8x8xf32> to vector<8xf32>
    %172 = vector.shape_cast %171 : vector<8xf32> to vector<8x1xf32>
    %173 = vector.broadcast %172 : vector<8x1xf32> to vector<8x8xf32>
    %174 = arith.subf %170, %173 : vector<8x8xf32>
    %175 = math.exp %174 : vector<8x8xf32>
    %cst_87 = arith.constant dense<0.000000e+00> : vector<8xf32>
    %176 = vector.multi_reduction <add>, %175, %cst_87 [1] : vector<8x8xf32> to vector<8xf32>
    %177 = vector.shape_cast %176 : vector<8xf32> to vector<8x1xf32>
    %178 = tpu.reciprocal %177 {approx = true} : vector<8x1xf32> -> vector<8x1xf32>
    %179 = vector.broadcast %178 : vector<8x1xf32> to vector<8x8xf32>
    %180 = arith.mulf %175, %179 : vector<8x8xf32>
    %181 = arith.truncf %180 : vector<8x8xf32> to vector<8x8xbf16>
    %cst_88 = arith.constant dense<0.000000e+00> : vector<8x8xf32>
    %182 = tpu.matmul %181, %169, %cst_88 {dimension_numbers = #tpu.dot_dimension_numbers<[1], [0], [0], [1], [0, 0, 1, 1], [], []>} : vector<8x8xbf16>, vector<8x8xbf16>, vector<8x8xf32> -> vector<8x8xf32>
    %183 = arith.truncf %182 : vector<8x8xf32> to vector<8x8xbf16>
    %184 = arith.index_cast %163 : i32 to index
    %c0_89 = arith.constant 0 : index
    %185 = vector.load %arg20[%184, %c0_89] : memref<8x32xbf16, #tpu.memory_space<vmem>>, vector<8x8xbf16>
    tpu.vector_store %arg20[%184, %c0_89], %183 {strides = array<i32>} : memref<8x32xbf16, #tpu.memory_space<vmem>>, vector<8x8xbf16>,
    %186 = arith.index_cast %163 : i32 to index
    %c8_90 = arith.constant 8 : index
    %187 = vector.load %arg17[%186, %c8_90] : memref<8x32xbf16, #tpu.memory_space<vmem>>, vector<8x8xbf16>
    %188 = arith.index_cast %163 : i32 to index
    %c8_91 = arith.constant 8 : index
    %189 = vector.load %arg18[%188, %c8_91] : memref<8x32xbf16, #tpu.memory_space<vmem>>, vector<8x8xbf16>
    %190 = arith.index_cast %163 : i32 to index
    %c8_92 = arith.constant 8 : index
    %191 = vector.load %arg19[%190, %c8_92] : memref<8x32xbf16, #tpu.memory_space<vmem>>, vector<8x8xbf16>
    %cst_93 = arith.constant dense<0.000000e+00> : vector<8x8xf32>
    %192 = tpu.matmul %187, %189, %cst_93 {dimension_numbers = #tpu.dot_dimension_numbers<[1], [1], [0], [0], [0, 0, 1, 0], [], []>} : vector<8x8xbf16>, vector<8x8xbf16>, vector<8x8xf32> -> vector<8x8xf32>
    %cst_94 = arith.constant dense<0xFF800000> : vector<8xf32>
    %193 = vector.multi_reduction <maximumf>, %192, %cst_94 [1] : vector<8x8xf32> to vector<8xf32>
    %194 = vector.shape_cast %193 : vector<8xf32> to vector<8x1xf32>
    %195 = vector.broadcast %194 : vector<8x1xf32> to vector<8x8xf32>
    %196 = arith.subf %192, %195 : vector<8x8xf32>
    %197 = math.exp %196 : vector<8x8xf32>
    %cst_95 = arith.constant dense<0.000000e+00> : vector<8xf32>
    %198 = vector.multi_reduction <add>, %197, %cst_95 [1] : vector<8x8xf32> to vector<8xf32>
    %199 = vector.shape_cast %198 : vector<8xf32> to vector<8x1xf32>
    %200 = tpu.reciprocal %199 {approx = true} : vector<8x1xf32> -> vector<8x1xf32>
    %201 = vector.broadcast %200 : vector<8x1xf32> to vector<8x8xf32>
    %202 = arith.mulf %197, %201 : vector<8x8xf32>
    %203 = arith.truncf %202 : vector<8x8xf32> to vector<8x8xbf16>
    %cst_96 = arith.constant dense<0.000000e+00> : vector<8x8xf32>
    %204 = tpu.matmul %203, %191, %cst_96 {dimension_numbers = #tpu.dot_dimension_numbers<[1], [0], [0], [1], [0, 0, 1, 1], [], []>} : vector<8x8xbf16>, vector<8x8xbf16>, vector<8x8xf32> -> vector<8x8xf32>
    %205 = arith.truncf %204 : vector<8x8xf32> to vector<8x8xbf16>
    %206 = arith.index_cast %163 : i32 to index
    %c8_97 = arith.constant 8 : index
    %207 = vector.load %arg20[%206, %c8_97] : memref<8x32xbf16, #tpu.memory_space<vmem>>, vector<8x8xbf16>
    tpu.vector_store %arg20[%206, %c8_97], %205 {strides = array<i32>} : memref<8x32xbf16, #tpu.memory_space<vmem>>, vector<8x8xbf16>,
    %208 = arith.index_cast %163 : i32 to index
    %c16_98 = arith.constant 16 : index
    %209 = vector.load %arg17[%208, %c16_98] : memref<8x32xbf16, #tpu.memory_space<vmem>>, vector<8x8xbf16>
    %210 = arith.index_cast %163 : i32 to index
    %c16_99 = arith.constant 16 : index
    %211 = vector.load %arg18[%210, %c16_99] : memref<8x32xbf16, #tpu.memory_space<vmem>>, vector<8x8xbf16>
    %212 = arith.index_cast %163 : i32 to index
    %c16_100 = arith.constant 16 : index
    %213 = vector.load %arg19[%212, %c16_100] : memref<8x32xbf16, #tpu.memory_space<vmem>>, vector<8x8xbf16>
    %cst_101 = arith.constant dense<0.000000e+00> : vector<8x8xf32>
    %214 = tpu.matmul %209, %211, %cst_101 {dimension_numbers = #tpu.dot_dimension_numbers<[1], [1], [0], [0], [0, 0, 1, 0], [], []>} : vector<8x8xbf16>, vector<8x8xbf16>, vector<8x8xf32> -> vector<8x8xf32>
    %cst_102 = arith.constant dense<0xFF800000> : vector<8xf32>
    %215 = vector.multi_reduction <maximumf>, %214, %cst_102 [1] : vector<8x8xf32> to vector<8xf32>
    %216 = vector.shape_cast %215 : vector<8xf32> to vector<8x1xf32>
    %217 = vector.broadcast %216 : vector<8x1xf32> to vector<8x8xf32>
    %218 = arith.subf %214, %217 : vector<8x8xf32>
    %219 = math.exp %218 : vector<8x8xf32>
    %cst_103 = arith.constant dense<0.000000e+00> : vector<8xf32>
    %220 = vector.multi_reduction <add>, %219, %cst_103 [1] : vector<8x8xf32> to vector<8xf32>
    %221 = vector.shape_cast %220 : vector<8xf32> to vector<8x1xf32>
    %222 = tpu.reciprocal %221 {approx = true} : vector<8x1xf32> -> vector<8x1xf32>
    %223 = vector.broadcast %222 : vector<8x1xf32> to vector<8x8xf32>
    %224 = arith.mulf %219, %223 : vector<8x8xf32>
    %225 = arith.truncf %224 : vector<8x8xf32> to vector<8x8xbf16>
    %cst_104 = arith.constant dense<0.000000e+00> : vector<8x8xf32>
    %226 = tpu.matmul %225, %213, %cst_104 {dimension_numbers = #tpu.dot_dimension_numbers<[1], [0], [0], [1], [0, 0, 1, 1], [], []>} : vector<8x8xbf16>, vector<8x8xbf16>, vector<8x8xf32> -> vector<8x8xf32>
    %227 = arith.truncf %226 : vector<8x8xf32> to vector<8x8xbf16>
    %228 = arith.index_cast %163 : i32 to index
    %c16_105 = arith.constant 16 : index
    %229 = vector.load %arg20[%228, %c16_105] : memref<8x32xbf16, #tpu.memory_space<vmem>>, vector<8x8xbf16>
    tpu.vector_store %arg20[%228, %c16_105], %227 {strides = array<i32>} : memref<8x32xbf16, #tpu.memory_space<vmem>>, vector<8x8xbf16>,
    %230 = arith.index_cast %163 : i32 to index
    %c24_106 = arith.constant 24 : index
    %231 = vector.load %arg17[%230, %c24_106] : memref<8x32xbf16, #tpu.memory_space<vmem>>, vector<8x8xbf16>
    %232 = arith.index_cast %163 : i32 to index
    %c24_107 = arith.constant 24 : index
    %233 = vector.load %arg18[%232, %c24_107] : memref<8x32xbf16, #tpu.memory_space<vmem>>, vector<8x8xbf16>
    %234 = arith.index_cast %163 : i32 to index
    %c24_108 = arith.constant 24 : index
    %235 = vector.load %arg19[%234, %c24_108] : memref<8x32xbf16, #tpu.memory_space<vmem>>, vector<8x8xbf16>
    %cst_109 = arith.constant dense<0.000000e+00> : vector<8x8xf32>
    %236 = tpu.matmul %231, %233, %cst_109 {dimension_numbers = #tpu.dot_dimension_numbers<[1], [1], [0], [0], [0, 0, 1, 0], [], []>} : vector<8x8xbf16>, vector<8x8xbf16>, vector<8x8xf32> -> vector<8x8xf32>
    %cst_110 = arith.constant dense<0xFF800000> : vector<8xf32>
    %237 = vector.multi_reduction <maximumf>, %236, %cst_110 [1] : vector<8x8xf32> to vector<8xf32>
    %238 = vector.shape_cast %237 : vector<8xf32> to vector<8x1xf32>
    %239 = vector.broadcast %238 : vector<8x1xf32> to vector<8x8xf32>
    %240 = arith.subf %236, %239 : vector<8x8xf32>
    %241 = math.exp %240 : vector<8x8xf32>
    %cst_111 = arith.constant dense<0.000000e+00> : vector<8xf32>
    %242 = vector.multi_reduction <add>, %241, %cst_111 [1] : vector<8x8xf32> to vector<8xf32>
    %243 = vector.shape_cast %242 : vector<8xf32> to vector<8x1xf32>
    %244 = tpu.reciprocal %243 {approx = true} : vector<8x1xf32> -> vector<8x1xf32>
    %245 = vector.broadcast %244 : vector<8x1xf32> to vector<8x8xf32>
    %246 = arith.mulf %241, %245 : vector<8x8xf32>
    %247 = arith.truncf %246 : vector<8x8xf32> to vector<8x8xbf16>
    %cst_112 = arith.constant dense<0.000000e+00> : vector<8x8xf32>
    %248 = tpu.matmul %247, %235, %cst_112 {dimension_numbers = #tpu.dot_dimension_numbers<[1], [0], [0], [1], [0, 0, 1, 1], [], []>} : vector<8x8xbf16>, vector<8x8xbf16>, vector<8x8xf32> -> vector<8x8xf32>
    %249 = arith.truncf %248 : vector<8x8xf32> to vector<8x8xbf16>
    %250 = arith.index_cast %163 : i32 to index
    %c24_113 = arith.constant 24 : index
    %251 = vector.load %arg20[%250, %c24_113] : memref<8x32xbf16, #tpu.memory_space<vmem>>, vector<8x8xbf16>
    tpu.vector_store %arg20[%250, %c24_113], %249 {strides = array<i32>} : memref<8x32xbf16, #tpu.memory_space<vmem>>, vector<8x8xbf16>,
    %c1_i32_114 = arith.constant 1 : i32
    %c0_115 = arith.constant 0 : index
    %c0_116 = arith.constant 0 : index
    %252 = vector.load %arg20[%c0_115, %c0_116] : memref<8x32xbf16, #tpu.memory_space<vmem>>, vector<8x32xbf16>
    %c0_117 = arith.constant 0 : index
    %c0_118 = arith.constant 0 : index
    %253 = vector.load %arg14[%c0_117, %c0_118] : memref<32x32xbf16, #tpu.memory_space<vmem>>, vector<32x32xbf16>
    %cst_119 = arith.constant dense<0.000000e+00> : vector<8x32xf32>
    %254 = tpu.matmul %252, %253, %cst_119 {dimension_numbers = #tpu.dot_dimension_numbers<[1], [0], [0], [1], [0, 0, 1, 1], [], []>} : vector<8x32xbf16>, vector<32x32xbf16>, vector<8x32xf32> -> vector<8x32xf32>
    %c0_120 = arith.constant 0 : index
    %c0_121 = arith.constant 0 : index
    %255 = vector.load %arg15[%c0_120, %c0_121] : memref<1x32xf32, #tpu.memory_space<vmem>>, vector<1x32xf32>
    %256 = vector.shape_cast %255 : vector<1x32xf32> to vector<32xf32>
    %257 = vector.shape_cast %256 : vector<32xf32> to vector<1x32xf32>
    %258 = vector.broadcast %257 : vector<1x32xf32> to vector<8x32xf32>
    %259 = arith.addf %254, %258 : vector<8x32xf32>
    %260 = arith.addf %1, %138 : vector<8x32xf32>
    %261 = arith.addf %260, %259 : vector<8x32xf32>
    %262 = vector.shape_cast %261 : vector<8x32xf32> to vector<1x8x32xf32>
    %c0_122 = arith.constant 0 : index
    %c0_123 = arith.constant 0 : index
    %c0_124 = arith.constant 0 : index
    %263 = vector.load %arg16[%c0_122, %c0_123, %c0_124] : memref<1x8x32xf32, #tpu.memory_space<vmem>>, vector<1x8x32xf32>
    tpu.vector_store %arg16[%c0_122, %c0_123, %c0_124], %262 {strides = array<i32>} : memref<1x8x32xf32, #tpu.memory_space<vmem>>, vector<1x8x32xf32>,
    return
  }
  func.func @transform_0(%arg0: i32) -> (i32, i32, i32) {
    %c0_i32 = arith.constant 0 : i32
    %c0_i32_0 = arith.constant 0 : i32
    %c0_i32_1 = arith.constant 0 : i32
    return %arg0, %c0_i32, %c0_i32_0 : i32, i32, i32
  }
  func.func @transform_1(%arg0: i32) -> (i32, i32) {
    %c0_i32 = arith.constant 0 : i32
    %c0_i32_0 = arith.constant 0 : i32
    %c0_i32_1 = arith.constant 0 : i32
    return %c0_i32, %c0_i32_0 : i32, i32
  }
  func.func @transform_2(%arg0: i32) -> (i32, i32) {
    %c0_i32 = arith.constant 0 : i32
    %c0_i32_0 = arith.constant 0 : i32
    %c0_i32_1 = arith.constant 0 : i32
    return %c0_i32, %c0_i32_0 : i32, i32
  }
  func.func @transform_3(%arg0: i32) -> (i32, i32) {
    %c0_i32 = arith.constant 0 : i32
    %c0_i32_0 = arith.constant 0 : i32
    %c0_i32_1 = arith.constant 0 : i32
    return %c0_i32, %c0_i32_0 : i32, i32
  }
  func.func @transform_4(%arg0: i32) -> (i32, i32) {
    %c0_i32 = arith.constant 0 : i32
    %c0_i32_0 = arith.constant 0 : i32
    %c0_i32_1 = arith.constant 0 : i32
    return %c0_i32, %c0_i32_0 : i32, i32
  }
  func.func @transform_5(%arg0: i32) -> (i32, i32) {
    %c0_i32 = arith.constant 0 : i32
    %c0_i32_0 = arith.constant 0 : i32
    %c0_i32_1 = arith.constant 0 : i32
    return %c0_i32, %c0_i32_0 : i32, i32
  }
  func.func @transform_6(%arg0: i32) -> (i32, i32) {
    %c0_i32 = arith.constant 0 : i32
    %c0_i32_0 = arith.constant 0 : i32
    %c0_i32_1 = arith.constant 0 : i32
    return %c0_i32, %c0_i32_0 : i32, i32
  }
  func.func @transform_7(%arg0: i32) -> (i32, i32) {
    %c0_i32 = arith.constant 0 : i32
    %c0_i32_0 = arith.constant 0 : i32
    %c0_i32_1 = arith.constant 0 : i32
    return %c0_i32, %c0_i32_0 : i32, i32
  }
  func.func @transform_8(%arg0: i32) -> (i32, i32) {
    %c0_i32 = arith.constant 0 : i32
    %c0_i32_0 = arith.constant 0 : i32
    %c0_i32_1 = arith.constant 0 : i32
    return %c0_i32, %c0_i32_0 : i32, i32
  }
  func.func @transform_9(%arg0: i32) -> (i32, i32) {
    %c0_i32 = arith.constant 0 : i32
    %c0_i32_0 = arith.constant 0 : i32
    %c0_i32_1 = arith.constant 0 : i32
    return %c0_i32, %c0_i32_0 : i32, i32
  }
  func.func @transform_10(%arg0: i32) -> (i32, i32) {
    %c0_i32 = arith.constant 0 : i32
    %c0_i32_0 = arith.constant 0 : i32
    %c0_i32_1 = arith.constant 0 : i32
    return %c0_i32, %c0_i32_0 : i32, i32
  }
  func.func @transform_11(%arg0: i32) -> (i32, i32) {
    %c0_i32 = arith.constant 0 : i32
    %c0_i32_0 = arith.constant 0 : i32
    %c0_i32_1 = arith.constant 0 : i32
    return %c0_i32, %c0_i32_0 : i32, i32
  }
  func.func @transform_12(%arg0: i32) -> (i32, i32) {
    %c0_i32 = arith.constant 0 : i32
    %c0_i32_0 = arith.constant 0 : i32
    %c0_i32_1 = arith.constant 0 : i32
    return %c0_i32, %c0_i32_0 : i32, i32
  }
  func.func @transform_13(%arg0: i32) -> (i32, i32) {
    %c0_i32 = arith.constant 0 : i32
    %c0_i32_0 = arith.constant 0 : i32
    %c0_i32_1 = arith.constant 0 : i32
    return %c0_i32, %c0_i32_0 : i32, i32
  }
  func.func @transform_14(%arg0: i32) -> (i32, i32) {
    %c0_i32 = arith.constant 0 : i32
    %c0_i32_0 = arith.constant 0 : i32
    %c0_i32_1 = arith.constant 0 : i32
    return %c0_i32, %c0_i32_0 : i32, i32
  }
  func.func @transform_15(%arg0: i32) -> (i32, i32, i32) {
    %c0_i32 = arith.constant 0 : i32
    %c0_i32_0 = arith.constant 0 : i32
    %c0_i32_1 = arith.constant 0 : i32
    return %arg0, %c0_i32, %c0_i32_0 : i32, i32, i32
  }
}

module attributes {stable_mosaic.version = 11 : i64} {
  func.func @_attn_pair_kernel(%arg0: i32, %arg1: memref<1x8x32xf32, #tpu.memory_space<vmem>>, %arg2: memref<1x32xf32, #tpu.memory_space<vmem>>, %arg3: memref<1x32xf32, #tpu.memory_space<vmem>>, %arg4: memref<1x32xf32, #tpu.memory_space<vmem>>, %arg5: memref<1x32xf32, #tpu.memory_space<vmem>>, %arg6: memref<32x32xbf16, #tpu.memory_space<vmem>>, %arg7: memref<32x32xbf16, #tpu.memory_space<vmem>>, %arg8: memref<32x32xbf16, #tpu.memory_space<vmem>>, %arg9: memref<32x32xbf16, #tpu.memory_space<vmem>>, %arg10: memref<1x32xf32, #tpu.memory_space<vmem>>, %arg11: memref<32x32xbf16, #tpu.memory_space<vmem>>, %arg12: memref<32x32xbf16, #tpu.memory_space<vmem>>, %arg13: memref<32x32xbf16, #tpu.memory_space<vmem>>, %arg14: memref<32x32xbf16, #tpu.memory_space<vmem>>, %arg15: memref<1x32xf32, #tpu.memory_space<vmem>>, %arg16: memref<1x8x32xf32, #tpu.memory_space<vmem>>, %arg17: memref<8x32xbf16, #tpu.memory_space<vmem>>, %arg18: memref<8x32xbf16, #tpu.memory_space<vmem>>, %arg19: memref<8x32xbf16, #tpu.memory_space<vmem>>, %arg20: memref<8x32xbf16, #tpu.memory_space<vmem>>) attributes {dimension_semantics = [#tpu.dimension_semantics<parallel>], iteration_bounds = array<i64: 2>, scalar_prefetch = 0 : i64, scratch_operands = 4 : i64, tpu.core_type = #tpu.core_type<tc>, window_params = [{transform_indices = @transform_0, window_bounds = array<i64: 1, 8, 32>}, {pipeline_mode = #tpu.pipeline_mode<synchronous>, transform_indices = @transform_1, window_bounds = array<i64: 1, 32>}, {pipeline_mode = #tpu.pipeline_mode<synchronous>, transform_indices = @transform_2, window_bounds = array<i64: 1, 32>}, {pipeline_mode = #tpu.pipeline_mode<synchronous>, transform_indices = @transform_3, window_bounds = array<i64: 1, 32>}, {pipeline_mode = #tpu.pipeline_mode<synchronous>, transform_indices = @transform_4, window_bounds = array<i64: 1, 32>}, {pipeline_mode = #tpu.pipeline_mode<synchronous>, transform_indices = @transform_5, window_bounds = array<i64: 32, 32>}, {pipeline_mode = #tpu.pipeline_mode<synchronous>, transform_indices = @transform_6, window_bounds = array<i64: 32, 32>}, {pipeline_mode = #tpu.pipeline_mode<synchronous>, transform_indices = @transform_7, window_bounds = array<i64: 32, 32>}, {pipeline_mode = #tpu.pipeline_mode<synchronous>, transform_indices = @transform_8, window_bounds = array<i64: 32, 32>}, {pipeline_mode = #tpu.pipeline_mode<synchronous>, transform_indices = @transform_9, window_bounds = array<i64: 1, 32>}, {pipeline_mode = #tpu.pipeline_mode<synchronous>, transform_indices = @transform_10, window_bounds = array<i64: 32, 32>}, {pipeline_mode = #tpu.pipeline_mode<synchronous>, transform_indices = @transform_11, window_bounds = array<i64: 32, 32>}, {pipeline_mode = #tpu.pipeline_mode<synchronous>, transform_indices = @transform_12, window_bounds = array<i64: 32, 32>}, {pipeline_mode = #tpu.pipeline_mode<synchronous>, transform_indices = @transform_13, window_bounds = array<i64: 32, 32>}, {pipeline_mode = #tpu.pipeline_mode<synchronous>, transform_indices = @transform_14, window_bounds = array<i64: 1, 32>}, {transform_indices = @transform_15, window_bounds = array<i64: 1, 8, 32>}]} {
    %c0 = arith.constant 0 : index
    %c0_0 = arith.constant 0 : index
    %c0_1 = arith.constant 0 : index
    %0 = vector.load %arg1[%c0, %c0_0, %c0_1] : memref<1x8x32xf32, #tpu.memory_space<vmem>>, vector<1x8x32xf32>
    %1 = vector.shape_cast %0 : vector<1x8x32xf32> to vector<8x32xf32>
    %cst = arith.constant dense<0.000000e+00> : vector<8xf32>
    %2 = vector.multi_reduction <add>, %1, %cst [1] : vector<8x32xf32> to vector<8xf32>
    %3 = vector.shape_cast %2 : vector<8xf32> to vector<8x1xf32>
    %cst_2 = arith.constant 3.200000e+01 : f32
    %4 = vector.broadcast %cst_2 : f32 to vector<8x1xf32>
    %5 = arith.divf %3, %4 : vector<8x1xf32>
    %6 = vector.broadcast %5 : vector<8x1xf32> to vector<8x32xf32>
    %7 = arith.subf %1, %6 : vector<8x32xf32>
    %8 = arith.mulf %7, %7 : vector<8x32xf32>
    %cst_3 = arith.constant dense<0.000000e+00> : vector<8xf32>
    %9 = vector.multi_reduction <add>, %8, %cst_3 [1] : vector<8x32xf32> to vector<8xf32>
    %10 = vector.shape_cast %9 : vector<8xf32> to vector<8x1xf32>
    %cst_4 = arith.constant 3.200000e+01 : f32
    %11 = vector.broadcast %cst_4 : f32 to vector<8x1xf32>
    %12 = arith.divf %10, %11 : vector<8x1xf32>
    %cst_5 = arith.constant 9.99999974E-6 : f32
    %13 = vector.broadcast %cst_5 : f32 to vector<8x1xf32>
    %14 = arith.addf %12, %13 : vector<8x1xf32>
    %15 = math.rsqrt %14 : vector<8x1xf32>
    %16 = vector.broadcast %15 : vector<8x1xf32> to vector<8x32xf32>
    %17 = arith.mulf %7, %16 : vector<8x32xf32>
    %c0_6 = arith.constant 0 : index
    %c0_7 = arith.constant 0 : index
    %18 = vector.load %arg2[%c0_6, %c0_7] : memref<1x32xf32, #tpu.memory_space<vmem>>, vector<1x32xf32>
    %19 = vector.shape_cast %18 : vector<1x32xf32> to vector<32xf32>
    %20 = vector.shape_cast %19 : vector<32xf32> to vector<1x32xf32>
    %21 = vector.broadcast %20 : vector<1x32xf32> to vector<8x32xf32>
    %22 = arith.mulf %17, %21 : vector<8x32xf32>
    %c0_8 = arith.constant 0 : index
    %c0_9 = arith.constant 0 : index
    %23 = vector.load %arg3[%c0_8, %c0_9] : memref<1x32xf32, #tpu.memory_space<vmem>>, vector<1x32xf32>
    %24 = vector.shape_cast %23 : vector<1x32xf32> to vector<32xf32>
    %25 = vector.shape_cast %24 : vector<32xf32> to vector<1x32xf32>
    %26 = vector.broadcast %25 : vector<1x32xf32> to vector<8x32xf32>
    %27 = arith.addf %22, %26 : vector<8x32xf32>
    %28 = arith.truncf %27 : vector<8x32xf32> to vector<8x32xbf16>
    %c0_10 = arith.constant 0 : index
    %c0_11 = arith.constant 0 : index
    %29 = vector.load %arg6[%c0_10, %c0_11] : memref<32x32xbf16, #tpu.memory_space<vmem>>, vector<32x32xbf16>
    %cst_12 = arith.constant dense<0.000000e+00> : vector<8x32xf32>
    %30 = tpu.matmul %28, %29, %cst_12 {dimension_numbers = #tpu.dot_dimension_numbers<[1], [0], [0], [1], [0, 0, 1, 1], [], []>} : vector<8x32xbf16>, vector<32x32xbf16>, vector<8x32xf32> -> vector<8x32xf32>
    %31 = arith.truncf %30 : vector<8x32xf32> to vector<8x32xbf16>
    %c0_13 = arith.constant 0 : index
    %c0_14 = arith.constant 0 : index
    %32 = vector.load %arg17[%c0_13, %c0_14] : memref<8x32xbf16, #tpu.memory_space<vmem>>, vector<8x32xbf16>
    tpu.vector_store %arg17[%c0_13, %c0_14], %31 {strides = array<i32>} : memref<8x32xbf16, #tpu.memory_space<vmem>>, vector<8x32xbf16>,
    %c0_15 = arith.constant 0 : index
    %c0_16 = arith.constant 0 : index
    %33 = vector.load %arg7[%c0_15, %c0_16] : memref<32x32xbf16, #tpu.memory_space<vmem>>, vector<32x32xbf16>
    %cst_17 = arith.constant dense<0.000000e+00> : vector<8x32xf32>
    %34 = tpu.matmul %28, %33, %cst_17 {dimension_numbers = #tpu.dot_dimension_numbers<[1], [0], [0], [1], [0, 0, 1, 1], [], []>} : vector<8x32xbf16>, vector<32x32xbf16>, vector<8x32xf32> -> vector<8x32xf32>
    %35 = arith.truncf %34 : vector<8x32xf32> to vector<8x32xbf16>
    %c0_18 = arith.constant 0 : index
    %c0_19 = arith.constant 0 : index
    %36 = vector.load %arg18[%c0_18, %c0_19] : memref<8x32xbf16, #tpu.memory_space<vmem>>, vector<8x32xbf16>
    tpu.vector_store %arg18[%c0_18, %c0_19], %35 {strides = array<i32>} : memref<8x32xbf16, #tpu.memory_space<vmem>>, vector<8x32xbf16>,
    %c0_20 = arith.constant 0 : index
    %c0_21 = arith.constant 0 : index
    %37 = vector.load %arg8[%c0_20, %c0_21] : memref<32x32xbf16, #tpu.memory_space<vmem>>, vector<32x32xbf16>
    %cst_22 = arith.constant dense<0.000000e+00> : vector<8x32xf32>
    %38 = tpu.matmul %28, %37, %cst_22 {dimension_numbers = #tpu.dot_dimension_numbers<[1], [0], [0], [1], [0, 0, 1, 1], [], []>} : vector<8x32xbf16>, vector<32x32xbf16>, vector<8x32xf32> -> vector<8x32xf32>
    %39 = arith.truncf %38 : vector<8x32xf32> to vector<8x32xbf16>
    %c0_23 = arith.constant 0 : index
    %c0_24 = arith.constant 0 : index
    %40 = vector.load %arg19[%c0_23, %c0_24] : memref<8x32xbf16, #tpu.memory_space<vmem>>, vector<8x32xbf16>
    tpu.vector_store %arg19[%c0_23, %c0_24], %39 {strides = array<i32>} : memref<8x32xbf16, #tpu.memory_space<vmem>>, vector<8x32xbf16>,
    %c0_i32 = arith.constant 0 : i32
    %c8_i32 = arith.constant 8 : i32
    %41 = arith.muli %c0_i32, %c8_i32 : i32
    %42 = tpu.assume_multiple %41, 8 : i32
    %43 = arith.index_cast %42 : i32 to index
    %c0_25 = arith.constant 0 : index
    %44 = vector.load %arg17[%43, %c0_25] : memref<8x32xbf16, #tpu.memory_space<vmem>>, vector<8x8xbf16>
    %45 = arith.index_cast %42 : i32 to index
    %c0_26 = arith.constant 0 : index
    %46 = vector.load %arg18[%45, %c0_26] : memref<8x32xbf16, #tpu.memory_space<vmem>>, vector<8x8xbf16>
    %47 = arith.index_cast %42 : i32 to index
    %c0_27 = arith.constant 0 : index
    %48 = vector.load %arg19[%47, %c0_27] : memref<8x32xbf16, #tpu.memory_space<vmem>>, vector<8x8xbf16>
    %cst_28 = arith.constant dense<0.000000e+00> : vector<8x8xf32>
    %49 = tpu.matmul %44, %46, %cst_28 {dimension_numbers = #tpu.dot_dimension_numbers<[1], [1], [0], [0], [0, 0, 1, 0], [], []>} : vector<8x8xbf16>, vector<8x8xbf16>, vector<8x8xf32> -> vector<8x8xf32>
    %cst_29 = arith.constant dense<0xFF800000> : vector<8xf32>
    %50 = vector.multi_reduction <maximumf>, %49, %cst_29 [1] : vector<8x8xf32> to vector<8xf32>
    %51 = vector.shape_cast %50 : vector<8xf32> to vector<8x1xf32>
    %52 = vector.broadcast %51 : vector<8x1xf32> to vector<8x8xf32>
    %53 = arith.subf %49, %52 : vector<8x8xf32>
    %54 = math.exp %53 : vector<8x8xf32>
    %cst_30 = arith.constant dense<0.000000e+00> : vector<8xf32>
    %55 = vector.multi_reduction <add>, %54, %cst_30 [1] : vector<8x8xf32> to vector<8xf32>
    %56 = vector.shape_cast %55 : vector<8xf32> to vector<8x1xf32>
    %57 = tpu.reciprocal %56 {approx = true} : vector<8x1xf32> -> vector<8x1xf32>
    %58 = vector.broadcast %57 : vector<8x1xf32> to vector<8x8xf32>
    %59 = arith.mulf %54, %58 : vector<8x8xf32>
    %60 = arith.truncf %59 : vector<8x8xf32> to vector<8x8xbf16>
    %cst_31 = arith.constant dense<0.000000e+00> : vector<8x8xf32>
    %61 = tpu.matmul %60, %48, %cst_31 {dimension_numbers = #tpu.dot_dimension_numbers<[1], [0], [0], [1], [0, 0, 1, 1], [], []>} : vector<8x8xbf16>, vector<8x8xbf16>, vector<8x8xf32> -> vector<8x8xf32>
    %62 = arith.truncf %61 : vector<8x8xf32> to vector<8x8xbf16>
    %63 = arith.index_cast %42 : i32 to index
    %c0_32 = arith.constant 0 : index
    %64 = vector.load %arg20[%63, %c0_32] : memref<8x32xbf16, #tpu.memory_space<vmem>>, vector<8x8xbf16>
    tpu.vector_store %arg20[%63, %c0_32], %62 {strides = array<i32>} : memref<8x32xbf16, #tpu.memory_space<vmem>>, vector<8x8xbf16>,
    %65 = arith.index_cast %42 : i32 to index
    %c8 = arith.constant 8 : index
    %66 = vector.load %arg17[%65, %c8] : memref<8x32xbf16, #tpu.memory_space<vmem>>, vector<8x8xbf16>
    %67 = arith.index_cast %42 : i32 to index
    %c8_33 = arith.constant 8 : index
    %68 = vector.load %arg18[%67, %c8_33] : memref<8x32xbf16, #tpu.memory_space<vmem>>, vector<8x8xbf16>
    %69 = arith.index_cast %42 : i32 to index
    %c8_34 = arith.constant 8 : index
    %70 = vector.load %arg19[%69, %c8_34] : memref<8x32xbf16, #tpu.memory_space<vmem>>, vector<8x8xbf16>
    %cst_35 = arith.constant dense<0.000000e+00> : vector<8x8xf32>
    %71 = tpu.matmul %66, %68, %cst_35 {dimension_numbers = #tpu.dot_dimension_numbers<[1], [1], [0], [0], [0, 0, 1, 0], [], []>} : vector<8x8xbf16>, vector<8x8xbf16>, vector<8x8xf32> -> vector<8x8xf32>
    %cst_36 = arith.constant dense<0xFF800000> : vector<8xf32>
    %72 = vector.multi_reduction <maximumf>, %71, %cst_36 [1] : vector<8x8xf32> to vector<8xf32>
    %73 = vector.shape_cast %72 : vector<8xf32> to vector<8x1xf32>
    %74 = vector.broadcast %73 : vector<8x1xf32> to vector<8x8xf32>
    %75 = arith.subf %71, %74 : vector<8x8xf32>
    %76 = math.exp %75 : vector<8x8xf32>
    %cst_37 = arith.constant dense<0.000000e+00> : vector<8xf32>
    %77 = vector.multi_reduction <add>, %76, %cst_37 [1] : vector<8x8xf32> to vector<8xf32>
    %78 = vector.shape_cast %77 : vector<8xf32> to vector<8x1xf32>
    %79 = tpu.reciprocal %78 {approx = true} : vector<8x1xf32> -> vector<8x1xf32>
    %80 = vector.broadcast %79 : vector<8x1xf32> to vector<8x8xf32>
    %81 = arith.mulf %76, %80 : vector<8x8xf32>
    %82 = arith.truncf %81 : vector<8x8xf32> to vector<8x8xbf16>
    %cst_38 = arith.constant dense<0.000000e+00> : vector<8x8xf32>
    %83 = tpu.matmul %82, %70, %cst_38 {dimension_numbers = #tpu.dot_dimension_numbers<[1], [0], [0], [1], [0, 0, 1, 1], [], []>} : vector<8x8xbf16>, vector<8x8xbf16>, vector<8x8xf32> -> vector<8x8xf32>
    %84 = arith.truncf %83 : vector<8x8xf32> to vector<8x8xbf16>
    %85 = arith.index_cast %42 : i32 to index
    %c8_39 = arith.constant 8 : index
    %86 = vector.load %arg20[%85, %c8_39] : memref<8x32xbf16, #tpu.memory_space<vmem>>, vector<8x8xbf16>
    tpu.vector_store %arg20[%85, %c8_39], %84 {strides = array<i32>} : memref<8x32xbf16, #tpu.memory_space<vmem>>, vector<8x8xbf16>,
    %87 = arith.index_cast %42 : i32 to index
    %c16 = arith.constant 16 : index
    %88 = vector.load %arg17[%87, %c16] : memref<8x32xbf16, #tpu.memory_space<vmem>>, vector<8x8xbf16>
    %89 = arith.index_cast %42 : i32 to index
    %c16_40 = arith.constant 16 : index
    %90 = vector.load %arg18[%89, %c16_40] : memref<8x32xbf16, #tpu.memory_space<vmem>>, vector<8x8xbf16>
    %91 = arith.index_cast %42 : i32 to index
    %c16_41 = arith.constant 16 : index
    %92 = vector.load %arg19[%91, %c16_41] : memref<8x32xbf16, #tpu.memory_space<vmem>>, vector<8x8xbf16>
    %cst_42 = arith.constant dense<0.000000e+00> : vector<8x8xf32>
    %93 = tpu.matmul %88, %90, %cst_42 {dimension_numbers = #tpu.dot_dimension_numbers<[1], [1], [0], [0], [0, 0, 1, 0], [], []>} : vector<8x8xbf16>, vector<8x8xbf16>, vector<8x8xf32> -> vector<8x8xf32>
    %cst_43 = arith.constant dense<0xFF800000> : vector<8xf32>
    %94 = vector.multi_reduction <maximumf>, %93, %cst_43 [1] : vector<8x8xf32> to vector<8xf32>
    %95 = vector.shape_cast %94 : vector<8xf32> to vector<8x1xf32>
    %96 = vector.broadcast %95 : vector<8x1xf32> to vector<8x8xf32>
    %97 = arith.subf %93, %96 : vector<8x8xf32>
    %98 = math.exp %97 : vector<8x8xf32>
    %cst_44 = arith.constant dense<0.000000e+00> : vector<8xf32>
    %99 = vector.multi_reduction <add>, %98, %cst_44 [1] : vector<8x8xf32> to vector<8xf32>
    %100 = vector.shape_cast %99 : vector<8xf32> to vector<8x1xf32>
    %101 = tpu.reciprocal %100 {approx = true} : vector<8x1xf32> -> vector<8x1xf32>
    %102 = vector.broadcast %101 : vector<8x1xf32> to vector<8x8xf32>
    %103 = arith.mulf %98, %102 : vector<8x8xf32>
    %104 = arith.truncf %103 : vector<8x8xf32> to vector<8x8xbf16>
    %cst_45 = arith.constant dense<0.000000e+00> : vector<8x8xf32>
    %105 = tpu.matmul %104, %92, %cst_45 {dimension_numbers = #tpu.dot_dimension_numbers<[1], [0], [0], [1], [0, 0, 1, 1], [], []>} : vector<8x8xbf16>, vector<8x8xbf16>, vector<8x8xf32> -> vector<8x8xf32>
    %106 = arith.truncf %105 : vector<8x8xf32> to vector<8x8xbf16>
    %107 = arith.index_cast %42 : i32 to index
    %c16_46 = arith.constant 16 : index
    %108 = vector.load %arg20[%107, %c16_46] : memref<8x32xbf16, #tpu.memory_space<vmem>>, vector<8x8xbf16>
    tpu.vector_store %arg20[%107, %c16_46], %106 {strides = array<i32>} : memref<8x32xbf16, #tpu.memory_space<vmem>>, vector<8x8xbf16>,
    %109 = arith.index_cast %42 : i32 to index
    %c24 = arith.constant 24 : index
    %110 = vector.load %arg17[%109, %c24] : memref<8x32xbf16, #tpu.memory_space<vmem>>, vector<8x8xbf16>
    %111 = arith.index_cast %42 : i32 to index
    %c24_47 = arith.constant 24 : index
    %112 = vector.load %arg18[%111, %c24_47] : memref<8x32xbf16, #tpu.memory_space<vmem>>, vector<8x8xbf16>
    %113 = arith.index_cast %42 : i32 to index
    %c24_48 = arith.constant 24 : index
    %114 = vector.load %arg19[%113, %c24_48] : memref<8x32xbf16, #tpu.memory_space<vmem>>, vector<8x8xbf16>
    %cst_49 = arith.constant dense<0.000000e+00> : vector<8x8xf32>
    %115 = tpu.matmul %110, %112, %cst_49 {dimension_numbers = #tpu.dot_dimension_numbers<[1], [1], [0], [0], [0, 0, 1, 0], [], []>} : vector<8x8xbf16>, vector<8x8xbf16>, vector<8x8xf32> -> vector<8x8xf32>
    %cst_50 = arith.constant dense<0xFF800000> : vector<8xf32>
    %116 = vector.multi_reduction <maximumf>, %115, %cst_50 [1] : vector<8x8xf32> to vector<8xf32>
    %117 = vector.shape_cast %116 : vector<8xf32> to vector<8x1xf32>
    %118 = vector.broadcast %117 : vector<8x1xf32> to vector<8x8xf32>
    %119 = arith.subf %115, %118 : vector<8x8xf32>
    %120 = math.exp %119 : vector<8x8xf32>
    %cst_51 = arith.constant dense<0.000000e+00> : vector<8xf32>
    %121 = vector.multi_reduction <add>, %120, %cst_51 [1] : vector<8x8xf32> to vector<8xf32>
    %122 = vector.shape_cast %121 : vector<8xf32> to vector<8x1xf32>
    %123 = tpu.reciprocal %122 {approx = true} : vector<8x1xf32> -> vector<8x1xf32>
    %124 = vector.broadcast %123 : vector<8x1xf32> to vector<8x8xf32>
    %125 = arith.mulf %120, %124 : vector<8x8xf32>
    %126 = arith.truncf %125 : vector<8x8xf32> to vector<8x8xbf16>
    %cst_52 = arith.constant dense<0.000000e+00> : vector<8x8xf32>
    %127 = tpu.matmul %126, %114, %cst_52 {dimension_numbers = #tpu.dot_dimension_numbers<[1], [0], [0], [1], [0, 0, 1, 1], [], []>} : vector<8x8xbf16>, vector<8x8xbf16>, vector<8x8xf32> -> vector<8x8xf32>
    %128 = arith.truncf %127 : vector<8x8xf32> to vector<8x8xbf16>
    %129 = arith.index_cast %42 : i32 to index
    %c24_53 = arith.constant 24 : index
    %130 = vector.load %arg20[%129, %c24_53] : memref<8x32xbf16, #tpu.memory_space<vmem>>, vector<8x8xbf16>
    tpu.vector_store %arg20[%129, %c24_53], %128 {strides = array<i32>} : memref<8x32xbf16, #tpu.memory_space<vmem>>, vector<8x8xbf16>,
    %c1_i32 = arith.constant 1 : i32
    %c0_54 = arith.constant 0 : index
    %c0_55 = arith.constant 0 : index
    %131 = vector.load %arg20[%c0_54, %c0_55] : memref<8x32xbf16, #tpu.memory_space<vmem>>, vector<8x32xbf16>
    %c0_56 = arith.constant 0 : index
    %c0_57 = arith.constant 0 : index
    %132 = vector.load %arg9[%c0_56, %c0_57] : memref<32x32xbf16, #tpu.memory_space<vmem>>, vector<32x32xbf16>
    %cst_58 = arith.constant dense<0.000000e+00> : vector<8x32xf32>
    %133 = tpu.matmul %131, %132, %cst_58 {dimension_numbers = #tpu.dot_dimension_numbers<[1], [0], [0], [1], [0, 0, 1, 1], [], []>} : vector<8x32xbf16>, vector<32x32xbf16>, vector<8x32xf32> -> vector<8x32xf32>
    %c0_59 = arith.constant 0 : index
    %c0_60 = arith.constant 0 : index
    %134 = vector.load %arg10[%c0_59, %c0_60] : memref<1x32xf32, #tpu.memory_space<vmem>>, vector<1x32xf32>
    %135 = vector.shape_cast %134 : vector<1x32xf32> to vector<32xf32>
    %136 = vector.shape_cast %135 : vector<32xf32> to vector<1x32xf32>
    %137 = vector.broadcast %136 : vector<1x32xf32> to vector<8x32xf32>
    %138 = arith.addf %133, %137 : vector<8x32xf32>
    %c0_61 = arith.constant 0 : index
    %c0_62 = arith.constant 0 : index
    %139 = vector.load %arg4[%c0_61, %c0_62] : memref<1x32xf32, #tpu.memory_space<vmem>>, vector<1x32xf32>
    %140 = vector.shape_cast %139 : vector<1x32xf32> to vector<32xf32>
    %141 = vector.shape_cast %140 : vector<32xf32> to vector<1x32xf32>
    %142 = vector.broadcast %141 : vector<1x32xf32> to vector<8x32xf32>
    %143 = arith.mulf %17, %142 : vector<8x32xf32>
    %c0_63 = arith.constant 0 : index
    %c0_64 = arith.constant 0 : index
    %144 = vector.load %arg5[%c0_63, %c0_64] : memref<1x32xf32, #tpu.memory_space<vmem>>, vector<1x32xf32>
    %145 = vector.shape_cast %144 : vector<1x32xf32> to vector<32xf32>
    %146 = vector.shape_cast %145 : vector<32xf32> to vector<1x32xf32>
    %147 = vector.broadcast %146 : vector<1x32xf32> to vector<8x32xf32>
    %148 = arith.addf %143, %147 : vector<8x32xf32>
    %149 = arith.truncf %148 : vector<8x32xf32> to vector<8x32xbf16>
    %c0_65 = arith.constant 0 : index
    %c0_66 = arith.constant 0 : index
    %150 = vector.load %arg11[%c0_65, %c0_66] : memref<32x32xbf16, #tpu.memory_space<vmem>>, vector<32x32xbf16>
    %cst_67 = arith.constant dense<0.000000e+00> : vector<8x32xf32>
    %151 = tpu.matmul %149, %150, %cst_67 {dimension_numbers = #tpu.dot_dimension_numbers<[1], [0], [0], [1], [0, 0, 1, 1], [], []>} : vector<8x32xbf16>, vector<32x32xbf16>, vector<8x32xf32> -> vector<8x32xf32>
    %152 = arith.truncf %151 : vector<8x32xf32> to vector<8x32xbf16>
    %c0_68 = arith.constant 0 : index
    %c0_69 = arith.constant 0 : index
    %153 = vector.load %arg17[%c0_68, %c0_69] : memref<8x32xbf16, #tpu.memory_space<vmem>>, vector<8x32xbf16>
    tpu.vector_store %arg17[%c0_68, %c0_69], %152 {strides = array<i32>} : memref<8x32xbf16, #tpu.memory_space<vmem>>, vector<8x32xbf16>,
    %c0_70 = arith.constant 0 : index
    %c0_71 = arith.constant 0 : index
    %154 = vector.load %arg12[%c0_70, %c0_71] : memref<32x32xbf16, #tpu.memory_space<vmem>>, vector<32x32xbf16>
    %cst_72 = arith.constant dense<0.000000e+00> : vector<8x32xf32>
    %155 = tpu.matmul %149, %154, %cst_72 {dimension_numbers = #tpu.dot_dimension_numbers<[1], [0], [0], [1], [0, 0, 1, 1], [], []>} : vector<8x32xbf16>, vector<32x32xbf16>, vector<8x32xf32> -> vector<8x32xf32>
    %156 = arith.truncf %155 : vector<8x32xf32> to vector<8x32xbf16>
    %c0_73 = arith.constant 0 : index
    %c0_74 = arith.constant 0 : index
    %157 = vector.load %arg18[%c0_73, %c0_74] : memref<8x32xbf16, #tpu.memory_space<vmem>>, vector<8x32xbf16>
    tpu.vector_store %arg18[%c0_73, %c0_74], %156 {strides = array<i32>} : memref<8x32xbf16, #tpu.memory_space<vmem>>, vector<8x32xbf16>,
    %c0_75 = arith.constant 0 : index
    %c0_76 = arith.constant 0 : index
    %158 = vector.load %arg13[%c0_75, %c0_76] : memref<32x32xbf16, #tpu.memory_space<vmem>>, vector<32x32xbf16>
    %cst_77 = arith.constant dense<0.000000e+00> : vector<8x32xf32>
    %159 = tpu.matmul %149, %158, %cst_77 {dimension_numbers = #tpu.dot_dimension_numbers<[1], [0], [0], [1], [0, 0, 1, 1], [], []>} : vector<8x32xbf16>, vector<32x32xbf16>, vector<8x32xf32> -> vector<8x32xf32>
    %160 = arith.truncf %159 : vector<8x32xf32> to vector<8x32xbf16>
    %c0_78 = arith.constant 0 : index
    %c0_79 = arith.constant 0 : index
    %161 = vector.load %arg19[%c0_78, %c0_79] : memref<8x32xbf16, #tpu.memory_space<vmem>>, vector<8x32xbf16>
    tpu.vector_store %arg19[%c0_78, %c0_79], %160 {strides = array<i32>} : memref<8x32xbf16, #tpu.memory_space<vmem>>, vector<8x32xbf16>,
    %c0_i32_80 = arith.constant 0 : i32
    %c8_i32_81 = arith.constant 8 : i32
    %162 = arith.muli %c0_i32_80, %c8_i32_81 : i32
    %163 = tpu.assume_multiple %162, 8 : i32
    %164 = arith.index_cast %163 : i32 to index
    %c0_82 = arith.constant 0 : index
    %165 = vector.load %arg17[%164, %c0_82] : memref<8x32xbf16, #tpu.memory_space<vmem>>, vector<8x8xbf16>
    %166 = arith.index_cast %163 : i32 to index
    %c0_83 = arith.constant 0 : index
    %167 = vector.load %arg18[%166, %c0_83] : memref<8x32xbf16, #tpu.memory_space<vmem>>, vector<8x8xbf16>
    %168 = arith.index_cast %163 : i32 to index
    %c0_84 = arith.constant 0 : index
    %169 = vector.load %arg19[%168, %c0_84] : memref<8x32xbf16, #tpu.memory_space<vmem>>, vector<8x8xbf16>
    %cst_85 = arith.constant dense<0.000000e+00> : vector<8x8xf32>
    %170 = tpu.matmul %165, %167, %cst_85 {dimension_numbers = #tpu.dot_dimension_numbers<[1], [1], [0], [0], [0, 0, 1, 0], [], []>} : vector<8x8xbf16>, vector<8x8xbf16>, vector<8x8xf32> -> vector<8x8xf32>
    %cst_86 = arith.constant dense<0xFF800000> : vector<8xf32>
    %171 = vector.multi_reduction <maximumf>, %170, %cst_86 [1] : vector<8x8xf32> to vector<8xf32>
    %172 = vector.shape_cast %171 : vector<8xf32> to vector<8x1xf32>
    %173 = vector.broadcast %172 : vector<8x1xf32> to vector<8x8xf32>
    %174 = arith.subf %170, %173 : vector<8x8xf32>
    %175 = math.exp %174 : vector<8x8xf32>
    %cst_87 = arith.constant dense<0.000000e+00> : vector<8xf32>
    %176 = vector.multi_reduction <add>, %175, %cst_87 [1] : vector<8x8xf32> to vector<8xf32>
    %177 = vector.shape_cast %176 : vector<8xf32> to vector<8x1xf32>
    %178 = tpu.reciprocal %177 {approx = true} : vector<8x1xf32> -> vector<8x1xf32>
    %179 = vector.broadcast %178 : vector<8x1xf32> to vector<8x8xf32>
    %180 = arith.mulf %175, %179 : vector<8x8xf32>
    %181 = arith.truncf %180 : vector<8x8xf32> to vector<8x8xbf16>
    %cst_88 = arith.constant dense<0.000000e+00> : vector<8x8xf32>
    %182 = tpu.matmul %181, %169, %cst_88 {dimension_numbers = #tpu.dot_dimension_numbers<[1], [0], [0], [1], [0, 0, 1, 1], [], []>} : vector<8x8xbf16>, vector<8x8xbf16>, vector<8x8xf32> -> vector<8x8xf32>
    %183 = arith.truncf %182 : vector<8x8xf32> to vector<8x8xbf16>
    %184 = arith.index_cast %163 : i32 to index
    %c0_89 = arith.constant 0 : index
    %185 = vector.load %arg20[%184, %c0_89] : memref<8x32xbf16, #tpu.memory_space<vmem>>, vector<8x8xbf16>
    tpu.vector_store %arg20[%184, %c0_89], %183 {strides = array<i32>} : memref<8x32xbf16, #tpu.memory_space<vmem>>, vector<8x8xbf16>,
    %186 = arith.index_cast %163 : i32 to index
    %c8_90 = arith.constant 8 : index
    %187 = vector.load %arg17[%186, %c8_90] : memref<8x32xbf16, #tpu.memory_space<vmem>>, vector<8x8xbf16>
    %188 = arith.index_cast %163 : i32 to index
    %c8_91 = arith.constant 8 : index
    %189 = vector.load %arg18[%188, %c8_91] : memref<8x32xbf16, #tpu.memory_space<vmem>>, vector<8x8xbf16>
    %190 = arith.index_cast %163 : i32 to index
    %c8_92 = arith.constant 8 : index
    %191 = vector.load %arg19[%190, %c8_92] : memref<8x32xbf16, #tpu.memory_space<vmem>>, vector<8x8xbf16>
    %cst_93 = arith.constant dense<0.000000e+00> : vector<8x8xf32>
    %192 = tpu.matmul %187, %189, %cst_93 {dimension_numbers = #tpu.dot_dimension_numbers<[1], [1], [0], [0], [0, 0, 1, 0], [], []>} : vector<8x8xbf16>, vector<8x8xbf16>, vector<8x8xf32> -> vector<8x8xf32>
    %cst_94 = arith.constant dense<0xFF800000> : vector<8xf32>
    %193 = vector.multi_reduction <maximumf>, %192, %cst_94 [1] : vector<8x8xf32> to vector<8xf32>
    %194 = vector.shape_cast %193 : vector<8xf32> to vector<8x1xf32>
    %195 = vector.broadcast %194 : vector<8x1xf32> to vector<8x8xf32>
    %196 = arith.subf %192, %195 : vector<8x8xf32>
    %197 = math.exp %196 : vector<8x8xf32>
    %cst_95 = arith.constant dense<0.000000e+00> : vector<8xf32>
    %198 = vector.multi_reduction <add>, %197, %cst_95 [1] : vector<8x8xf32> to vector<8xf32>
    %199 = vector.shape_cast %198 : vector<8xf32> to vector<8x1xf32>
    %200 = tpu.reciprocal %199 {approx = true} : vector<8x1xf32> -> vector<8x1xf32>
    %201 = vector.broadcast %200 : vector<8x1xf32> to vector<8x8xf32>
    %202 = arith.mulf %197, %201 : vector<8x8xf32>
    %203 = arith.truncf %202 : vector<8x8xf32> to vector<8x8xbf16>
    %cst_96 = arith.constant dense<0.000000e+00> : vector<8x8xf32>
    %204 = tpu.matmul %203, %191, %cst_96 {dimension_numbers = #tpu.dot_dimension_numbers<[1], [0], [0], [1], [0, 0, 1, 1], [], []>} : vector<8x8xbf16>, vector<8x8xbf16>, vector<8x8xf32> -> vector<8x8xf32>
    %205 = arith.truncf %204 : vector<8x8xf32> to vector<8x8xbf16>
    %206 = arith.index_cast %163 : i32 to index
    %c8_97 = arith.constant 8 : index
    %207 = vector.load %arg20[%206, %c8_97] : memref<8x32xbf16, #tpu.memory_space<vmem>>, vector<8x8xbf16>
    tpu.vector_store %arg20[%206, %c8_97], %205 {strides = array<i32>} : memref<8x32xbf16, #tpu.memory_space<vmem>>, vector<8x8xbf16>,
    %208 = arith.index_cast %163 : i32 to index
    %c16_98 = arith.constant 16 : index
    %209 = vector.load %arg17[%208, %c16_98] : memref<8x32xbf16, #tpu.memory_space<vmem>>, vector<8x8xbf16>
    %210 = arith.index_cast %163 : i32 to index
    %c16_99 = arith.constant 16 : index
    %211 = vector.load %arg18[%210, %c16_99] : memref<8x32xbf16, #tpu.memory_space<vmem>>, vector<8x8xbf16>
    %212 = arith.index_cast %163 : i32 to index
    %c16_100 = arith.constant 16 : index
    %213 = vector.load %arg19[%212, %c16_100] : memref<8x32xbf16, #tpu.memory_space<vmem>>, vector<8x8xbf16>
    %cst_101 = arith.constant dense<0.000000e+00> : vector<8x8xf32>
    %214 = tpu.matmul %209, %211, %cst_101 {dimension_numbers = #tpu.dot_dimension_numbers<[1], [1], [0], [0], [0, 0, 1, 0], [], []>} : vector<8x8xbf16>, vector<8x8xbf16>, vector<8x8xf32> -> vector<8x8xf32>
    %cst_102 = arith.constant dense<0xFF800000> : vector<8xf32>
    %215 = vector.multi_reduction <maximumf>, %214, %cst_102 [1] : vector<8x8xf32> to vector<8xf32>
    %216 = vector.shape_cast %215 : vector<8xf32> to vector<8x1xf32>
    %217 = vector.broadcast %216 : vector<8x1xf32> to vector<8x8xf32>
    %218 = arith.subf %214, %217 : vector<8x8xf32>
    %219 = math.exp %218 : vector<8x8xf32>
    %cst_103 = arith.constant dense<0.000000e+00> : vector<8xf32>
    %220 = vector.multi_reduction <add>, %219, %cst_103 [1] : vector<8x8xf32> to vector<8xf32>
    %221 = vector.shape_cast %220 : vector<8xf32> to vector<8x1xf32>
    %222 = tpu.reciprocal %221 {approx = true} : vector<8x1xf32> -> vector<8x1xf32>
    %223 = vector.broadcast %222 : vector<8x1xf32> to vector<8x8xf32>
    %224 = arith.mulf %219, %223 : vector<8x8xf32>
    %225 = arith.truncf %224 : vector<8x8xf32> to vector<8x8xbf16>
    %cst_104 = arith.constant dense<0.000000e+00> : vector<8x8xf32>
    %226 = tpu.matmul %225, %213, %cst_104 {dimension_numbers = #tpu.dot_dimension_numbers<[1], [0], [0], [1], [0, 0, 1, 1], [], []>} : vector<8x8xbf16>, vector<8x8xbf16>, vector<8x8xf32> -> vector<8x8xf32>
    %227 = arith.truncf %226 : vector<8x8xf32> to vector<8x8xbf16>
    %228 = arith.index_cast %163 : i32 to index
    %c16_105 = arith.constant 16 : index
    %229 = vector.load %arg20[%228, %c16_105] : memref<8x32xbf16, #tpu.memory_space<vmem>>, vector<8x8xbf16>
    tpu.vector_store %arg20[%228, %c16_105], %227 {strides = array<i32>} : memref<8x32xbf16, #tpu.memory_space<vmem>>, vector<8x8xbf16>,
    %230 = arith.index_cast %163 : i32 to index
    %c24_106 = arith.constant 24 : index
    %231 = vector.load %arg17[%230, %c24_106] : memref<8x32xbf16, #tpu.memory_space<vmem>>, vector<8x8xbf16>
    %232 = arith.index_cast %163 : i32 to index
    %c24_107 = arith.constant 24 : index
    %233 = vector.load %arg18[%232, %c24_107] : memref<8x32xbf16, #tpu.memory_space<vmem>>, vector<8x8xbf16>
    %234 = arith.index_cast %163 : i32 to index
    %c24_108 = arith.constant 24 : index
    %235 = vector.load %arg19[%234, %c24_108] : memref<8x32xbf16, #tpu.memory_space<vmem>>, vector<8x8xbf16>
    %cst_109 = arith.constant dense<0.000000e+00> : vector<8x8xf32>
    %236 = tpu.matmul %231, %233, %cst_109 {dimension_numbers = #tpu.dot_dimension_numbers<[1], [1], [0], [0], [0, 0, 1, 0], [], []>} : vector<8x8xbf16>, vector<8x8xbf16>, vector<8x8xf32> -> vector<8x8xf32>
    %cst_110 = arith.constant dense<0xFF800000> : vector<8xf32>
    %237 = vector.multi_reduction <maximumf>, %236, %cst_110 [1] : vector<8x8xf32> to vector<8xf32>
    %238 = vector.shape_cast %237 : vector<8xf32> to vector<8x1xf32>
    %239 = vector.broadcast %238 : vector<8x1xf32> to vector<8x8xf32>
    %240 = arith.subf %236, %239 : vector<8x8xf32>
    %241 = math.exp %240 : vector<8x8xf32>
    %cst_111 = arith.constant dense<0.000000e+00> : vector<8xf32>
    %242 = vector.multi_reduction <add>, %241, %cst_111 [1] : vector<8x8xf32> to vector<8xf32>
    %243 = vector.shape_cast %242 : vector<8xf32> to vector<8x1xf32>
    %244 = tpu.reciprocal %243 {approx = true} : vector<8x1xf32> -> vector<8x1xf32>
    %245 = vector.broadcast %244 : vector<8x1xf32> to vector<8x8xf32>
    %246 = arith.mulf %241, %245 : vector<8x8xf32>
    %247 = arith.truncf %246 : vector<8x8xf32> to vector<8x8xbf16>
    %cst_112 = arith.constant dense<0.000000e+00> : vector<8x8xf32>
    %248 = tpu.matmul %247, %235, %cst_112 {dimension_numbers = #tpu.dot_dimension_numbers<[1], [0], [0], [1], [0, 0, 1, 1], [], []>} : vector<8x8xbf16>, vector<8x8xbf16>, vector<8x8xf32> -> vector<8x8xf32>
    %249 = arith.truncf %248 : vector<8x8xf32> to vector<8x8xbf16>
    %250 = arith.index_cast %163 : i32 to index
    %c24_113 = arith.constant 24 : index
    %251 = vector.load %arg20[%250, %c24_113] : memref<8x32xbf16, #tpu.memory_space<vmem>>, vector<8x8xbf16>
    tpu.vector_store %arg20[%250, %c24_113], %249 {strides = array<i32>} : memref<8x32xbf16, #tpu.memory_space<vmem>>, vector<8x8xbf16>,
    %c1_i32_114 = arith.constant 1 : i32
    %c0_115 = arith.constant 0 : index
    %c0_116 = arith.constant 0 : index
    %252 = vector.load %arg20[%c0_115, %c0_116] : memref<8x32xbf16, #tpu.memory_space<vmem>>, vector<8x32xbf16>
    %c0_117 = arith.constant 0 : index
    %c0_118 = arith.constant 0 : index
    %253 = vector.load %arg14[%c0_117, %c0_118] : memref<32x32xbf16, #tpu.memory_space<vmem>>, vector<32x32xbf16>
    %cst_119 = arith.constant dense<0.000000e+00> : vector<8x32xf32>
    %254 = tpu.matmul %252, %253, %cst_119 {dimension_numbers = #tpu.dot_dimension_numbers<[1], [0], [0], [1], [0, 0, 1, 1], [], []>} : vector<8x32xbf16>, vector<32x32xbf16>, vector<8x32xf32> -> vector<8x32xf32>
    %c0_120 = arith.constant 0 : index
    %c0_121 = arith.constant 0 : index
    %255 = vector.load %arg15[%c0_120, %c0_121] : memref<1x32xf32, #tpu.memory_space<vmem>>, vector<1x32xf32>
    %256 = vector.shape_cast %255 : vector<1x32xf32> to vector<32xf32>
    %257 = vector.shape_cast %256 : vector<32xf32> to vector<1x32xf32>
    %258 = vector.broadcast %257 : vector<1x32xf32> to vector<8x32xf32>
    %259 = arith.addf %254, %258 : vector<8x32xf32>
    %260 = arith.addf %1, %138 : vector<8x32xf32>
    %261 = arith.addf %260, %259 : vector<8x32xf32>
    %262 = vector.shape_cast %261 : vector<8x32xf32> to vector<1x8x32xf32>
    %c0_122 = arith.constant 0 : index
    %c0_123 = arith.constant 0 : index
    %c0_124 = arith.constant 0 : index
    %263 = vector.load %arg16[%c0_122, %c0_123, %c0_124] : memref<1x8x32xf32, #tpu.memory_space<vmem>>, vector<1x8x32xf32>
    tpu.vector_store %arg16[%c0_122, %c0_123, %c0_124], %262 {strides = array<i32>} : memref<1x8x32xf32, #tpu.memory_space<vmem>>, vector<1x8x32xf32>,
    return
  }
  func.func @transform_0(%arg0: i32) -> (i32, i32, i32) {
    %c0_i32 = arith.constant 0 : i32
    %c0_i32_0 = arith.constant 0 : i32
    %c0_i32_1 = arith.constant 0 : i32
    return %arg0, %c0_i32, %c0_i32_0 : i32, i32, i32
  }
  func.func @transform_1(%arg0: i32) -> (i32, i32) {
    %c0_i32 = arith.constant 0 : i32
    %c0_i32_0 = arith.constant 0 : i32
    %c0_i32_1 = arith.constant 0 : i32
    return %c0_i32, %c0_i32_0 : i32, i32
  }
  func.func @transform_2(%arg0: i32) -> (i32, i32) {
    %c0_i32 = arith.constant 0 : i32
    %c0_i32_0 = arith.constant 0 : i32
    %c0_i32_1 = arith.constant 0 : i32
    return %c0_i32, %c0_i32_0 : i32, i32
  }
  func.func @transform_3(%arg0: i32) -> (i32, i32) {
    %c0_i32 = arith.constant 0 : i32
    %c0_i32_0 = arith.constant 0 : i32
    %c0_i32_1 = arith.constant 0 : i32
    return %c0_i32, %c0_i32_0 : i32, i32
  }
  func.func @transform_4(%arg0: i32) -> (i32, i32) {
    %c0_i32 = arith.constant 0 : i32
    %c0_i32_0 = arith.constant 0 : i32
    %c0_i32_1 = arith.constant 0 : i32
    return %c0_i32, %c0_i32_0 : i32, i32
  }
  func.func @transform_5(%arg0: i32) -> (i32, i32) {
    %c0_i32 = arith.constant 0 : i32
    %c0_i32_0 = arith.constant 0 : i32
    %c0_i32_1 = arith.constant 0 : i32
    return %c0_i32, %c0_i32_0 : i32, i32
  }
  func.func @transform_6(%arg0: i32) -> (i32, i32) {
    %c0_i32 = arith.constant 0 : i32
    %c0_i32_0 = arith.constant 0 : i32
    %c0_i32_1 = arith.constant 0 : i32
    return %c0_i32, %c0_i32_0 : i32, i32
  }
  func.func @transform_7(%arg0: i32) -> (i32, i32) {
    %c0_i32 = arith.constant 0 : i32
    %c0_i32_0 = arith.constant 0 : i32
    %c0_i32_1 = arith.constant 0 : i32
    return %c0_i32, %c0_i32_0 : i32, i32
  }
  func.func @transform_8(%arg0: i32) -> (i32, i32) {
    %c0_i32 = arith.constant 0 : i32
    %c0_i32_0 = arith.constant 0 : i32
    %c0_i32_1 = arith.constant 0 : i32
    return %c0_i32, %c0_i32_0 : i32, i32
  }
  func.func @transform_9(%arg0: i32) -> (i32, i32) {
    %c0_i32 = arith.constant 0 : i32
    %c0_i32_0 = arith.constant 0 : i32
    %c0_i32_1 = arith.constant 0 : i32
    return %c0_i32, %c0_i32_0 : i32, i32
  }
  func.func @transform_10(%arg0: i32) -> (i32, i32) {
    %c0_i32 = arith.constant 0 : i32
    %c0_i32_0 = arith.constant 0 : i32
    %c0_i32_1 = arith.constant 0 : i32
    return %c0_i32, %c0_i32_0 : i32, i32
  }
  func.func @transform_11(%arg0: i32) -> (i32, i32) {
    %c0_i32 = arith.constant 0 : i32
    %c0_i32_0 = arith.constant 0 : i32
    %c0_i32_1 = arith.constant 0 : i32
    return %c0_i32, %c0_i32_0 : i32, i32
  }
  func.func @transform_12(%arg0: i32) -> (i32, i32) {
    %c0_i32 = arith.constant 0 : i32
    %c0_i32_0 = arith.constant 0 : i32
    %c0_i32_1 = arith.constant 0 : i32
    return %c0_i32, %c0_i32_0 : i32, i32
  }
  func.func @transform_13(%arg0: i32) -> (i32, i32) {
    %c0_i32 = arith.constant 0 : i32
    %c0_i32_0 = arith.constant 0 : i32
    %c0_i32_1 = arith.constant 0 : i32
    return %c0_i32, %c0_i32_0 : i32, i32
  }
  func.func @transform_14(%arg0: i32) -> (i32, i32) {
    %c0_i32 = arith.constant 0 : i32
    %c0_i32_0 = arith.constant 0 : i32
    %c0_i32_1 = arith.constant 0 : i32
    return %c0_i32, %c0_i32_0 : i32, i32
  }
  func.func @transform_15(%arg0: i32) -> (i32, i32, i32) {
    %c0_i32 = arith.constant 0 : i32
    %c0_i32_0 = arith.constant 0 : i32
    %c0_i32_1 = arith.constant 0 : i32
    return %arg0, %c0_i32, %c0_i32_0 : i32, i32, i32
  }
}

</mosaic_0001>

<llo_original>
// kernel: tpu_custom_call.1
$region0: #{tpu_custom_call.1}
  #allocation0 [shape = 'u32[]', space=smem, size = 0x4, offset = 0x4, fixed_abs, tag = 'smem constant byte address 0x4 - core index']
  #allocation1 [shape = 'u32[72,128]{1,0:T(1,128)}', space=vmem, size = 0x9000, scoped, tag = 'internal scratch']
  #allocation2 [shape = 'bf16[8,32]{1,0:T(8,128)(2,1)}', space=vmem, size = 0x800, scoped, tag = 'scratch operand']
  #allocation3 [shape = 'bf16[8,32]{1,0:T(8,128)(2,1)}', space=vmem, size = 0x800, scoped, tag = 'scratch operand']
  #allocation4 [shape = 'bf16[8,32]{1,0:T(8,128)(2,1)}', space=vmem, size = 0x800, scoped, tag = 'scratch operand']
  #allocation5 [shape = 'bf16[8,32]{1,0:T(8,128)(2,1)}', space=vmem, size = 0x800, scoped, tag = 'scratch operand']
  %s0 = inlined_call_operand.hbm [shape: f32[2,8,32], index: 0, kind: input, shape index: {}]
  %s1 = inlined_call_operand.hbm [shape: f32[1,32], index: 1, kind: input, shape index: {}]
  %s2 = inlined_call_operand.vmem [shape: f32[1,32], index: 2, kind: input, shape index: {}]
  %s3 = inlined_call_operand.vmem [shape: f32[1,32], index: 3, kind: input, shape index: {}]
  %s4 = inlined_call_operand.vmem [shape: f32[1,32], index: 4, kind: input, shape index: {}]
  %s5 = inlined_call_operand.hbm [shape: bf16[32,32], index: 5, kind: input, shape index: {}]
  %s6 = inlined_call_operand.hbm [shape: bf16[32,32], index: 6, kind: input, shape index: {}]
  %s7 = inlined_call_operand.hbm [shape: bf16[32,32], index: 7, kind: input, shape index: {}]
  %s8 = inlined_call_operand.hbm [shape: bf16[32,32], index: 8, kind: input, shape index: {}]
  %s9 = inlined_call_operand.vmem [shape: f32[1,32], index: 9, kind: input, shape index: {}]
  %s10 = inlined_call_operand.hbm [shape: bf16[32,32], index: 10, kind: input, shape index: {}]
  %s11 = inlined_call_operand.hbm [shape: bf16[32,32], index: 11, kind: input, shape index: {}]
  %s12 = inlined_call_operand.hbm [shape: bf16[32,32], index: 12, kind: input, shape index: {}]
  %s13 = inlined_call_operand.hbm [shape: bf16[32,32], index: 13, kind: input, shape index: {}]
  %s14 = inlined_call_operand.vmem [shape: f32[1,32], index: 14, kind: input, shape index: {}]
  %s15 = inlined_call_operand.hbm [shape: f32[2,8,32], index: 15, kind: output, shape index: {}]
  %s16 = sld [smem:[#allocation0]]
  $region133: #{tpu_custom_call.1} parent=0
    _
  %s18 = ssub.s32 1, %s16
  %s19 = scalar_select 0, %s18, %s16
  $region1: #{tpu_custom_call.1} parent=0
    #allocation6 [shape = 'u8[8192]{0}', space=vmem, size = 0x2000, scoped, tag = 'input window, operand 0']
    #allocation7 [shape = 's32[2]{0}', space=sflag, size = 0x8, scoped, tag = 'scoped memory for tpu_custom_call.1']
    #allocation8 [shape = 's32[2]{0}', space=sflag, size = 0x8, scoped, tag = 'scoped memory for tpu_custom_call.1']
    #allocation9 [shape = 'u8[512]{0}', space=vmem, size = 0x400, scoped, tag = 'input window, operand 1, single buffered']
    #allocation10 [shape = 's32[1]{0}', space=sflag, size = 0x4, scoped, tag = 'scoped memory for tpu_custom_call.1']
    #allocation11 [shape = 'u8[8192]{0}', space=vmem, size = 0x2000, scoped, tag = 'input window, operand 5, single buffered']
    #allocation12 [shape = 'u8[8192]{0}', space=vmem, size = 0x2000, scoped, tag = 'input window, operand 6, single buffered']
    #allocation13 [shape = 's32[1]{0}', space=sflag, size = 0x4, scoped, tag = 'scoped memory for tpu_custom_call.1']
    #allocation14 [shape = 'u8[8192]{0}', space=vmem, size = 0x2000, scoped, tag = 'input window, operand 7, single buffered']
    #allocation15 [shape = 'u8[8192]{0}', space=vmem, size = 0x2000, scoped, tag = 'input window, operand 8, single buffered']
    #allocation16 [shape = 's32[1]{0}', space=sflag, size = 0x4, scoped, tag = 'scoped memory for tpu_custom_call.1']
    #allocation17 [shape = 'u8[8192]{0}', space=vmem, size = 0x2000, scoped, tag = 'input window, operand 10, single buffered']
    #allocation18 [shape = 'u8[8192]{0}', space=vmem, size = 0x2000, scoped, tag = 'input window, operand 11, single buffered']
    #allocation19 [shape = 's32[1]{0}', space=sflag, size = 0x4, scoped, tag = 'scoped memory for tpu_custom_call.1']
    #allocation20 [shape = 'u8[8192]{0}', space=vmem, size = 0x2000, scoped, tag = 'input window, operand 12, single buffered']
    #allocation21 [shape = 'u8[8192]{0}', space=vmem, size = 0x2000, scoped, tag = 'input window, operand 13, single buffered']
    #allocation22 [shape = 's32[1]{0}', space=sflag, size = 0x4, scoped, tag = 'scoped memory for tpu_custom_call.1']
    #allocation23 [shape = 'u8[8192]{0}', space=vmem, size = 0x2000, scoped, tag = 'output window, operand 0']
    %20 = vsyncpa [#allocation7], 0
    %s21 = scalar_lea.sflag [#allocation7], 1
    %22 = vsyncpa %s21, 0
    %23 = vsyncpa [#allocation10], 0
    %24 = vsyncpa [#allocation13], 0
    %25 = vsyncpa [#allocation16], 0
    %26 = vsyncpa [#allocation19], 0
    %27 = vsyncpa [#allocation22], 0
    %28 = vsyncpa [#allocation8], 0
    %s29 = scalar_lea.sflag [#allocation8], 1
    %30 = vsyncpa %s29, 0
    loop: start=0, step=1, limit=4
    $region2: #{tpu_custom_call.1} parent=1 // loop_pre_header
      _
    $region3: #{tpu_custom_call.1} parent=1 // loop_header
      %s32 = sphi 0, %s36
      %p33 = scmp.ge.s32.totalorder %s32, 4
      %s42 = sphi 0, %s44
      %s45 = sphi 0, %s42
      %s46 = sphi 0, %s45
      %s62 = sphi 0, %s46
      %s66 = sphi 0, %s66
      %s68 = sphi 0, %s66
      %s69 = sphi 0, %s68
      %s83 = sphi 0, %s69
      %s87 = sphi 0, %s87
      %s89 = sphi 0, %s87
      %s90 = sphi 0, %s89
      %s104 = sphi 0, %s90
      %s108 = sphi 0, %s108
      %s110 = sphi 0, %s108
      %s111 = sphi 0, %s110
      %s125 = sphi 0, %s111
      %s129 = sphi 0, %s129
      %s131 = sphi 0, %s129
      %s132 = sphi 0, %s131
      %s146 = sphi 0, %s132
      %s150 = sphi 0, %s150
      %s152 = sphi 0, %s150
      %s153 = sphi 0, %s152
      %s167 = sphi 0, %s153
      %s171 = sphi 0, %s171
      %s173 = sphi 0, %s171
      %s174 = sphi 0, %s173
      %s188 = sphi 0, %s174
      %s192 = sphi 0, %s192
      %s194 = sphi 0, %s192
      %s195 = sphi 0, %s194
      %s209 = sphi 0, %s195
      %s213 = sphi 0, %s213
      %s215 = sphi 0, %s213
      %s216 = sphi 0, %s215
      %s230 = sphi 0, %s216
      %s234 = sphi 0, %s234
      %s236 = sphi 0, %s234
      %s237 = sphi 0, %s236
      %s251 = sphi 0, %s237
      %s255 = sphi 0, %s255
      %s257 = sphi 0, %s255
      %s258 = sphi 0, %s257
      %s272 = sphi 0, %s258
      %s276 = sphi 0, %s276
      %s278 = sphi 0, %s276
      %s279 = sphi 0, %s278
      %s293 = sphi 0, %s279
      %s297 = sphi 0, %s297
      %s299 = sphi 0, %s297
      %s300 = sphi 0, %s299
      %s314 = sphi 0, %s300
      %s318 = sphi 0, %s318
      %s320 = sphi 0, %s318
      %s321 = sphi 0, %s320
      %s335 = sphi 0, %s321
      %s339 = sphi 0, %s339
      %s341 = sphi 0, %s339
      %s342 = sphi 0, %s341
      %s356 = sphi 0, %s342
      %s362 = sphi 0, %s364
      %s365 = sphi 0, %s362
      %s366 = sphi 0, %s365
      %s382 = sphi 0, %s366
    $region4: #{tpu_custom_call.1} parent=1 // loop_header_branch
      %35 = sbr.rel (%p33) target = $region8
    $region5: #{tpu_custom_call.1} parent=1 // loop_body
      %s37 = ssub.s32 %s32, 1
      %s38 = ssub.s32 %s32, 2
      %s39 = sadd.s32 %s32, 1
      %s40 = ssub.s32 %s32, %s39
      %p41 = scmp.eq.s32.totalorder %s40, 0
      %s43 = sadd.s32 %s42, 1
      %s44 = scalar_select %p41, %s42, %s43
      %p47 = pneg %p41
      %p48 = scmp.eq.s32.totalorder %s32, 1
      %p49 = por %p47, %p48
      %p50 = scmp.ne.s32.totalorder %s42, %s45
      %p51 = scmp.eq.s32.totalorder %s32, 0
      %p52 = por %p50, %p51
      %p53 = scmp.ne.s32.totalorder %s42, %s45
      %p54 = scmp.eq.s32.totalorder %s37, 1
      %p55 = por %p53, %p54
      %p56 = scmp.ne.s32.totalorder %s45, %s46
      %p57 = scmp.eq.s32.totalorder %s37, 0
      %p58 = por %p56, %p57
      %p59 = scmp.ne.s32.totalorder %s45, %s46
      %p60 = scmp.eq.s32.totalorder %s38, 1
      %p61 = por %p59, %p60
      %p63 = scmp.ne.s32.totalorder %s46, %s62
      %p64 = scmp.eq.s32.totalorder %s38, 0
      %p65 = por %p63, %p64
      %s67 = sadd.s32 %s66, 1
      %p70 = scmp.eq.s32.totalorder %s32, 1
      %p71 = scmp.ne.s32.totalorder %s66, %s68
      %p72 = scmp.eq.s32.totalorder %s32, 0
      %p73 = por %p71, %p72
      %p74 = scmp.ne.s32.totalorder %s66, %s68
      %p75 = scmp.eq.s32.totalorder %s37, 1
      %p76 = por %p74, %p75
      %p77 = scmp.ne.s32.totalorder %s68, %s69
      %p78 = scmp.eq.s32.totalorder %s37, 0
      %p79 = por %p77, %p78
      %p80 = scmp.ne.s32.totalorder %s68, %s69
      %p81 = scmp.eq.s32.totalorder %s38, 1
      %p82 = por %p80, %p81
      %p84 = scmp.ne.s32.totalorder %s69, %s83
      %p85 = scmp.eq.s32.totalorder %s38, 0
      %p86 = por %p84, %p85
      %s88 = sadd.s32 %s87, 1
      %p91 = scmp.eq.s32.totalorder %s32, 1
      %p92 = scmp.ne.s32.totalorder %s87, %s89
      %p93 = scmp.eq.s32.totalorder %s32, 0
      %p94 = por %p92, %p93
      %p95 = scmp.ne.s32.totalorder %s87, %s89
      %p96 = scmp.eq.s32.totalorder %s37, 1
      %p97 = por %p95, %p96
      %p98 = scmp.ne.s32.totalorder %s89, %s90
      %p99 = scmp.eq.s32.totalorder %s37, 0
      %p100 = por %p98, %p99
      %p101 = scmp.ne.s32.totalorder %s89, %s90
      %p102 = scmp.eq.s32.totalorder %s38, 1
      %p103 = por %p101, %p102
      %p105 = scmp.ne.s32.totalorder %s90, %s104
      %p106 = scmp.eq.s32.totalorder %s38, 0
      %p107 = por %p105, %p106
      %s109 = sadd.s32 %s108, 1
      %p112 = scmp.eq.s32.totalorder %s32, 1
      %p113 = scmp.ne.s32.totalorder %s108, %s110
      %p114 = scmp.eq.s32.totalorder %s32, 0
      %p115 = por %p113, %p114
      %p116 = scmp.ne.s32.totalorder %s108, %s110
      %p117 = scmp.eq.s32.totalorder %s37, 1
      %p118 = por %p116, %p117
      %p119 = scmp.ne.s32.totalorder %s110, %s111
      %p120 = scmp.eq.s32.totalorder %s37, 0
      %p121 = por %p119, %p120
      %p122 = scmp.ne.s32.totalorder %s110, %s111
      %p123 = scmp.eq.s32.totalorder %s38, 1
      %p124 = por %p122, %p123
      %p126 = scmp.ne.s32.totalorder %s111, %s125
      %p127 = scmp.eq.s32.totalorder %s38, 0
      %p128 = por %p126, %p127
      %s130 = sadd.s32 %s129, 1
      %p133 = scmp.eq.s32.totalorder %s32, 1
      %p134 = scmp.ne.s32.totalorder %s129, %s131
      %p135 = scmp.eq.s32.totalorder %s32, 0
      %p136 = por %p134, %p135
      %p137 = scmp.ne.s32.totalorder %s129, %s131
      %p138 = scmp.eq.s32.totalorder %s37, 1
      %p139 = por %p137, %p138
      %p140 = scmp.ne.s32.totalorder %s131, %s132
      %p141 = scmp.eq.s32.totalorder %s37, 0
      %p142 = por %p140, %p141
      %p143 = scmp.ne.s32.totalorder %s131, %s132
      %p144 = scmp.eq.s32.totalorder %s38, 1
      %p145 = por %p143, %p144
      %p147 = scmp.ne.s32.totalorder %s132, %s146
      %p148 = scmp.eq.s32.totalorder %s38, 0
      %p149 = por %p147, %p148
      %s151 = sadd.s32 %s150, 1
      %p154 = scmp.eq.s32.totalorder %s32, 1
      %p155 = scmp.ne.s32.totalorder %s150, %s152
      %p156 = scmp.eq.s32.totalorder %s32, 0
      %p157 = por %p155, %p156
      %p158 = scmp.ne.s32.totalorder %s150, %s152
      %p159 = scmp.eq.s32.totalorder %s37, 1
      %p160 = por %p158, %p159
      %p161 = scmp.ne.s32.totalorder %s152, %s153
      %p162 = scmp.eq.s32.totalorder %s37, 0
      %p163 = por %p161, %p162
      %p164 = scmp.ne.s32.totalorder %s152, %s153
      %p165 = scmp.eq.s32.totalorder %s38, 1
      %p166 = por %p164, %p165
      %p168 = scmp.ne.s32.totalorder %s153, %s167
      %p169 = scmp.eq.s32.totalorder %s38, 0
      %p170 = por %p168, %p169
      %s172 = sadd.s32 %s171, 1
      %p175 = scmp.eq.s32.totalorder %s32, 1
      %p176 = scmp.ne.s32.totalorder %s171, %s173
      %p177 = scmp.eq.s32.totalorder %s32, 0
      %p178 = por %p176, %p177
      %p179 = scmp.ne.s32.totalorder %s171, %s173
      %p180 = scmp.eq.s32.totalorder %s37, 1
      %p181 = por %p179, %p180
      %p182 = scmp.ne.s32.totalorder %s173, %s174
      %p183 = scmp.eq.s32.totalorder %s37, 0
      %p184 = por %p182, %p183
      %p185 = scmp.ne.s32.totalorder %s173, %s174
      %p186 = scmp.eq.s32.totalorder %s38, 1
      %p187 = por %p185, %p186
      %p189 = scmp.ne.s32.totalorder %s174, %s188
      %p190 = scmp.eq.s32.totalorder %s38, 0
      %p191 = por %p189, %p190
      %s193 = sadd.s32 %s192, 1
      %p196 = scmp.eq.s32.totalorder %s32, 1
      %p197 = scmp.ne.s32.totalorder %s192, %s194
      %p198 = scmp.eq.s32.totalorder %s32, 0
      %p199 = por %p197, %p198
      %p200 = scmp.ne.s32.totalorder %s192, %s194
      %p201 = scmp.eq.s32.totalorder %s37, 1
      %p202 = por %p200, %p201
      %p203 = scmp.ne.s32.totalorder %s194, %s195
      %p204 = scmp.eq.s32.totalorder %s37, 0
      %p205 = por %p203, %p204
      %p206 = scmp.ne.s32.totalorder %s194, %s195
      %p207 = scmp.eq.s32.totalorder %s38, 1
      %p208 = por %p206, %p207
      %p210 = scmp.ne.s32.totalorder %s195, %s209
      %p211 = scmp.eq.s32.totalorder %s38, 0
      %p212 = por %p210, %p211
      %s214 = sadd.s32 %s213, 1
      %p217 = scmp.eq.s32.totalorder %s32, 1
      %p218 = scmp.ne.s32.totalorder %s213, %s215
      %p219 = scmp.eq.s32.totalorder %s32, 0
      %p220 = por %p218, %p219
      %p221 = scmp.ne.s32.totalorder %s213, %s215
      %p222 = scmp.eq.s32.totalorder %s37, 1
      %p223 = por %p221, %p222
      %p224 = scmp.ne.s32.totalorder %s215, %s216
      %p225 = scmp.eq.s32.totalorder %s37, 0
      %p226 = por %p224, %p225
      %p227 = scmp.ne.s32.totalorder %s215, %s216
      %p228 = scmp.eq.s32.totalorder %s38, 1
      %p229 = por %p227, %p228
      %p231 = scmp.ne.s32.totalorder %s216, %s230
      %p232 = scmp.eq.s32.totalorder %s38, 0
      %p233 = por %p231, %p232
      %s235 = sadd.s32 %s234, 1
      %p238 = scmp.eq.s32.totalorder %s32, 1
      %p239 = scmp.ne.s32.totalorder %s234, %s236
      %p240 = scmp.eq.s32.totalorder %s32, 0
      %p241 = por %p239, %p240
      %p242 = scmp.ne.s32.totalorder %s234, %s236
      %p243 = scmp.eq.s32.totalorder %s37, 1
      %p244 = por %p242, %p243
      %p245 = scmp.ne.s32.totalorder %s236, %s237
      %p246 = scmp.eq.s32.totalorder %s37, 0
      %p247 = por %p245, %p246
      %p248 = scmp.ne.s32.totalorder %s236, %s237
      %p249 = scmp.eq.s32.totalorder %s38, 1
      %p250 = por %p248, %p249
      %p252 = scmp.ne.s32.totalorder %s237, %s251
      %p253 = scmp.eq.s32.totalorder %s38, 0
      %p254 = por %p252, %p253
      %s256 = sadd.s32 %s255, 1
      %p259 = scmp.eq.s32.totalorder %s32, 1
      %p260 = scmp.ne.s32.totalorder %s255, %s257
      %p261 = scmp.eq.s32.totalorder %s32, 0
      %p262 = por %p260, %p261
      %p263 = scmp.ne.s32.totalorder %s255, %s257
      %p264 = scmp.eq.s32.totalorder %s37, 1
      %p265 = por %p263, %p264
      %p266 = scmp.ne.s32.totalorder %s257, %s258
      %p267 = scmp.eq.s32.totalorder %s37, 0
      %p268 = por %p266, %p267
      %p269 = scmp.ne.s32.totalorder %s257, %s258
      %p270 = scmp.eq.s32.totalorder %s38, 1
      %p271 = por %p269, %p270
      %p273 = scmp.ne.s32.totalorder %s258, %s272
      %p274 = scmp.eq.s32.totalorder %s38, 0
      %p275 = por %p273, %p274
      %s277 = sadd.s32 %s276, 1
      %p280 = scmp.eq.s32.totalorder %s32, 1
      %p281 = scmp.ne.s32.totalorder %s276, %s278
      %p282 = scmp.eq.s32.totalorder %s32, 0
      %p283 = por %p281, %p282
      %p284 = scmp.ne.s32.totalorder %s276, %s278
      %p285 = scmp.eq.s32.totalorder %s37, 1
      %p286 = por %p284, %p285
      %p287 = scmp.ne.s32.totalorder %s278, %s279
      %p288 = scmp.eq.s32.totalorder %s37, 0
      %p289 = por %p287, %p288
      %p290 = scmp.ne.s32.totalorder %s278, %s279
      %p291 = scmp.eq.s32.totalorder %s38, 1
      %p292 = por %p290, %p291
      %p294 = scmp.ne.s32.totalorder %s279, %s293
      %p295 = scmp.eq.s32.totalorder %s38, 0
      %p296 = por %p294, %p295
      %s298 = sadd.s32 %s297, 1
      %p301 = scmp.eq.s32.totalorder %s32, 1
      %p302 = scmp.ne.s32.totalorder %s297, %s299
      %p303 = scmp.eq.s32.totalorder %s32, 0
      %p304 = por %p302, %p303
      %p305 = scmp.ne.s32.totalorder %s297, %s299
      %p306 = scmp.eq.s32.totalorder %s37, 1
      %p307 = por %p305, %p306
      %p308 = scmp.ne.s32.totalorder %s299, %s300
      %p309 = scmp.eq.s32.totalorder %s37, 0
      %p310 = por %p308, %p309
      %p311 = scmp.ne.s32.totalorder %s299, %s300
      %p312 = scmp.eq.s32.totalorder %s38, 1
      %p313 = por %p311, %p312
      %p315 = scmp.ne.s32.totalorder %s300, %s314
      %p316 = scmp.eq.s32.totalorder %s38, 0
      %p317 = por %p315, %p316
      %s319 = sadd.s32 %s318, 1
      %p322 = scmp.eq.s32.totalorder %s32, 1
      %p323 = scmp.ne.s32.totalorder %s318, %s320
      %p324 = scmp.eq.s32.totalorder %s32, 0
      %p325 = por %p323, %p324
      %p326 = scmp.ne.s32.totalorder %s318, %s320
      %p327 = scmp.eq.s32.totalorder %s37, 1
      %p328 = por %p326, %p327
      %p329 = scmp.ne.s32.totalorder %s320, %s321
      %p330 = scmp.eq.s32.totalorder %s37, 0
      %p331 = por %p329, %p330
      %p332 = scmp.ne.s32.totalorder %s320, %s321
      %p333 = scmp.eq.s32.totalorder %s38, 1
      %p334 = por %p332, %p333
      %p336 = scmp.ne.s32.totalorder %s321, %s335
      %p337 = scmp.eq.s32.totalorder %s38, 0
      %p338 = por %p336, %p337
      %s340 = sadd.s32 %s339, 1
      %p343 = scmp.eq.s32.totalorder %s32, 1
      %p344 = scmp.ne.s32.totalorder %s339, %s341
      %p345 = scmp.eq.s32.totalorder %s32, 0
      %p346 = por %p344, %p345
      %p347 = scmp.ne.s32.totalorder %s339, %s341
      %p348 = scmp.eq.s32.totalorder %s37, 1
      %p349 = por %p347, %p348
      %p350 = scmp.ne.s32.totalorder %s341, %s342
      %p351 = scmp.eq.s32.totalorder %s37, 0
      %p352 = por %p350, %p351
      %p353 = scmp.ne.s32.totalorder %s341, %s342
      %p354 = scmp.eq.s32.totalorder %s38, 1
      %p355 = por %p353, %p354
      %p357 = scmp.ne.s32.totalorder %s342, %s356
      %p358 = scmp.eq.s32.totalorder %s38, 0
      %p359 = por %p357, %p358
      %s360 = ssub.s32 %s32, %s39
      %p361 = scmp.eq.s32.totalorder %s360, 0
      %s363 = sadd.s32 %s362, 1
      %s364 = scalar_select %p361, %s362, %s363
      %p367 = pneg %p361
      %p368 = scmp.eq.s32.totalorder %s32, 1
      %p369 = por %p367, %p368
      %p370 = scmp.ne.s32.totalorder %s362, %s365
      %p371 = scmp.eq.s32.totalorder %s32, 0
      %p372 = por %p370, %p371
      %p373 = scmp.ne.s32.totalorder %s362, %s365
      %p374 = scmp.eq.s32.totalorder %s37, 1
      %p375 = por %p373, %p374
      %p376 = scmp.ne.s32.totalorder %s365, %s366
      %p377 = scmp.eq.s32.totalorder %s37, 0
      %p378 = por %p376, %p377
      %p379 = scmp.ne.s32.totalorder %s365, %s366
      %p380 = scmp.eq.s32.totalorder %s38, 1
      %p381 = por %p379, %p380
      %p383 = scmp.ne.s32.totalorder %s366, %s382
      %p384 = scmp.eq.s32.totalorder %s38, 0
      %p385 = por %p383, %p384
      %p386 = scmp.le.s32.totalorder 1, %s32
      %p387 = scmp.lt.s32.totalorder %s32, 3
      %p388 = pnand %p386, %p387
      %p389 = pneg %p388
      // Predicated region
      $region9: #{tpu_custom_call.1} parent=5 // pred_check
        _
      $region10: #{tpu_custom_call.1} parent=5 // pred_check_branch
        %391 = sbr.rel (%p388) target = $region12
      $region11: #{tpu_custom_call.1} parent=5 // pred_region
        %s392 = ssub.s32 %s32, 1
        // Predicated region
        $region13: #{tpu_custom_call.1} parent=11 // pred_check
          %p393 = pneg %p79
        $region14: #{tpu_custom_call.1} parent=11 // pred_check_branch
          %395 = sbr.rel (%p393) target = $region16
        $region15: #{tpu_custom_call.1} parent=11 // pred_region
          %397 = vsyncadd [#allocation10], 0
          %s399 = sshll.u32 %s1, 4
          %s400 = int_to_ptr.hbm [resolvable:$true] %s399
          %s401 = sshll.u32 [#allocation9], 4
          %s402 = int_to_ptr.vmem [resolvable:$true] %s401
          %404 = dma.hbm_to_vmem [thread:$0]  %s400, 16, %s402, [#allocation10]
        $region16: #{tpu_custom_call.1} parent=11 // pred_fallthru
          _
        // Predicated region
        $region17: #{tpu_custom_call.1} parent=11 // pred_check
          %p405 = pneg %p100
        $region18: #{tpu_custom_call.1} parent=11 // pred_check_branch
          %407 = sbr.rel (%p405) target = $region20
        $region19: #{tpu_custom_call.1} parent=11 // pred_region
          _
        $region20: #{tpu_custom_call.1} parent=11 // pred_fallthru
          _
        // Predicated region
        $region21: #{tpu_custom_call.1} parent=11 // pred_check
          %p408 = pneg %p121
        $region22: #{tpu_custom_call.1} parent=11 // pred_check_branch
          %410 = sbr.rel (%p408) target = $region24
        $region23: #{tpu_custom_call.1} parent=11 // pred_region
          _
        $region24: #{tpu_custom_call.1} parent=11 // pred_fallthru
          _
        // Predicated region
        $region25: #{tpu_custom_call.1} parent=11 // pred_check
          %p411 = pneg %p142
        $region26: #{tpu_custom_call.1} parent=11 // pred_check_branch
          %413 = sbr.rel (%p411) target = $region28
        $region27: #{tpu_custom_call.1} parent=11 // pred_region
          _
        $region28: #{tpu_custom_call.1} parent=11 // pred_fallthru
          _
        // Predicated region
        $region29: #{tpu_custom_call.1} parent=11 // pred_check
          %p414 = pneg %p163
        $region30: #{tpu_custom_call.1} parent=11 // pred_check_branch
          %416 = sbr.rel (%p414) target = $region32
        $region31: #{tpu_custom_call.1} parent=11 // pred_region
          %418 = vsyncadd [#allocation10], 0
          %s419 = sshll.u32 %s5, 4
          %s420 = int_to_ptr.hbm [resolvable:$true] %s419
          %s421 = sshll.u32 [#allocation11], 4
          %s422 = int_to_ptr.vmem [resolvable:$true] %s421
          %427 = dma.hbm_to_vmem [thread:$0]  %s420, 256, %s422, [#allocation10], 64, 64, 4
        $region32: #{tpu_custom_call.1} parent=11 // pred_fallthru
          _
        // Predicated region
        $region33: #{tpu_custom_call.1} parent=11 // pred_check
          %p428 = pneg %p184
        $region34: #{tpu_custom_call.1} parent=11 // pred_check_branch
          %430 = sbr.rel (%p428) target = $region36
        $region35: #{tpu_custom_call.1} parent=11 // pred_region
          %432 = vsyncadd [#allocation13], 0
          %s433 = sshll.u32 %s6, 4
          %s434 = int_to_ptr.hbm [resolvable:$true] %s433
          %s435 = sshll.u32 [#allocation12], 4
          %s436 = int_to_ptr.vmem [resolvable:$true] %s435
          %441 = dma.hbm_to_vmem [thread:$0]  %s434, 256, %s436, [#allocation13], 64, 64, 4
        $region36: #{tpu_custom_call.1} parent=11 // pred_fallthru
          _
        // Predicated region
        $region37: #{tpu_custom_call.1} parent=11 // pred_check
          %p442 = pneg %p205
        $region38: #{tpu_custom_call.1} parent=11 // pred_check_branch
          %444 = sbr.rel (%p442) target = $region40
        $region39: #{tpu_custom_call.1} parent=11 // pred_region
          %446 = vsyncadd [#allocation13], 0
          %s447 = sshll.u32 %s7, 4
          %s448 = int_to_ptr.hbm [resolvable:$true] %s447
          %s449 = sshll.u32 [#allocation14], 4
          %s450 = int_to_ptr.vmem [resolvable:$true] %s449
          %455 = dma.hbm_to_vmem [thread:$0]  %s448, 256, %s450, [#allocation13], 64, 64, 4
        $region40: #{tpu_custom_call.1} parent=11 // pred_fallthru
          _
        // Predicated region
        $region41: #{tpu_custom_call.1} parent=11 // pred_check
          %p456 = pneg %p226
        $region42: #{tpu_custom_call.1} parent=11 // pred_check_branch
          %458 = sbr.rel (%p456) target = $region44
        $region43: #{tpu_custom_call.1} parent=11 // pred_region
          %460 = vsyncadd [#allocation16], 0
          %s461 = sshll.u32 %s8, 4
          %s462 = int_to_ptr.hbm [resolvable:$true] %s461
          %s463 = sshll.u32 [#allocation15], 4
          %s464 = int_to_ptr.vmem [resolvable:$true] %s463
          %469 = dma.hbm_to_vmem [thread:$0]  %s462, 256, %s464, [#allocation16], 64, 64, 4
        $region44: #{tpu_custom_call.1} parent=11 // pred_fallthru
          _
        // Predicated region
        $region45: #{tpu_custom_call.1} parent=11 // pred_check
          %p470 = pneg %p247
        $region46: #{tpu_custom_call.1} parent=11 // pred_check_branch
          %472 = sbr.rel (%p470) target = $region48
        $region47: #{tpu_custom_call.1} parent=11 // pred_region
          _
        $region48: #{tpu_custom_call.1} parent=11 // pred_fallthru
          _
        // Predicated region
        $region49: #{tpu_custom_call.1} parent=11 // pred_check
          %p473 = pneg %p268
        $region50: #{tpu_custom_call.1} parent=11 // pred_check_branch
          %475 = sbr.rel (%p473) target = $region52
        $region51: #{tpu_custom_call.1} parent=11 // pred_region
          %477 = vsyncadd [#allocation16], 0
          %s478 = sshll.u32 %s10, 4
          %s479 = int_to_ptr.hbm [resolvable:$true] %s478
          %s480 = sshll.u32 [#allocation17], 4
          %s481 = int_to_ptr.vmem [resolvable:$true] %s480
          %486 = dma.hbm_to_vmem [thread:$0]  %s479, 256, %s481, [#allocation16], 64, 64, 4
        $region52: #{tpu_custom_call.1} parent=11 // pred_fallthru
          _
        // Predicated region
        $region53: #{tpu_custom_call.1} parent=11 // pred_check
          %p487 = pneg %p289
        $region54: #{tpu_custom_call.1} parent=11 // pred_check_branch
          %489 = sbr.rel (%p487) target = $region56
        $region55: #{tpu_custom_call.1} parent=11 // pred_region
          %491 = vsyncadd [#allocation19], 0
          %s492 = sshll.u32 %s11, 4
          %s493 = int_to_ptr.hbm [resolvable:$true] %s492
          %s494 = sshll.u32 [#allocation18], 4
          %s495 = int_to_ptr.vmem [resolvable:$true] %s494
          %500 = dma.hbm_to_vmem [thread:$0]  %s493, 256, %s495, [#allocation19], 64, 64, 4
        $region56: #{tpu_custom_call.1} parent=11 // pred_fallthru
          _
        // Predicated region
        $region57: #{tpu_custom_call.1} parent=11 // pred_check
          %p501 = pneg %p310
        $region58: #{tpu_custom_call.1} parent=11 // pred_check_branch
          %503 = sbr.rel (%p501) target = $region60
        $region59: #{tpu_custom_call.1} parent=11 // pred_region
          %505 = vsyncadd [#allocation19], 0
          %s506 = sshll.u32 %s12, 4
          %s507 = int_to_ptr.hbm [resolvable:$true] %s506
          %s508 = sshll.u32 [#allocation20], 4
          %s509 = int_to_ptr.vmem [resolvable:$true] %s508
          %514 = dma.hbm_to_vmem [thread:$0]  %s507, 256, %s509, [#allocation19], 64, 64, 4
        $region60: #{tpu_custom_call.1} parent=11 // pred_fallthru
          _
        // Predicated region
        $region61: #{tpu_custom_call.1} parent=11 // pred_check
          %p515 = pneg %p331
        $region62: #{tpu_custom_call.1} parent=11 // pred_check_branch
          %517 = sbr.rel (%p515) target = $region64
        $region63: #{tpu_custom_call.1} parent=11 // pred_region
          %519 = vsyncadd [#allocation22], 0
          %s520 = sshll.u32 %s13, 4
          %s521 = int_to_ptr.hbm [resolvable:$true] %s520
          %s522 = sshll.u32 [#allocation21], 4
          %s523 = int_to_ptr.vmem [resolvable:$true] %s522
          %528 = dma.hbm_to_vmem [thread:$0]  %s521, 256, %s523, [#allocation22], 64, 64, 4
        $region64: #{tpu_custom_call.1} parent=11 // pred_fallthru
          _
        // Predicated region
        $region65: #{tpu_custom_call.1} parent=11 // pred_check
          %p529 = pneg %p352
        $region66: #{tpu_custom_call.1} parent=11 // pred_check_branch
          %531 = sbr.rel (%p529) target = $region68
        $region67: #{tpu_custom_call.1} parent=11 // pred_region
          _
        $region68: #{tpu_custom_call.1} parent=11 // pred_fallthru
          _
      $region12: #{tpu_custom_call.1} parent=5 // pred_fallthru
        _
      %p532 = scmp.lt.s32.totalorder %s32, 2
      // Predicated region
      $region69: #{tpu_custom_call.1} parent=5 // pred_check
        %p533 = pneg %p532
      $region70: #{tpu_custom_call.1} parent=5 // pred_check_branch
        %535 = sbr.rel (%p533) target = $region72
      $region71: #{tpu_custom_call.1} parent=5 // pred_region
        // Predicated region
        $region73: #{tpu_custom_call.1} parent=71 // pred_check
          %p536 = pneg %p52
        $region74: #{tpu_custom_call.1} parent=71 // pred_check_branch
          %538 = sbr.rel (%p536) target = $region76
        $region75: #{tpu_custom_call.1} parent=71 // pred_region
          %s539 = sand.u32 %s42, 1
          %s540 = scalar_lea.sflag [#allocation7], %s539
          %s541 = sand.u32 %s42, 1
          %s542 = smul.addr %s541, 8
          %s543 = scalar_lea.vmem [#allocation6], %s542
          %545 = vsyncadd %s540, 0
          %s546 = smul.addr %s32, 8
          %s547 = scalar_lea.hbm %s0, %s546
          %s549 = sshll.u32 %s547, 4
          %s550 = int_to_ptr.hbm [resolvable:$true] %s549
          %s551 = sshll.u32 %s543, 4
          %s552 = int_to_ptr.vmem [resolvable:$true] %s551
          %554 = dma.hbm_to_vmem [thread:$0]  %s550, 128, %s552, %s540
        $region76: #{tpu_custom_call.1} parent=71 // pred_fallthru
          _
      $region72: #{tpu_custom_call.1} parent=5 // pred_fallthru
        _
      %p555 = scmp.le.s32.totalorder 1, %s32
      %p556 = scmp.lt.s32.totalorder %s32, 3
      %p557 = pnand %p555, %p556
      %p558 = pneg %p557
      // Predicated region
      $region77: #{tpu_custom_call.1} parent=5 // pred_check
        _
      $region78: #{tpu_custom_call.1} parent=5 // pred_check_branch
        %560 = sbr.rel (%p557) target = $region80
      $region79: #{tpu_custom_call.1} parent=5 // pred_region
        %s561 = ssub.s32 %s32, 1
        %s562 = sand.u32 %s45, 1
        %s563 = scalar_lea.sflag [#allocation7], %s562
        %s564 = sand.u32 %s45, 1
        %s565 = smul.addr %s564, 8
        %s566 = scalar_lea.vmem [#allocation6], %s565
        // Predicated region
        $region81: #{tpu_custom_call.1} parent=79 // pred_check
          %p567 = pneg %p58
        $region82: #{tpu_custom_call.1} parent=79 // pred_check_branch
          %569 = sbr.rel (%p567) target = $region84
        $region83: #{tpu_custom_call.1} parent=79 // pred_region
          %571 = dma.done %s563, 128
        $region84: #{tpu_custom_call.1} parent=79 // pred_fallthru
          _
        // Predicated region
        $region85: #{tpu_custom_call.1} parent=79 // pred_check
          %p572 = pneg %p79
        $region86: #{tpu_custom_call.1} parent=79 // pred_check_branch
          %574 = sbr.rel (%p572) target = $region88
        $region87: #{tpu_custom_call.1} parent=79 // pred_region
          %576 = dma.done [#allocation10], 16
        $region88: #{tpu_custom_call.1} parent=79 // pred_fallthru
          _
        // Predicated region
        $region89: #{tpu_custom_call.1} parent=79 // pred_check
          %p577 = pneg %p163
        $region90: #{tpu_custom_call.1} parent=79 // pred_check_branch
          %579 = sbr.rel (%p577) target = $region92
        $region91: #{tpu_custom_call.1} parent=79 // pred_region
          %581 = dma.done [#allocation10], 256
        $region92: #{tpu_custom_call.1} parent=79 // pred_fallthru
          _
        // Predicated region
        $region93: #{tpu_custom_call.1} parent=79 // pred_check
          %p582 = pneg %p184
        $region94: #{tpu_custom_call.1} parent=79 // pred_check_branch
          %584 = sbr.rel (%p582) target = $region96
        $region95: #{tpu_custom_call.1} parent=79 // pred_region
          %586 = dma.done [#allocation13], 256
        $region96: #{tpu_custom_call.1} parent=79 // pred_fallthru
          _
        // Predicated region
        $region97: #{tpu_custom_call.1} parent=79 // pred_check
          %p587 = pneg %p205
        $region98: #{tpu_custom_call.1} parent=79 // pred_check_branch
          %589 = sbr.rel (%p587) target = $region100
        $region99: #{tpu_custom_call.1} parent=79 // pred_region
          %591 = dma.done [#allocation13], 256
        $region100: #{tpu_custom_call.1} parent=79 // pred_fallthru
          _
        // Predicated region
        $region101: #{tpu_custom_call.1} parent=79 // pred_check
          %p592 = pneg %p226
        $region102: #{tpu_custom_call.1} parent=79 // pred_check_branch
          %594 = sbr.rel (%p592) target = $region104
        $region103: #{tpu_custom_call.1} parent=79 // pred_region
          %596 = dma.done [#allocation16], 256
        $region104: #{tpu_custom_call.1} parent=79 // pred_fallthru
          _
        // Predicated region
        $region105: #{tpu_custom_call.1} parent=79 // pred_check
          %p597 = pneg %p268
        $region106: #{tpu_custom_call.1} parent=79 // pred_check_branch
          %599 = sbr.rel (%p597) target = $region108
        $region107: #{tpu_custom_call.1} parent=79 // pred_region
          %601 = dma.done [#allocation16], 256
        $region108: #{tpu_custom_call.1} parent=79 // pred_fallthru
          _
        // Predicated region
        $region109: #{tpu_custom_call.1} parent=79 // pred_check
          %p602 = pneg %p289
        $region110: #{tpu_custom_call.1} parent=79 // pred_check_branch
          %604 = sbr.rel (%p602) target = $region112
        $region111: #{tpu_custom_call.1} parent=79 // pred_region
          %606 = dma.done [#allocation19], 256
        $region112: #{tpu_custom_call.1} parent=79 // pred_fallthru
          _
        // Predicated region
        $region113: #{tpu_custom_call.1} parent=79 // pred_check
          %p607 = pneg %p310
        $region114: #{tpu_custom_call.1} parent=79 // pred_check_branch
          %609 = sbr.rel (%p607) target = $region116
        $region115: #{tpu_custom_call.1} parent=79 // pred_region
          %611 = dma.done [#allocation19], 256
        $region116: #{tpu_custom_call.1} parent=79 // pred_fallthru
          _
        // Predicated region
        $region117: #{tpu_custom_call.1} parent=79 // pred_check
          %p612 = pneg %p331
        $region118: #{tpu_custom_call.1} parent=79 // pred_check_branch
          %614 = sbr.rel (%p612) target = $region120
        $region119: #{tpu_custom_call.1} parent=79 // pred_region
          %616 = dma.done [#allocation22], 256
        $region120: #{tpu_custom_call.1} parent=79 // pred_fallthru
          _
        %s617 = sand.u32 %s45, 1
        %s618 = scalar_lea.sflag [#allocation7], %s617
        %s619 = sand.u32 %s45, 1
        %s620 = smul.addr %s619, 8
        %s621 = scalar_lea.vmem [#allocation6], %s620
        %p622 = pneg %p58
        %p623 = pneg %p55
        %p624 = pneg %p79
        %p625 = pneg %p76
        %p626 = pneg %p100
        %p627 = pneg %p97
        %p628 = pneg %p121
        %p629 = pneg %p118
        %p630 = pneg %p142
        %p631 = pneg %p139
        %p632 = pneg %p163
        %p633 = pneg %p160
        %p634 = pneg %p184
        %p635 = pneg %p181
        %p636 = pneg %p205
        %p637 = pneg %p202
        %p638 = pneg %p226
        %p639 = pneg %p223
        %p640 = pneg %p247
        %p641 = pneg %p244
        %p642 = pneg %p268
        %p643 = pneg %p265
        %p644 = pneg %p289
        %p645 = pneg %p286
        %p646 = pneg %p310
        %p647 = pneg %p307
        %p648 = pneg %p331
        %p649 = pneg %p328
        %p650 = pneg %p352
        %p651 = pneg %p349
        %p652 = pneg %p378
        %p653 = pneg %p375
        %s654 = sand.u32 %s365, 1
        %s655 = scalar_lea.sflag [#allocation8], %s654
        %s656 = sand.u32 %s365, 1
        %s657 = smul.addr %s656, 8
        %s658 = scalar_lea.vmem [#allocation23], %s657
        %v660 = vld [vmem:[%s566] sm:$0xff]
        %vm661 = vcmask 261120
        %v662 = vsel %vm661, %v660, 0.0
        %663 = vadd.xlane.f32.xlu0 %v662
        %v664 = vpop.xlane.xlu0 %663
        %v665 = vrcp.pop 32.0
        %v666 = vmul.f32 32.0, %v665
        %v667 = vsub.f32 1.0, %v666
        %v668 = vmul.f32 %v665, %v667
        %v669 = vadd.f32 %v665, %v668
        %vm670 = vweird.f32 %v665
        %v671 = vsel %vm670, %v665, %v669
        %v672 = vmul.f32 %v664, %v671
        %v673 = vsub.f32 %v660, %v672
        %v674 = vmul.f32 %v673, %v673
        %v675 = vsel %vm661, %v674, 0.0
        %676 = vadd.xlane.f32.xlu0 %v675
        %v677 = vpop.xlane.xlu0 %676
        %v678 = vmul.f32 %v677, %v671
        %v679 = vadd.f32 %v678, 1e-05
        %v680 = vrsqrt.pop %v679
        %v681 = vmul.f32 %v680, %v679
        %v682 = vmul.f32 %v681, %v680
        %v683 = vmul.f32 0.5, %v682
        %v684 = vsub.f32 1.5, %v683
        %v685 = vmul.f32 %v680, %v684
        %vm686 = vweird.f32 %v679
        %vm687 = vweird.f32 %v680
        %vm688 = vmor %vm686, %vm687
        %v689 = vsel %vm688, %v680, %v685
        %v690 = vmul.f32 %v673, %v689
        %v691 = vld [vmem:[#allocation9] sm:$0x1]
        %v693 = vperm.slane %v691, 0
        %v695 = vmul.f32 %v690, %v693
        %v696 = vld [vmem:[%s2] sm:$0x1]
        %v698 = vperm.slane %v696, 0
        %v700 = vadd.f32 %v695, %v698
        %v701 = vpack.c.bf16 %v700, %v700
        %v702 = vld [vmem:[#allocation11] sm:$0xf]
        %v703 = vld [vmem:[#allocation11 + $0x4] sm:$0xf]
        %v704 = vld [vmem:[#allocation11 + $0x8] sm:$0xf]
        %v705 = vld [vmem:[#allocation11 + $0xc] sm:$0xf]
        %v710 = vunpack.c.l.b16 %v702
        %v711 = vunpack.c.l.b16 %v703
        %v712 = vunpack.c.l.b16 %v704
        %v713 = vunpack.c.l.b16 %v705
        %v714 = vpack.c.b16 %v711, %v710
        %v715 = vpack.c.b16 %v713, %v712
        %v719 = vsel %vm661, %v701, 0
        %721 = vmatpush.bf16.msra.mxu0 0
        %722 = vmatpush.bf16.msra.mxu0 0
        %723 = vmatpush.bf16.msra.mxu0 0
        %724 = vmatpush.bf16.msra.mxu0 0
        %725 = vmatpush.bf16.msra.mxu0 0
        %726 = vmatpush.bf16.msra.mxu0 0
        %727 = vmatpush.bf16.msra.mxu0 %v715
        %728 = vmatpush.bf16.msra.mxu0 %v714
        %729 = vmatmul.bf16.gmra.mxu0 %v719
        %v730 = vpop.f32.mrf.mxu0
        %v731 = vadd.f32 0.0, %v730
        %v732 = vpop.f32.mrf.mxu0
        %733 = vdwg.mxu0
        %v734 = vpack.c.bf16 %v731, %v731
        %vm735 = vcmask 257024
        %736 = vst.msk [vmem:[#allocation2] sm:$0xf] %vm735, %v734
        %v737 = vld [vmem:[#allocation12] sm:$0xf]
        %v738 = vld [vmem:[#allocation12 + $0x4] sm:$0xf]
        %v739 = vld [vmem:[#allocation12 + $0x8] sm:$0xf]
        %v740 = vld [vmem:[#allocation12 + $0xc] sm:$0xf]
        %v745 = vunpack.c.l.b16 %v737
        %v746 = vunpack.c.l.b16 %v738
        %v747 = vunpack.c.l.b16 %v739
        %v748 = vunpack.c.l.b16 %v740
        %v749 = vpack.c.b16 %v746, %v745
        %v750 = vpack.c.b16 %v748, %v747
        %753 = vmatpush.bf16.msra.mxu0 0
        %754 = vmatpush.bf16.msra.mxu0 0
        %755 = vmatpush.bf16.msra.mxu0 0
        %756 = vmatpush.bf16.msra.mxu0 0
        %757 = vmatpush.bf16.msra.mxu0 0
        %758 = vmatpush.bf16.msra.mxu0 0
        %759 = vmatpush.bf16.msra.mxu0 %v750
        %760 = vmatpush.bf16.msra.mxu0 %v749
        %761 = vmatmul.bf16.gmra.mxu0 %v719
        %v762 = vpop.f32.mrf.mxu0
        %v763 = vadd.f32 0.0, %v762
        %v764 = vpop.f32.mrf.mxu0
        %765 = vdwg.mxu0
        %v766 = vpack.c.bf16 %v763, %v763
        %767 = vst.msk [vmem:[#allocation3] sm:$0xf] %vm735, %v766
        %v768 = vld [vmem:[#allocation14] sm:$0xf]
        %v769 = vld [vmem:[#allocation14 + $0x4] sm:$0xf]
        %v770 = vld [vmem:[#allocation14 + $0x8] sm:$0xf]
        %v771 = vld [vmem:[#allocation14 + $0xc] sm:$0xf]
        %v776 = vunpack.c.l.b16 %v768
        %v777 = vunpack.c.l.b16 %v769
        %v778 = vunpack.c.l.b16 %v770
        %v779 = vunpack.c.l.b16 %v771
        %v780 = vpack.c.b16 %v777, %v776
        %v781 = vpack.c.b16 %v779, %v778
        %784 = vmatpush.bf16.msra.mxu0 0
        %785 = vmatpush.bf16.msra.mxu0 0
        %786 = vmatpush.bf16.msra.mxu0 0
        %787 = vmatpush.bf16.msra.mxu0 0
        %788 = vmatpush.bf16.msra.mxu0 0
        %789 = vmatpush.bf16.msra.mxu0 0
        %790 = vmatpush.bf16.msra.mxu0 %v781
        %791 = vmatpush.bf16.msra.mxu0 %v780
        %792 = vmatmul.bf16.gmra.mxu0 %v719
        %v793 = vpop.f32.mrf.mxu0
        %v794 = vadd.f32 0.0, %v793
        %v795 = vpop.f32.mrf.mxu0
        %796 = vdwg.mxu0
        %v797 = vpack.c.bf16 %v794, %v794
        %798 = vst.msk [vmem:[#allocation4] sm:$0xf] %vm735, %v797
        %v799 = vld [vmem:[#allocation2] sm:$0xf]
        %v800 = vld [vmem:[#allocation3] sm:$0xf]
        %v801 = vld [vmem:[#allocation4] sm:$0xf]
        %vm802 = vcmask 64512
        %v804 = vsel %vm802, %v799, 0
        %v807 = vsel %vm802, %v800, 0
        %809 = vmatpush.bf16.xpose.msra.mxu0 0
        %810 = vmatpush.bf16.xpose.msra.mxu0 0
        %811 = vmatpush.bf16.xpose.msra.mxu0 0
        %812 = vmatpush.bf16.xpose.msra.mxu0 0
        %813 = vmatpush.bf16.xpose.msra.mxu0 0
        %814 = vmatpush.bf16.xpose.msra.mxu0 0
        %815 = vmatpush.bf16.xpose.msra.mxu0 0
        %816 = vmatpush.bf16.xpose.msra.mxu0 %v807
        %817 = vmatmul.bf16.gmra.mxu0 %v804
        %v818 = vpop.f32.mrf.mxu0
        %v819 = vadd.f32 0.0, %v818
        %v820 = vpop.f32.mrf.mxu0
        %821 = vdwg.mxu0
        %v822 = vsel %vm802, %v819, -inf
        %823 = vmax.xlane.f32.xlu0 %v822
        %v824 = vpop.xlane.xlu0 %823
        %v825 = vsub.f32 %v819, %v824
        %v826 = vmul.f32 %v825, 1.442695
        %v827 = vpow.pop %v826
        %v828 = vsel %vm802, %v827, 0.0
        %829 = vadd.xlane.f32.xlu0 %v828
        %v830 = vpop.xlane.xlu0 %829
        %v831 = vrcp.pop %v830
        %v832 = vmul.f32 %v827, %v831
        %v833 = vpack.c.bf16 %v832, %v832
        %v835 = vsel %vm802, %v833, 0
        %vm837 = vcmask 1043456
        %v839 = vsel %vm837, %v801, 0
        %841 = vmatpush.bf16.msra.mxu0 0
        %842 = vmatpush.bf16.msra.mxu0 0
        %843 = vmatpush.bf16.msra.mxu0 0
        %844 = vmatpush.bf16.msra.mxu0 0
        %845 = vmatpush.bf16.msra.mxu0 0
        %846 = vmatpush.bf16.msra.mxu0 0
        %847 = vmatpush.bf16.msra.mxu0 0
        %848 = vmatpush.bf16.msra.mxu0 %v839
        %849 = vmatmul.bf16.gmra.mxu0 %v835
        %v850 = vpop.f32.mrf.mxu0
        %v851 = vadd.f32 0.0, %v850
        %v852 = vpop.f32.mrf.mxu0
        %853 = vdwg.mxu0
        %v854 = vpack.c.bf16 %v851, %v851
        %vm855 = vcmask 60416
        %856 = vst.msk [vmem:[#allocation5] sm:$0xf] %vm855, %v854
        %v857 = vld [vmem:[#allocation2] sm:$0xf]
        %v858 = vld [vmem:[#allocation3] sm:$0xf]
        %v859 = vld [vmem:[#allocation4] sm:$0xf]
        %v861 = vunpack.c.l.b16 %v857
        %v862 = vpack.c.b16 %v861, %v861
        %863 = vrot.lane.b32.xlu0 %v862, 120
        %v864 = vpop.permute.xlu0 %863
        %v866 = vunpack.c.l.b16 %v858
        %v867 = vpack.c.b16 %v866, %v866
        %868 = vrot.lane.b32.xlu0 %v867, 120
        %v869 = vpop.permute.xlu0 %868
        %v871 = vsel %vm802, %v864, 0
        %v874 = vsel %vm802, %v869, 0
        %876 = vmatpush.bf16.xpose.msra.mxu0 0
        %877 = vmatpush.bf16.xpose.msra.mxu0 0
        %878 = vmatpush.bf16.xpose.msra.mxu0 0
        %879 = vmatpush.bf16.xpose.msra.mxu0 0
        %880 = vmatpush.bf16.xpose.msra.mxu0 0
        %881 = vmatpush.bf16.xpose.msra.mxu0 0
        %882 = vmatpush.bf16.xpose.msra.mxu0 0
        %883 = vmatpush.bf16.xpose.msra.mxu0 %v874
        %884 = vmatmul.bf16.gmra.mxu0 %v871
        %v885 = vpop.f32.mrf.mxu0
        %v886 = vadd.f32 0.0, %v885
        %v887 = vpop.f32.mrf.mxu0
        %888 = vdwg.mxu0
        %v889 = vsel %vm802, %v886, -inf
        %890 = vmax.xlane.f32.xlu0 %v889
        %v891 = vpop.xlane.xlu0 %890
        %v892 = vsub.f32 %v886, %v891
        %v893 = vmul.f32 %v892, 1.442695
        %v894 = vpow.pop %v893
        %v895 = vsel %vm802, %v894, 0.0
        %896 = vadd.xlane.f32.xlu0 %v895
        %v897 = vpop.xlane.xlu0 %896
        %v898 = vrcp.pop %v897
        %v899 = vmul.f32 %v894, %v898
        %v900 = vpack.c.bf16 %v899, %v899
        %v902 = vunpack.c.l.b16 %v859
        %v903 = vpack.c.b16 %v902, %v902
        %904 = vrot.lane.b32.xlu0 %v903, 120
        %v905 = vpop.permute.xlu0 %904
        %v907 = vsel %vm802, %v900, 0
        %v910 = vsel %vm837, %v905, 0
        %912 = vmatpush.bf16.msra.mxu0 0
        %913 = vmatpush.bf16.msra.mxu0 0
        %914 = vmatpush.bf16.msra.mxu0 0
        %915 = vmatpush.bf16.msra.mxu0 0
        %916 = vmatpush.bf16.msra.mxu0 0
        %917 = vmatpush.bf16.msra.mxu0 0
        %918 = vmatpush.bf16.msra.mxu0 0
        %919 = vmatpush.bf16.msra.mxu0 %v910
        %920 = vmatmul.bf16.gmra.mxu0 %v907
        %v921 = vpop.f32.mrf.mxu0
        %v922 = vadd.f32 0.0, %v921
        %v923 = vpop.f32.mrf.mxu0
        %924 = vdwg.mxu0
        %v925 = vpack.c.bf16 %v922, %v922
        %927 = vrot.lane.b32.xlu0 %v925, 8
        %v928 = vpop.permute.xlu0 %927
        %vm930 = vcmask 126016
        %931 = vst.msk [vmem:[#allocation5] sm:$0xf] %vm930, %v928
        %v932 = vld [vmem:[#allocation2] sm:$0xf]
        %v933 = vld [vmem:[#allocation3] sm:$0xf]
        %v934 = vld [vmem:[#allocation4] sm:$0xf]
        %v936 = vunpack.c.l.b16 %v932
        %v937 = vpack.c.b16 %v936, %v936
        %938 = vrot.lane.b32.xlu0 %v937, 112
        %v939 = vpop.permute.xlu0 %938
        %v941 = vunpack.c.l.b16 %v933
        %v942 = vpack.c.b16 %v941, %v941
        %943 = vrot.lane.b32.xlu0 %v942, 112
        %v944 = vpop.permute.xlu0 %943
        %v946 = vsel %vm802, %v939, 0
        %v949 = vsel %vm802, %v944, 0
        %951 = vmatpush.bf16.xpose.msra.mxu0 0
        %952 = vmatpush.bf16.xpose.msra.mxu0 0
        %953 = vmatpush.bf16.xpose.msra.mxu0 0
        %954 = vmatpush.bf16.xpose.msra.mxu0 0
        %955 = vmatpush.bf16.xpose.msra.mxu0 0
        %956 = vmatpush.bf16.xpose.msra.mxu0 0
        %957 = vmatpush.bf16.xpose.msra.mxu0 0
        %958 = vmatpush.bf16.xpose.msra.mxu0 %v949
        %959 = vmatmul.bf16.gmra.mxu0 %v946
        %v960 = vpop.f32.mrf.mxu0
        %v961 = vadd.f32 0.0, %v960
        %v962 = vpop.f32.mrf.mxu0
        %963 = vdwg.mxu0
        %v964 = vsel %vm802, %v961, -inf
        %965 = vmax.xlane.f32.xlu0 %v964
        %v966 = vpop.xlane.xlu0 %965
        %v967 = vsub.f32 %v961, %v966
        %v968 = vmul.f32 %v967, 1.442695
        %v969 = vpow.pop %v968
        %v970 = vsel %vm802, %v969, 0.0
        %971 = vadd.xlane.f32.xlu0 %v970
        %v972 = vpop.xlane.xlu0 %971
        %v973 = vrcp.pop %v972
        %v974 = vmul.f32 %v969, %v973
        %v975 = vpack.c.bf16 %v974, %v974
        %v977 = vunpack.c.l.b16 %v934
        %v978 = vpack.c.b16 %v977, %v977
        %979 = vrot.lane.b32.xlu0 %v978, 112
        %v980 = vpop.permute.xlu0 %979
        %v982 = vsel %vm802, %v975, 0
        %v985 = vsel %vm837, %v980, 0
        %987 = vmatpush.bf16.msra.mxu0 0
        %988 = vmatpush.bf16.msra.mxu0 0
        %989 = vmatpush.bf16.msra.mxu0 0
        %990 = vmatpush.bf16.msra.mxu0 0
        %991 = vmatpush.bf16.msra.mxu0 0
        %992 = vmatpush.bf16.msra.mxu0 0
        %993 = vmatpush.bf16.msra.mxu0 0
        %994 = vmatpush.bf16.msra.mxu0 %v985
        %995 = vmatmul.bf16.gmra.mxu0 %v982
        %v996 = vpop.f32.mrf.mxu0
        %v997 = vadd.f32 0.0, %v996
        %v998 = vpop.f32.mrf.mxu0
        %999 = vdwg.mxu0
        %v1000 = vpack.c.bf16 %v997, %v997
        %1002 = vrot.lane.b32.xlu0 %v1000, 16
        %v1003 = vpop.permute.xlu0 %1002
        %vm1005 = vcmask 191616
        %1006 = vst.msk [vmem:[#allocation5] sm:$0xf] %vm1005, %v1003
        %v1007 = vld [vmem:[#allocation2] sm:$0xf]
        %v1008 = vld [vmem:[#allocation3] sm:$0xf]
        %v1009 = vld [vmem:[#allocation4] sm:$0xf]
        %v1011 = vunpack.c.l.b16 %v1007
        %v1012 = vpack.c.b16 %v1011, %v1011
        %1013 = vrot.lane.b32.xlu0 %v1012, 104
        %v1014 = vpop.permute.xlu0 %1013
        %v1016 = vunpack.c.l.b16 %v1008
        %v1017 = vpack.c.b16 %v1016, %v1016
        %1018 = vrot.lane.b32.xlu0 %v1017, 104
        %v1019 = vpop.permute.xlu0 %1018
        %v1021 = vsel %vm802, %v1014, 0
        %v1024 = vsel %vm802, %v1019, 0
        %1026 = vmatpush.bf16.xpose.msra.mxu0 0
        %1027 = vmatpush.bf16.xpose.msra.mxu0 0
        %1028 = vmatpush.bf16.xpose.msra.mxu0 0
        %1029 = vmatpush.bf16.xpose.msra.mxu0 0
        %1030 = vmatpush.bf16.xpose.msra.mxu0 0
        %1031 = vmatpush.bf16.xpose.msra.mxu0 0
        %1032 = vmatpush.bf16.xpose.msra.mxu0 0
        %1033 = vmatpush.bf16.xpose.msra.mxu0 %v1024
        %1034 = vmatmul.bf16.gmra.mxu0 %v1021
        %v1035 = vpop.f32.mrf.mxu0
        %v1036 = vadd.f32 0.0, %v1035
        %v1037 = vpop.f32.mrf.mxu0
        %1038 = vdwg.mxu0
        %v1039 = vsel %vm802, %v1036, -inf
        %1040 = vmax.xlane.f32.xlu0 %v1039
        %v1041 = vpop.xlane.xlu0 %1040
        %v1042 = vsub.f32 %v1036, %v1041
        %v1043 = vmul.f32 %v1042, 1.442695
        %v1044 = vpow.pop %v1043
        %v1045 = vsel %vm802, %v1044, 0.0
        %1046 = vadd.xlane.f32.xlu0 %v1045
        %v1047 = vpop.xlane.xlu0 %1046
        %v1048 = vrcp.pop %v1047
        %v1049 = vmul.f32 %v1044, %v1048
        %v1050 = vpack.c.bf16 %v1049, %v1049
        %v1052 = vunpack.c.l.b16 %v1009
        %v1053 = vpack.c.b16 %v1052, %v1052
        %1054 = vrot.lane.b32.xlu0 %v1053, 104
        %v1055 = vpop.permute.xlu0 %1054
        %v1057 = vsel %vm802, %v1050, 0
        %v1060 = vsel %vm837, %v1055, 0
        %1062 = vmatpush.bf16.msra.mxu0 0
        %1063 = vmatpush.bf16.msra.mxu0 0
        %1064 = vmatpush.bf16.msra.mxu0 0
        %1065 = vmatpush.bf16.msra.mxu0 0
        %1066 = vmatpush.bf16.msra.mxu0 0
        %1067 = vmatpush.bf16.msra.mxu0 0
        %1068 = vmatpush.bf16.msra.mxu0 0
        %1069 = vmatpush.bf16.msra.mxu0 %v1060
        %1070 = vmatmul.bf16.gmra.mxu0 %v1057
        %v1071 = vpop.f32.mrf.mxu0
        %v1072 = vadd.f32 0.0, %v1071
        %v1073 = vpop.f32.mrf.mxu0
        %1074 = vdwg.mxu0
        %v1075 = vpack.c.bf16 %v1072, %v1072
        %1077 = vrot.lane.b32.xlu0 %v1075, 24
        %v1078 = vpop.permute.xlu0 %1077
        %vm1080 = vcmask 257216
        %1081 = vst.msk [vmem:[#allocation5] sm:$0xf] %vm1080, %v1078
        %v1082 = vld [vmem:[#allocation5] sm:$0xf]
        %v1083 = vld [vmem:[#allocation15] sm:$0xf]
        %v1084 = vld [vmem:[#allocation15 + $0x4] sm:$0xf]
        %v1085 = vld [vmem:[#allocation15 + $0x8] sm:$0xf]
        %v1086 = vld [vmem:[#allocation15 + $0xc] sm:$0xf]
        %v1087 = vld [vmem:[%s9] sm:$0x1]
        %v1089 = vperm.slane %v1087, 0
        %v1095 = vunpack.c.l.b16 %v1083
        %v1096 = vunpack.c.l.b16 %v1084
        %v1097 = vunpack.c.l.b16 %v1085
        %v1098 = vunpack.c.l.b16 %v1086
        %v1099 = vpack.c.b16 %v1096, %v1095
        %v1100 = vpack.c.b16 %v1098, %v1097
        %v1104 = vsel %vm661, %v1082, 0
        %1106 = vmatpush.bf16.msra.mxu0 0
        %1107 = vmatpush.bf16.msra.mxu0 0
        %1108 = vmatpush.bf16.msra.mxu0 0
        %1109 = vmatpush.bf16.msra.mxu0 0
        %1110 = vmatpush.bf16.msra.mxu0 0
        %1111 = vmatpush.bf16.msra.mxu0 0
        %1112 = vmatpush.bf16.msra.mxu0 %v1100
        %1113 = vmatpush.bf16.msra.mxu0 %v1099
        %1114 = vmatmul.bf16.gmra.mxu0 %v1104
        %v1115 = vpop.f32.mrf.mxu0
        %v1116 = vadd.f32 %v1089, %v1115
        %v1117 = vpop.f32.mrf.mxu0
        %1118 = vdwg.mxu0
        %v1119 = vld [vmem:[%s3] sm:$0x1]
        %v1121 = vperm.slane %v1119, 0
        %v1123 = vmul.f32 %v690, %v1121
        %v1124 = vld [vmem:[%s4] sm:$0x1]
        %v1126 = vperm.slane %v1124, 0
        %v1128 = vadd.f32 %v1123, %v1126
        %v1129 = vpack.c.bf16 %v1128, %v1128
        %v1130 = vld [vmem:[#allocation17] sm:$0xf]
        %v1131 = vld [vmem:[#allocation17 + $0x4] sm:$0xf]
        %v1132 = vld [vmem:[#allocation17 + $0x8] sm:$0xf]
        %v1133 = vld [vmem:[#allocation17 + $0xc] sm:$0xf]
        %v1138 = vunpack.c.l.b16 %v1130
        %v1139 = vunpack.c.l.b16 %v1131
        %v1140 = vunpack.c.l.b16 %v1132
        %v1141 = vunpack.c.l.b16 %v1133
        %v1142 = vpack.c.b16 %v1139, %v1138
        %v1143 = vpack.c.b16 %v1141, %v1140
        %v1147 = vsel %vm661, %v1129, 0
        %1149 = vmatpush.bf16.msra.mxu0 0
        %1150 = vmatpush.bf16.msra.mxu0 0
        %1151 = vmatpush.bf16.msra.mxu0 0
        %1152 = vmatpush.bf16.msra.mxu0 0
        %1153 = vmatpush.bf16.msra.mxu0 0
        %1154 = vmatpush.bf16.msra.mxu0 0
        %1155 = vmatpush.bf16.msra.mxu0 %v1143
        %1156 = vmatpush.bf16.msra.mxu0 %v1142
        %1157 = vmatmul.bf16.gmra.mxu0 %v1147
        %v1158 = vpop.f32.mrf.mxu0
        %v1159 = vadd.f32 0.0, %v1158
        %v1160 = vpop.f32.mrf.mxu0
        %1161 = vdwg.mxu0
        %v1162 = vpack.c.bf16 %v1159, %v1159
        %1163 = vst.msk [vmem:[#allocation2] sm:$0xf] %vm735, %v1162
        %v1164 = vld [vmem:[#allocation18] sm:$0xf]
        %v1165 = vld [vmem:[#allocation18 + $0x4] sm:$0xf]
        %v1166 = vld [vmem:[#allocation18 + $0x8] sm:$0xf]
        %v1167 = vld [vmem:[#allocation18 + $0xc] sm:$0xf]
        %v1172 = vunpack.c.l.b16 %v1164
        %v1173 = vunpack.c.l.b16 %v1165
        %v1174 = vunpack.c.l.b16 %v1166
        %v1175 = vunpack.c.l.b16 %v1167
        %v1176 = vpack.c.b16 %v1173, %v1172
        %v1177 = vpack.c.b16 %v1175, %v1174
        %1180 = vmatpush.bf16.msra.mxu0 0
        %1181 = vmatpush.bf16.msra.mxu0 0
        %1182 = vmatpush.bf16.msra.mxu0 0
        %1183 = vmatpush.bf16.msra.mxu0 0
        %1184 = vmatpush.bf16.msra.mxu0 0
        %1185 = vmatpush.bf16.msra.mxu0 0
        %1186 = vmatpush.bf16.msra.mxu0 %v1177
        %1187 = vmatpush.bf16.msra.mxu0 %v1176
        %1188 = vmatmul.bf16.gmra.mxu0 %v1147
        %v1189 = vpop.f32.mrf.mxu0
        %v1190 = vadd.f32 0.0, %v1189
        %v1191 = vpop.f32.mrf.mxu0
        %1192 = vdwg.mxu0
        %v1193 = vpack.c.bf16 %v1190, %v1190
        %1194 = vst.msk [vmem:[#allocation3] sm:$0xf] %vm735, %v1193
        %v1195 = vld [vmem:[#allocation20] sm:$0xf]
        %v1196 = vld [vmem:[#allocation20 + $0x4] sm:$0xf]
        %v1197 = vld [vmem:[#allocation20 + $0x8] sm:$0xf]
        %v1198 = vld [vmem:[#allocation20 + $0xc] sm:$0xf]
        %v1203 = vunpack.c.l.b16 %v1195
        %v1204 = vunpack.c.l.b16 %v1196
        %v1205 = vunpack.c.l.b16 %v1197
        %v1206 = vunpack.c.l.b16 %v1198
        %v1207 = vpack.c.b16 %v1204, %v1203
        %v1208 = vpack.c.b16 %v1206, %v1205
        %1211 = vmatpush.bf16.msra.mxu0 0
        %1212 = vmatpush.bf16.msra.mxu0 0
        %1213 = vmatpush.bf16.msra.mxu0 0
        %1214 = vmatpush.bf16.msra.mxu0 0
        %1215 = vmatpush.bf16.msra.mxu0 0
        %1216 = vmatpush.bf16.msra.mxu0 0
        %1217 = vmatpush.bf16.msra.mxu0 %v1208
        %1218 = vmatpush.bf16.msra.mxu0 %v1207
        %1219 = vmatmul.bf16.gmra.mxu0 %v1147
        %v1220 = vpop.f32.mrf.mxu0
        %v1221 = vadd.f32 0.0, %v1220
        %v1222 = vpop.f32.mrf.mxu0
        %1223 = vdwg.mxu0
        %v1224 = vpack.c.bf16 %v1221, %v1221
        %1225 = vst.msk [vmem:[#allocation4] sm:$0xf] %vm735, %v1224
        %v1226 = vld [vmem:[#allocation2] sm:$0xf]
        %v1227 = vld [vmem:[#allocation3] sm:$0xf]
        %v1228 = vld [vmem:[#allocation4] sm:$0xf]
        %v1230 = vsel %vm802, %v1226, 0
        %v1233 = vsel %vm802, %v1227, 0
        %1235 = vmatpush.bf16.xpose.msra.mxu0 0
        %1236 = vmatpush.bf16.xpose.msra.mxu0 0
        %1237 = vmatpush.bf16.xpose.msra.mxu0 0
        %1238 = vmatpush.bf16.xpose.msra.mxu0 0
        %1239 = vmatpush.bf16.xpose.msra.mxu0 0
        %1240 = vmatpush.bf16.xpose.msra.mxu0 0
        %1241 = vmatpush.bf16.xpose.msra.mxu0 0
        %1242 = vmatpush.bf16.xpose.msra.mxu0 %v1233
        %1243 = vmatmul.bf16.gmra.mxu0 %v1230
        %v1244 = vpop.f32.mrf.mxu0
        %v1245 = vadd.f32 0.0, %v1244
        %v1246 = vpop.f32.mrf.mxu0
        %1247 = vdwg.mxu0
        %v1248 = vsel %vm802, %v1245, -inf
        %1249 = vmax.xlane.f32.xlu0 %v1248
        %v1250 = vpop.xlane.xlu0 %1249
        %v1251 = vsub.f32 %v1245, %v1250
        %v1252 = vmul.f32 %v1251, 1.442695
        %v1253 = vpow.pop %v1252
        %v1254 = vsel %vm802, %v1253, 0.0
        %1255 = vadd.xlane.f32.xlu0 %v1254
        %v1256 = vpop.xlane.xlu0 %1255
        %v1257 = vrcp.pop %v1256
        %v1258 = vmul.f32 %v1253, %v1257
        %v1259 = vpack.c.bf16 %v1258, %v1258
        %v1261 = vsel %vm802, %v1259, 0
        %v1264 = vsel %vm837, %v1228, 0
        %1266 = vmatpush.bf16.msra.mxu0 0
        %1267 = vmatpush.bf16.msra.mxu0 0
        %1268 = vmatpush.bf16.msra.mxu0 0
        %1269 = vmatpush.bf16.msra.mxu0 0
        %1270 = vmatpush.bf16.msra.mxu0 0
        %1271 = vmatpush.bf16.msra.mxu0 0
        %1272 = vmatpush.bf16.msra.mxu0 0
        %1273 = vmatpush.bf16.msra.mxu0 %v1264
        %1274 = vmatmul.bf16.gmra.mxu0 %v1261
        %v1275 = vpop.f32.mrf.mxu0
        %v1276 = vadd.f32 0.0, %v1275
        %v1277 = vpop.f32.mrf.mxu0
        %1278 = vdwg.mxu0
        %v1279 = vpack.c.bf16 %v1276, %v1276
        %1280 = vst.msk [vmem:[#allocation5] sm:$0xf] %vm855, %v1279
        %v1281 = vld [vmem:[#allocation2] sm:$0xf]
        %v1282 = vld [vmem:[#allocation3] sm:$0xf]
        %v1283 = vld [vmem:[#allocation4] sm:$0xf]
        %v1285 = vunpack.c.l.b16 %v1281
        %v1286 = vpack.c.b16 %v1285, %v1285
        %1287 = vrot.lane.b32.xlu0 %v1286, 120
        %v1288 = vpop.permute.xlu0 %1287
        %v1290 = vunpack.c.l.b16 %v1282
        %v1291 = vpack.c.b16 %v1290, %v1290
        %1292 = vrot.lane.b32.xlu0 %v1291, 120
        %v1293 = vpop.permute.xlu0 %1292
        %v1295 = vsel %vm802, %v1288, 0
        %v1298 = vsel %vm802, %v1293, 0
        %1300 = vmatpush.bf16.xpose.msra.mxu0 0
        %1301 = vmatpush.bf16.xpose.msra.mxu0 0
        %1302 = vmatpush.bf16.xpose.msra.mxu0 0
        %1303 = vmatpush.bf16.xpose.msra.mxu0 0
        %1304 = vmatpush.bf16.xpose.msra.mxu0 0
        %1305 = vmatpush.bf16.xpose.msra.mxu0 0
        %1306 = vmatpush.bf16.xpose.msra.mxu0 0
        %1307 = vmatpush.bf16.xpose.msra.mxu0 %v1298
        %1308 = vmatmul.bf16.gmra.mxu0 %v1295
        %v1309 = vpop.f32.mrf.mxu0
        %v1310 = vadd.f32 0.0, %v1309
        %v1311 = vpop.f32.mrf.mxu0
        %1312 = vdwg.mxu0
        %v1313 = vsel %vm802, %v1310, -inf
        %1314 = vmax.xlane.f32.xlu0 %v1313
        %v1315 = vpop.xlane.xlu0 %1314
        %v1316 = vsub.f32 %v1310, %v1315
        %v1317 = vmul.f32 %v1316, 1.442695
        %v1318 = vpow.pop %v1317
        %v1319 = vsel %vm802, %v1318, 0.0
        %1320 = vadd.xlane.f32.xlu0 %v1319
        %v1321 = vpop.xlane.xlu0 %1320
        %v1322 = vrcp.pop %v1321
        %v1323 = vmul.f32 %v1318, %v1322
        %v1324 = vpack.c.bf16 %v1323, %v1323
        %v1326 = vunpack.c.l.b16 %v1283
        %v1327 = vpack.c.b16 %v1326, %v1326
        %1328 = vrot.lane.b32.xlu0 %v1327, 120
        %v1329 = vpop.permute.xlu0 %1328
        %v1331 = vsel %vm802, %v1324, 0
        %v1334 = vsel %vm837, %v1329, 0
        %1336 = vmatpush.bf16.msra.mxu0 0
        %1337 = vmatpush.bf16.msra.mxu0 0
        %1338 = vmatpush.bf16.msra.mxu0 0
        %1339 = vmatpush.bf16.msra.mxu0 0
        %1340 = vmatpush.bf16.msra.mxu0 0
        %1341 = vmatpush.bf16.msra.mxu0 0
        %1342 = vmatpush.bf16.msra.mxu0 0
        %1343 = vmatpush.bf16.msra.mxu0 %v1334
        %1344 = vmatmul.bf16.gmra.mxu0 %v1331
        %v1345 = vpop.f32.mrf.mxu0
        %v1346 = vadd.f32 0.0, %v1345
        %v1347 = vpop.f32.mrf.mxu0
        %1348 = vdwg.mxu0
        %v1349 = vpack.c.bf16 %v1346, %v1346
        %1351 = vrot.lane.b32.xlu0 %v1349, 8
        %v1352 = vpop.permute.xlu0 %1351
        %1354 = vst.msk [vmem:[#allocation5] sm:$0xf] %vm930, %v1352
        %v1355 = vld [vmem:[#allocation2] sm:$0xf]
        %v1356 = vld [vmem:[#allocation3] sm:$0xf]
        %v1357 = vld [vmem:[#allocation4] sm:$0xf]
        %v1359 = vunpack.c.l.b16 %v1355
        %v1360 = vpack.c.b16 %v1359, %v1359
        %1361 = vrot.lane.b32.xlu0 %v1360, 112
        %v1362 = vpop.permute.xlu0 %1361
        %v1364 = vunpack.c.l.b16 %v1356
        %v1365 = vpack.c.b16 %v1364, %v1364
        %1366 = vrot.lane.b32.xlu0 %v1365, 112
        %v1367 = vpop.permute.xlu0 %1366
        %v1369 = vsel %vm802, %v1362, 0
        %v1372 = vsel %vm802, %v1367, 0
        %1374 = vmatpush.bf16.xpose.msra.mxu0 0
        %1375 = vmatpush.bf16.xpose.msra.mxu0 0
        %1376 = vmatpush.bf16.xpose.msra.mxu0 0
        %1377 = vmatpush.bf16.xpose.msra.mxu0 0
        %1378 = vmatpush.bf16.xpose.msra.mxu0 0
        %1379 = vmatpush.bf16.xpose.msra.mxu0 0
        %1380 = vmatpush.bf16.xpose.msra.mxu0 0
        %1381 = vmatpush.bf16.xpose.msra.mxu0 %v1372
        %1382 = vmatmul.bf16.gmra.mxu0 %v1369
        %v1383 = vpop.f32.mrf.mxu0
        %v1384 = vadd.f32 0.0, %v1383
        %v1385 = vpop.f32.mrf.mxu0
        %1386 = vdwg.mxu0
        %v1387 = vsel %vm802, %v1384, -inf
        %1388 = vmax.xlane.f32.xlu0 %v1387
        %v1389 = vpop.xlane.xlu0 %1388
        %v1390 = vsub.f32 %v1384, %v1389
        %v1391 = vmul.f32 %v1390, 1.442695
        %v1392 = vpow.pop %v1391
        %v1393 = vsel %vm802, %v1392, 0.0
        %1394 = vadd.xlane.f32.xlu0 %v1393
        %v1395 = vpop.xlane.xlu0 %1394
        %v1396 = vrcp.pop %v1395
        %v1397 = vmul.f32 %v1392, %v1396
        %v1398 = vpack.c.bf16 %v1397, %v1397
        %v1400 = vunpack.c.l.b16 %v1357
        %v1401 = vpack.c.b16 %v1400, %v1400
        %1402 = vrot.lane.b32.xlu0 %v1401, 112
        %v1403 = vpop.permute.xlu0 %1402
        %v1405 = vsel %vm802, %v1398, 0
        %v1408 = vsel %vm837, %v1403, 0
        %1410 = vmatpush.bf16.msra.mxu0 0
        %1411 = vmatpush.bf16.msra.mxu0 0
        %1412 = vmatpush.bf16.msra.mxu0 0
        %1413 = vmatpush.bf16.msra.mxu0 0
        %1414 = vmatpush.bf16.msra.mxu0 0
        %1415 = vmatpush.bf16.msra.mxu0 0
        %1416 = vmatpush.bf16.msra.mxu0 0
        %1417 = vmatpush.bf16.msra.mxu0 %v1408
        %1418 = vmatmul.bf16.gmra.mxu0 %v1405
        %v1419 = vpop.f32.mrf.mxu0
        %v1420 = vadd.f32 0.0, %v1419
        %v1421 = vpop.f32.mrf.mxu0
        %1422 = vdwg.mxu0
        %v1423 = vpack.c.bf16 %v1420, %v1420
        %1425 = vrot.lane.b32.xlu0 %v1423, 16
        %v1426 = vpop.permute.xlu0 %1425
        %1428 = vst.msk [vmem:[#allocation5] sm:$0xf] %vm1005, %v1426
        %v1429 = vld [vmem:[#allocation2] sm:$0xf]
        %v1430 = vld [vmem:[#allocation3] sm:$0xf]
        %v1431 = vld [vmem:[#allocation4] sm:$0xf]
        %v1433 = vunpack.c.l.b16 %v1429
        %v1434 = vpack.c.b16 %v1433, %v1433
        %1435 = vrot.lane.b32.xlu0 %v1434, 104
        %v1436 = vpop.permute.xlu0 %1435
        %v1438 = vunpack.c.l.b16 %v1430
        %v1439 = vpack.c.b16 %v1438, %v1438
        %1440 = vrot.lane.b32.xlu0 %v1439, 104
        %v1441 = vpop.permute.xlu0 %1440
        %v1443 = vsel %vm802, %v1436, 0
        %v1446 = vsel %vm802, %v1441, 0
        %1448 = vmatpush.bf16.xpose.msra.mxu0 0
        %1449 = vmatpush.bf16.xpose.msra.mxu0 0
        %1450 = vmatpush.bf16.xpose.msra.mxu0 0
        %1451 = vmatpush.bf16.xpose.msra.mxu0 0
        %1452 = vmatpush.bf16.xpose.msra.mxu0 0
        %1453 = vmatpush.bf16.xpose.msra.mxu0 0
        %1454 = vmatpush.bf16.xpose.msra.mxu0 0
        %1455 = vmatpush.bf16.xpose.msra.mxu0 %v1446
        %1456 = vmatmul.bf16.gmra.mxu0 %v1443
        %v1457 = vpop.f32.mrf.mxu0
        %v1458 = vadd.f32 0.0, %v1457
        %v1459 = vpop.f32.mrf.mxu0
        %1460 = vdwg.mxu0
        %v1461 = vsel %vm802, %v1458, -inf
        %1462 = vmax.xlane.f32.xlu0 %v1461
        %v1463 = vpop.xlane.xlu0 %1462
        %v1464 = vsub.f32 %v1458, %v1463
        %v1465 = vmul.f32 %v1464, 1.442695
        %v1466 = vpow.pop %v1465
        %v1467 = vsel %vm802, %v1466, 0.0
        %1468 = vadd.xlane.f32.xlu0 %v1467
        %v1469 = vpop.xlane.xlu0 %1468
        %v1470 = vrcp.pop %v1469
        %v1471 = vmul.f32 %v1466, %v1470
        %v1472 = vpack.c.bf16 %v1471, %v1471
        %v1474 = vunpack.c.l.b16 %v1431
        %v1475 = vpack.c.b16 %v1474, %v1474
        %1476 = vrot.lane.b32.xlu0 %v1475, 104
        %v1477 = vpop.permute.xlu0 %1476
        %v1479 = vsel %vm802, %v1472, 0
        %v1482 = vsel %vm837, %v1477, 0
        %1484 = vmatpush.bf16.msra.mxu0 0
        %1485 = vmatpush.bf16.msra.mxu0 0
        %1486 = vmatpush.bf16.msra.mxu0 0
        %1487 = vmatpush.bf16.msra.mxu0 0
        %1488 = vmatpush.bf16.msra.mxu0 0
        %1489 = vmatpush.bf16.msra.mxu0 0
        %1490 = vmatpush.bf16.msra.mxu0 0
        %1491 = vmatpush.bf16.msra.mxu0 %v1482
        %1492 = vmatmul.bf16.gmra.mxu0 %v1479
        %v1493 = vpop.f32.mrf.mxu0
        %v1494 = vadd.f32 0.0, %v1493
        %v1495 = vpop.f32.mrf.mxu0
        %1496 = vdwg.mxu0
        %v1497 = vpack.c.bf16 %v1494, %v1494
        %1499 = vrot.lane.b32.xlu0 %v1497, 24
        %v1500 = vpop.permute.xlu0 %1499
        %1502 = vst.msk [vmem:[#allocation5] sm:$0xf] %vm1080, %v1500
        %v1503 = vld [vmem:[#allocation5] sm:$0xf]
        %v1504 = vld [vmem:[#allocation21] sm:$0xf]
        %v1505 = vld [vmem:[#allocation21 + $0x4] sm:$0xf]
        %v1506 = vld [vmem:[#allocation21 + $0x8] sm:$0xf]
        %v1507 = vld [vmem:[#allocation21 + $0xc] sm:$0xf]
        %v1508 = vld [vmem:[%s14] sm:$0x1]
        %v1510 = vperm.slane %v1508, 0
        %v1516 = vunpack.c.l.b16 %v1504
        %v1517 = vunpack.c.l.b16 %v1505
        %v1518 = vunpack.c.l.b16 %v1506
        %v1519 = vunpack.c.l.b16 %v1507
        %v1520 = vpack.c.b16 %v1517, %v1516
        %v1521 = vpack.c.b16 %v1519, %v1518
        %v1525 = vsel %vm661, %v1503, 0
        %1527 = vmatpush.bf16.msra.mxu0 0
        %1528 = vmatpush.bf16.msra.mxu0 0
        %1529 = vmatpush.bf16.msra.mxu0 0
        %1530 = vmatpush.bf16.msra.mxu0 0
        %1531 = vmatpush.bf16.msra.mxu0 0
        %1532 = vmatpush.bf16.msra.mxu0 0
        %1533 = vmatpush.bf16.msra.mxu0 %v1521
        %1534 = vmatpush.bf16.msra.mxu0 %v1520
        %1535 = vmatmul.bf16.gmra.mxu0 %v1525
        %v1536 = vpop.f32.mrf.mxu0
        %v1537 = vadd.f32 %v1510, %v1536
        %v1538 = vpop.f32.mrf.mxu0
        %1539 = vdwg.mxu0
        %v1540 = vadd.f32 %v660, %v1116
        %v1541 = vadd.f32 %v1540, %v1537
        %1542 = vst.msk [vmem:[%s658] sm:$0xff] %vm661, %v1541
        %s1543 = sand.u32 %s365, 1
        %s1544 = scalar_lea.sflag [#allocation8], %s1543
        %s1545 = sand.u32 %s365, 1
        %s1546 = smul.addr %s1545, 8
        %s1547 = scalar_lea.vmem [#allocation23], %s1546
        // Predicated region
        $region121: #{tpu_custom_call.1} parent=79 // pred_check
          %p1548 = pneg %p375
        $region122: #{tpu_custom_call.1} parent=79 // pred_check_branch
          %1550 = sbr.rel (%p1548) target = $region124
        $region123: #{tpu_custom_call.1} parent=79 // pred_region
          %1552 = vsyncadd %s1544, 0
          %s1553 = smul.addr %s37, 8
          %s1554 = scalar_lea.hbm %s15, %s1553
          %s1556 = sshll.u32 %s1547, 4
          %s1557 = int_to_ptr.vmem [resolvable:$true] %s1556
          %s1558 = sshll.u32 %s1554, 4
          %s1559 = int_to_ptr.hbm [resolvable:$true] %s1558
          %1561 = dma.vmem_to_hbm [thread:$0]  %s1557, 128, %s1559, %s1544
        $region124: #{tpu_custom_call.1} parent=79 // pred_fallthru
          _
      $region80: #{tpu_custom_call.1} parent=5 // pred_fallthru
        _
      %p1562 = scmp.le.s32.totalorder 2, %s32
      // Predicated region
      $region125: #{tpu_custom_call.1} parent=5 // pred_check
        %p1563 = pneg %p1562
      $region126: #{tpu_custom_call.1} parent=5 // pred_check_branch
        %1565 = sbr.rel (%p1563) target = $region128
      $region127: #{tpu_custom_call.1} parent=5 // pred_region
        %s1566 = ssub.s32 %s32, 2
        // Predicated region
        $region129: #{tpu_custom_call.1} parent=127 // pred_check
          %p1567 = pneg %p381
        $region130: #{tpu_custom_call.1} parent=127 // pred_check_branch
          %1569 = sbr.rel (%p1567) target = $region132
        $region131: #{tpu_custom_call.1} parent=127 // pred_region
          %s1570 = sand.u32 %s366, 1
          %s1571 = scalar_lea.sflag [#allocation8], %s1570
          %s1572 = sand.u32 %s366, 1
          %s1573 = smul.addr %s1572, 8
          %s1574 = scalar_lea.vmem [#allocation23], %s1573
          %1576 = dma.done %s1571, 128
        $region132: #{tpu_custom_call.1} parent=127 // pred_fallthru
          _
      $region128: #{tpu_custom_call.1} parent=5 // pred_fallthru
        _
    $region6: #{tpu_custom_call.1} parent=1 // loop_footer
      %s36 = sadd.s32 1, %s32
    $region7: #{tpu_custom_call.1} parent=1 // loop_footer_branch
      %31 = sbr.rel target = $region3
    $region8: #{tpu_custom_call.1} parent=1 // loop_exit
      _
    %1577 = vsyncpa [#allocation7], 1
    %s1578 = scalar_lea.sflag [#allocation7], 1
    %1579 = vsyncpa %s1578, 1
    %1580 = vsyncpa [#allocation10], 1
    %1581 = vsyncpa [#allocation13], 1
    %1582 = vsyncpa [#allocation16], 1
    %1583 = vsyncpa [#allocation19], 1
    %1584 = vsyncpa [#allocation22], 1
    %1585 = vsyncpa [#allocation8], 1
    %s1586 = scalar_lea.sflag [#allocation8], 1
    %1587 = vsyncpa %s1586, 1

// kernel: tpu_custom_call.1
$region0: #{tpu_custom_call.1}
  #allocation0 [shape = 'u32[]', space=smem, size = 0x4, offset = 0x4, fixed_abs, tag = 'smem constant byte address 0x4 - core index']
  #allocation1 [shape = 'u32[72,128]{1,0:T(1,128)}', space=vmem, size = 0x9000, scoped, tag = 'internal scratch']
  #allocation2 [shape = 'bf16[8,32]{1,0:T(8,128)(2,1)}', space=vmem, size = 0x800, scoped, tag = 'scratch operand']
  #allocation3 [shape = 'bf16[8,32]{1,0:T(8,128)(2,1)}', space=vmem, size = 0x800, scoped, tag = 'scratch operand']
  #allocation4 [shape = 'bf16[8,32]{1,0:T(8,128)(2,1)}', space=vmem, size = 0x800, scoped, tag = 'scratch operand']
  #allocation5 [shape = 'bf16[8,32]{1,0:T(8,128)(2,1)}', space=vmem, size = 0x800, scoped, tag = 'scratch operand']
  %s0 = inlined_call_operand.hbm [shape: f32[2,8,32], index: 0, kind: input, shape index: {}]
  %s1 = inlined_call_operand.hbm [shape: f32[1,32], index: 1, kind: input, shape index: {}]
  %s2 = inlined_call_operand.vmem [shape: f32[1,32], index: 2, kind: input, shape index: {}]
  %s3 = inlined_call_operand.vmem [shape: f32[1,32], index: 3, kind: input, shape index: {}]
  %s4 = inlined_call_operand.vmem [shape: f32[1,32], index: 4, kind: input, shape index: {}]
  %s5 = inlined_call_operand.hbm [shape: bf16[32,32], index: 5, kind: input, shape index: {}]
  %s6 = inlined_call_operand.hbm [shape: bf16[32,32], index: 6, kind: input, shape index: {}]
  %s7 = inlined_call_operand.hbm [shape: bf16[32,32], index: 7, kind: input, shape index: {}]
  %s8 = inlined_call_operand.hbm [shape: bf16[32,32], index: 8, kind: input, shape index: {}]
  %s9 = inlined_call_operand.vmem [shape: f32[1,32], index: 9, kind: input, shape index: {}]
  %s10 = inlined_call_operand.hbm [shape: bf16[32,32], index: 10, kind: input, shape index: {}]
  %s11 = inlined_call_operand.hbm [shape: bf16[32,32], index: 11, kind: input, shape index: {}]
  %s12 = inlined_call_operand.hbm [shape: bf16[32,32], index: 12, kind: input, shape index: {}]
  %s13 = inlined_call_operand.hbm [shape: bf16[32,32], index: 13, kind: input, shape index: {}]
  %s14 = inlined_call_operand.vmem [shape: f32[1,32], index: 14, kind: input, shape index: {}]
  %s15 = inlined_call_operand.hbm [shape: f32[2,8,32], index: 15, kind: output, shape index: {}]
  %s16 = sld [smem:[#allocation0]]
  $region133: #{tpu_custom_call.1} parent=0
    _
  %s18 = ssub.s32 1, %s16
  %s19 = scalar_select 0, %s18, %s16
  $region1: #{tpu_custom_call.1} parent=0
    #allocation6 [shape = 'u8[8192]{0}', space=vmem, size = 0x2000, scoped, tag = 'input window, operand 0']
    #allocation7 [shape = 's32[2]{0}', space=sflag, size = 0x8, scoped, tag = 'scoped memory for tpu_custom_call.1']
    #allocation8 [shape = 's32[2]{0}', space=sflag, size = 0x8, scoped, tag = 'scoped memory for tpu_custom_call.1']
    #allocation9 [shape = 'u8[512]{0}', space=vmem, size = 0x400, scoped, tag = 'input window, operand 1, single buffered']
    #allocation10 [shape = 's32[1]{0}', space=sflag, size = 0x4, scoped, tag = 'scoped memory for tpu_custom_call.1']
    #allocation11 [shape = 'u8[8192]{0}', space=vmem, size = 0x2000, scoped, tag = 'input window, operand 5, single buffered']
    #allocation12 [shape = 'u8[8192]{0}', space=vmem, size = 0x2000, scoped, tag = 'input window, operand 6, single buffered']
    #allocation13 [shape = 's32[1]{0}', space=sflag, size = 0x4, scoped, tag = 'scoped memory for tpu_custom_call.1']
    #allocation14 [shape = 'u8[8192]{0}', space=vmem, size = 0x2000, scoped, tag = 'input window, operand 7, single buffered']
    #allocation15 [shape = 'u8[8192]{0}', space=vmem, size = 0x2000, scoped, tag = 'input window, operand 8, single buffered']
    #allocation16 [shape = 's32[1]{0}', space=sflag, size = 0x4, scoped, tag = 'scoped memory for tpu_custom_call.1']
    #allocation17 [shape = 'u8[8192]{0}', space=vmem, size = 0x2000, scoped, tag = 'input window, operand 10, single buffered']
    #allocation18 [shape = 'u8[8192]{0}', space=vmem, size = 0x2000, scoped, tag = 'input window, operand 11, single buffered']
    #allocation19 [shape = 's32[1]{0}', space=sflag, size = 0x4, scoped, tag = 'scoped memory for tpu_custom_call.1']
    #allocation20 [shape = 'u8[8192]{0}', space=vmem, size = 0x2000, scoped, tag = 'input window, operand 12, single buffered']
    #allocation21 [shape = 'u8[8192]{0}', space=vmem, size = 0x2000, scoped, tag = 'input window, operand 13, single buffered']
    #allocation22 [shape = 's32[1]{0}', space=sflag, size = 0x4, scoped, tag = 'scoped memory for tpu_custom_call.1']
    #allocation23 [shape = 'u8[8192]{0}', space=vmem, size = 0x2000, scoped, tag = 'output window, operand 0']
    %20 = vsyncpa [#allocation7], 0
    %s21 = scalar_lea.sflag [#allocation7], 1
    %22 = vsyncpa %s21, 0
    %23 = vsyncpa [#allocation10], 0
    %24 = vsyncpa [#allocation13], 0
    %25 = vsyncpa [#allocation16], 0
    %26 = vsyncpa [#allocation19], 0
    %27 = vsyncpa [#allocation22], 0
    %28 = vsyncpa [#allocation8], 0
    %s29 = scalar_lea.sflag [#allocation8], 1
    %30 = vsyncpa %s29, 0
    loop: start=0, step=1, limit=4
    $region2: #{tpu_custom_call.1} parent=1 // loop_pre_header
      _
    $region3: #{tpu_custom_call.1} parent=1 // loop_header
      %s32 = sphi 0, %s36
      %p33 = scmp.ge.s32.totalorder %s32, 4
      %s42 = sphi 0, %s44
      %s45 = sphi 0, %s42
      %s46 = sphi 0, %s45
      %s62 = sphi 0, %s46
      %s66 = sphi 0, %s66
      %s68 = sphi 0, %s66
      %s69 = sphi 0, %s68
      %s83 = sphi 0, %s69
      %s87 = sphi 0, %s87
      %s89 = sphi 0, %s87
      %s90 = sphi 0, %s89
      %s104 = sphi 0, %s90
      %s108 = sphi 0, %s108
      %s110 = sphi 0, %s108
      %s111 = sphi 0, %s110
      %s125 = sphi 0, %s111
      %s129 = sphi 0, %s129
      %s131 = sphi 0, %s129
      %s132 = sphi 0, %s131
      %s146 = sphi 0, %s132
      %s150 = sphi 0, %s150
      %s152 = sphi 0, %s150
      %s153 = sphi 0, %s152
      %s167 = sphi 0, %s153
      %s171 = sphi 0, %s171
      %s173 = sphi 0, %s171
      %s174 = sphi 0, %s173
      %s188 = sphi 0, %s174
      %s192 = sphi 0, %s192
      %s194 = sphi 0, %s192
      %s195 = sphi 0, %s194
      %s209 = sphi 0, %s195
      %s213 = sphi 0, %s213
      %s215 = sphi 0, %s213
      %s216 = sphi 0, %s215
      %s230 = sphi 0, %s216
      %s234 = sphi 0, %s234
      %s236 = sphi 0, %s234
      %s237 = sphi 0, %s236
      %s251 = sphi 0, %s237
      %s255 = sphi 0, %s255
      %s257 = sphi 0, %s255
      %s258 = sphi 0, %s257
      %s272 = sphi 0, %s258
      %s276 = sphi 0, %s276
      %s278 = sphi 0, %s276
      %s279 = sphi 0, %s278
      %s293 = sphi 0, %s279
      %s297 = sphi 0, %s297
      %s299 = sphi 0, %s297
      %s300 = sphi 0, %s299
      %s314 = sphi 0, %s300
      %s318 = sphi 0, %s318
      %s320 = sphi 0, %s318
      %s321 = sphi 0, %s320
      %s335 = sphi 0, %s321
      %s339 = sphi 0, %s339
      %s341 = sphi 0, %s339
      %s342 = sphi 0, %s341
      %s356 = sphi 0, %s342
      %s362 = sphi 0, %s364
      %s365 = sphi 0, %s362
      %s366 = sphi 0, %s365
      %s382 = sphi 0, %s366
    $region4: #{tpu_custom_call.1} parent=1 // loop_header_branch
      %35 = sbr.rel (%p33) target = $region8
    $region5: #{tpu_custom_call.1} parent=1 // loop_body
      %s37 = ssub.s32 %s32, 1
      %s38 = ssub.s32 %s32, 2
      %s39 = sadd.s32 %s32, 1
      %s40 = ssub.s32 %s32, %s39
      %p41 = scmp.eq.s32.totalorder %s40, 0
      %s43 = sadd.s32 %s42, 1
      %s44 = scalar_select %p41, %s42, %s43
      %p47 = pneg %p41
      %p48 = scmp.eq.s32.totalorder %s32, 1
      %p49 = por %p47, %p48
      %p50 = scmp.ne.s32.totalorder %s42, %s45
      %p51 = scmp.eq.s32.totalorder %s32, 0
      %p52 = por %p50, %p51
      %p53 = scmp.ne.s32.totalorder %s42, %s45
      %p54 = scmp.eq.s32.totalorder %s37, 1
      %p55 = por %p53, %p54
      %p56 = scmp.ne.s32.totalorder %s45, %s46
      %p57 = scmp.eq.s32.totalorder %s37, 0
      %p58 = por %p56, %p57
      %p59 = scmp.ne.s32.totalorder %s45, %s46
      %p60 = scmp.eq.s32.totalorder %s38, 1
      %p61 = por %p59, %p60
      %p63 = scmp.ne.s32.totalorder %s46, %s62
      %p64 = scmp.eq.s32.totalorder %s38, 0
      %p65 = por %p63, %p64
      %s67 = sadd.s32 %s66, 1
      %p70 = scmp.eq.s32.totalorder %s32, 1
      %p71 = scmp.ne.s32.totalorder %s66, %s68
      %p72 = scmp.eq.s32.totalorder %s32, 0
      %p73 = por %p71, %p72
      %p74 = scmp.ne.s32.totalorder %s66, %s68
      %p75 = scmp.eq.s32.totalorder %s37, 1
      %p76 = por %p74, %p75
      %p77 = scmp.ne.s32.totalorder %s68, %s69
      %p78 = scmp.eq.s32.totalorder %s37, 0
      %p79 = por %p77, %p78
      %p80 = scmp.ne.s32.totalorder %s68, %s69
      %p81 = scmp.eq.s32.totalorder %s38, 1
      %p82 = por %p80, %p81
      %p84 = scmp.ne.s32.totalorder %s69, %s83
      %p85 = scmp.eq.s32.totalorder %s38, 0
      %p86 = por %p84, %p85
      %s88 = sadd.s32 %s87, 1
      %p91 = scmp.eq.s32.totalorder %s32, 1
      %p92 = scmp.ne.s32.totalorder %s87, %s89
      %p93 = scmp.eq.s32.totalorder %s32, 0
      %p94 = por %p92, %p93
      %p95 = scmp.ne.s32.totalorder %s87, %s89
      %p96 = scmp.eq.s32.totalorder %s37, 1
      %p97 = por %p95, %p96
      %p98 = scmp.ne.s32.totalorder %s89, %s90
      %p99 = scmp.eq.s32.totalorder %s37, 0
      %p100 = por %p98, %p99
      %p101 = scmp.ne.s32.totalorder %s89, %s90
      %p102 = scmp.eq.s32.totalorder %s38, 1
      %p103 = por %p101, %p102
      %p105 = scmp.ne.s32.totalorder %s90, %s104
      %p106 = scmp.eq.s32.totalorder %s38, 0
      %p107 = por %p105, %p106
      %s109 = sadd.s32 %s108, 1
      %p112 = scmp.eq.s32.totalorder %s32, 1
      %p113 = scmp.ne.s32.totalorder %s108, %s110
      %p114 = scmp.eq.s32.totalorder %s32, 0
      %p115 = por %p113, %p114
      %p116 = scmp.ne.s32.totalorder %s108, %s110
      %p117 = scmp.eq.s32.totalorder %s37, 1
      %p118 = por %p116, %p117
      %p119 = scmp.ne.s32.totalorder %s110, %s111
      %p120 = scmp.eq.s32.totalorder %s37, 0
      %p121 = por %p119, %p120
      %p122 = scmp.ne.s32.totalorder %s110, %s111
      %p123 = scmp.eq.s32.totalorder %s38, 1
      %p124 = por %p122, %p123
      %p126 = scmp.ne.s32.totalorder %s111, %s125
      %p127 = scmp.eq.s32.totalorder %s38, 0
      %p128 = por %p126, %p127
      %s130 = sadd.s32 %s129, 1
      %p133 = scmp.eq.s32.totalorder %s32, 1
      %p134 = scmp.ne.s32.totalorder %s129, %s131
      %p135 = scmp.eq.s32.totalorder %s32, 0
      %p136 = por %p134, %p135
      %p137 = scmp.ne.s32.totalorder %s129, %s131
      %p138 = scmp.eq.s32.totalorder %s37, 1
      %p139 = por %p137, %p138
      %p140 = scmp.ne.s32.totalorder %s131, %s132
      %p141 = scmp.eq.s32.totalorder %s37, 0
      %p142 = por %p140, %p141
      %p143 = scmp.ne.s32.totalorder %s131, %s132
      %p144 = scmp.eq.s32.totalorder %s38, 1
      %p145 = por %p143, %p144
      %p147 = scmp.ne.s32.totalorder %s132, %s146
      %p148 = scmp.eq.s32.totalorder %s38, 0
      %p149 = por %p147, %p148
      %s151 = sadd.s32 %s150, 1
      %p154 = scmp.eq.s32.totalorder %s32, 1
      %p155 = scmp.ne.s32.totalorder %s150, %s152
      %p156 = scmp.eq.s32.totalorder %s32, 0
      %p157 = por %p155, %p156
      %p158 = scmp.ne.s32.totalorder %s150, %s152
      %p159 = scmp.eq.s32.totalorder %s37, 1
      %p160 = por %p158, %p159
      %p161 = scmp.ne.s32.totalorder %s152, %s153
      %p162 = scmp.eq.s32.totalorder %s37, 0
      %p163 = por %p161, %p162
      %p164 = scmp.ne.s32.totalorder %s152, %s153
      %p165 = scmp.eq.s32.totalorder %s38, 1
      %p166 = por %p164, %p165
      %p168 = scmp.ne.s32.totalorder %s153, %s167
      %p169 = scmp.eq.s32.totalorder %s38, 0
      %p170 = por %p168, %p169
      %s172 = sadd.s32 %s171, 1
      %p175 = scmp.eq.s32.totalorder %s32, 1
      %p176 = scmp.ne.s32.totalorder %s171, %s173
      %p177 = scmp.eq.s32.totalorder %s32, 0
      %p178 = por %p176, %p177
      %p179 = scmp.ne.s32.totalorder %s171, %s173
      %p180 = scmp.eq.s32.totalorder %s37, 1
      %p181 = por %p179, %p180
      %p182 = scmp.ne.s32.totalorder %s173, %s174
      %p183 = scmp.eq.s32.totalorder %s37, 0
      %p184 = por %p182, %p183
      %p185 = scmp.ne.s32.totalorder %s173, %s174
      %p186 = scmp.eq.s32.totalorder %s38, 1
      %p187 = por %p185, %p186
      %p189 = scmp.ne.s32.totalorder %s174, %s188
      %p190 = scmp.eq.s32.totalorder %s38, 0
      %p191 = por %p189, %p190
      %s193 = sadd.s32 %s192, 1
      %p196 = scmp.eq.s32.totalorder %s32, 1
      %p197 = scmp.ne.s32.totalorder %s192, %s194
      %p198 = scmp.eq.s32.totalorder %s32, 0
      %p199 = por %p197, %p198
      %p200 = scmp.ne.s32.totalorder %s192, %s194
      %p201 = scmp.eq.s32.totalorder %s37, 1
      %p202 = por %p200, %p201
      %p203 = scmp.ne.s32.totalorder %s194, %s195
      %p204 = scmp.eq.s32.totalorder %s37, 0
      %p205 = por %p203, %p204
      %p206 = scmp.ne.s32.totalorder %s194, %s195
      %p207 = scmp.eq.s32.totalorder %s38, 1
      %p208 = por %p206, %p207
      %p210 = scmp.ne.s32.totalorder %s195, %s209
      %p211 = scmp.eq.s32.totalorder %s38, 0
      %p212 = por %p210, %p211
      %s214 = sadd.s32 %s213, 1
      %p217 = scmp.eq.s32.totalorder %s32, 1
      %p218 = scmp.ne.s32.totalorder %s213, %s215
      %p219 = scmp.eq.s32.totalorder %s32, 0
      %p220 = por %p218, %p219
      %p221 = scmp.ne.s32.totalorder %s213, %s215
      %p222 = scmp.eq.s32.totalorder %s37, 1
      %p223 = por %p221, %p222
      %p224 = scmp.ne.s32.totalorder %s215, %s216
      %p225 = scmp.eq.s32.totalorder %s37, 0
      %p226 = por %p224, %p225
      %p227 = scmp.ne.s32.totalorder %s215, %s216
      %p228 = scmp.eq.s32.totalorder %s38, 1
      %p229 = por %p227, %p228
      %p231 = scmp.ne.s32.totalorder %s216, %s230
      %p232 = scmp.eq.s32.totalorder %s38, 0
      %p233 = por %p231, %p232
      %s235 = sadd.s32 %s234, 1
      %p238 = scmp.eq.s32.totalorder %s32, 1
      %p239 = scmp.ne.s32.totalorder %s234, %s236
      %p240 = scmp.eq.s32.totalorder %s32, 0
      %p241 = por %p239, %p240
      %p242 = scmp.ne.s32.totalorder %s234, %s236
      %p243 = scmp.eq.s32.totalorder %s37, 1
      %p244 = por %p242, %p243
      %p245 = scmp.ne.s32.totalorder %s236, %s237
      %p246 = scmp.eq.s32.totalorder %s37, 0
      %p247 = por %p245, %p246
      %p248 = scmp.ne.s32.totalorder %s236, %s237
      %p249 = scmp.eq.s32.totalorder %s38, 1
      %p250 = por %p248, %p249
      %p252 = scmp.ne.s32.totalorder %s237, %s251
      %p253 = scmp.eq.s32.totalorder %s38, 0
      %p254 = por %p252, %p253
      %s256 = sadd.s32 %s255, 1
      %p259 = scmp.eq.s32.totalorder %s32, 1
      %p260 = scmp.ne.s32.totalorder %s255, %s257
      %p261 = scmp.eq.s32.totalorder %s32, 0
      %p262 = por %p260, %p261
      %p263 = scmp.ne.s32.totalorder %s255, %s257
      %p264 = scmp.eq.s32.totalorder %s37, 1
      %p265 = por %p263, %p264
      %p266 = scmp.ne.s32.totalorder %s257, %s258
      %p267 = scmp.eq.s32.totalorder %s37, 0
      %p268 = por %p266, %p267
      %p269 = scmp.ne.s32.totalorder %s257, %s258
      %p270 = scmp.eq.s32.totalorder %s38, 1
      %p271 = por %p269, %p270
      %p273 = scmp.ne.s32.totalorder %s258, %s272
      %p274 = scmp.eq.s32.totalorder %s38, 0
      %p275 = por %p273, %p274
      %s277 = sadd.s32 %s276, 1
      %p280 = scmp.eq.s32.totalorder %s32, 1
      %p281 = scmp.ne.s32.totalorder %s276, %s278
      %p282 = scmp.eq.s32.totalorder %s32, 0
      %p283 = por %p281, %p282
      %p284 = scmp.ne.s32.totalorder %s276, %s278
      %p285 = scmp.eq.s32.totalorder %s37, 1
      %p286 = por %p284, %p285
      %p287 = scmp.ne.s32.totalorder %s278, %s279
      %p288 = scmp.eq.s32.totalorder %s37, 0
      %p289 = por %p287, %p288
      %p290 = scmp.ne.s32.totalorder %s278, %s279
      %p291 = scmp.eq.s32.totalorder %s38, 1
      %p292 = por %p290, %p291
      %p294 = scmp.ne.s32.totalorder %s279, %s293
      %p295 = scmp.eq.s32.totalorder %s38, 0
      %p296 = por %p294, %p295
      %s298 = sadd.s32 %s297, 1
      %p301 = scmp.eq.s32.totalorder %s32, 1
      %p302 = scmp.ne.s32.totalorder %s297, %s299
      %p303 = scmp.eq.s32.totalorder %s32, 0
      %p304 = por %p302, %p303
      %p305 = scmp.ne.s32.totalorder %s297, %s299
      %p306 = scmp.eq.s32.totalorder %s37, 1
      %p307 = por %p305, %p306
      %p308 = scmp.ne.s32.totalorder %s299, %s300
      %p309 = scmp.eq.s32.totalorder %s37, 0
      %p310 = por %p308, %p309
      %p311 = scmp.ne.s32.totalorder %s299, %s300
      %p312 = scmp.eq.s32.totalorder %s38, 1
      %p313 = por %p311, %p312
      %p315 = scmp.ne.s32.totalorder %s300, %s314
      %p316 = scmp.eq.s32.totalorder %s38, 0
      %p317 = por %p315, %p316
      %s319 = sadd.s32 %s318, 1
      %p322 = scmp.eq.s32.totalorder %s32, 1
      %p323 = scmp.ne.s32.totalorder %s318, %s320
      %p324 = scmp.eq.s32.totalorder %s32, 0
      %p325 = por %p323, %p324
      %p326 = scmp.ne.s32.totalorder %s318, %s320
      %p327 = scmp.eq.s32.totalorder %s37, 1
      %p328 = por %p326, %p327
      %p329 = scmp.ne.s32.totalorder %s320, %s321
      %p330 = scmp.eq.s32.totalorder %s37, 0
      %p331 = por %p329, %p330
      %p332 = scmp.ne.s32.totalorder %s320, %s321
      %p333 = scmp.eq.s32.totalorder %s38, 1
      %p334 = por %p332, %p333
      %p336 = scmp.ne.s32.totalorder %s321, %s335
      %p337 = scmp.eq.s32.totalorder %s38, 0
      %p338 = por %p336, %p337
      %s340 = sadd.s32 %s339, 1
      %p343 = scmp.eq.s32.totalorder %s32, 1
      %p344 = scmp.ne.s32.totalorder %s339, %s341
      %p345 = scmp.eq.s32.totalorder %s32, 0
      %p346 = por %p344, %p345
      %p347 = scmp.ne.s32.totalorder %s339, %s341
      %p348 = scmp.eq.s32.totalorder %s37, 1
      %p349 = por %p347, %p348
      %p350 = scmp.ne.s32.totalorder %s341, %s342
      %p351 = scmp.eq.s32.totalorder %s37, 0
      %p352 = por %p350, %p351
      %p353 = scmp.ne.s32.totalorder %s341, %s342
      %p354 = scmp.eq.s32.totalorder %s38, 1
      %p355 = por %p353, %p354
      %p357 = scmp.ne.s32.totalorder %s342, %s356
      %p358 = scmp.eq.s32.totalorder %s38, 0
      %p359 = por %p357, %p358
      %s360 = ssub.s32 %s32, %s39
      %p361 = scmp.eq.s32.totalorder %s360, 0
      %s363 = sadd.s32 %s362, 1
      %s364 = scalar_select %p361, %s362, %s363
      %p367 = pneg %p361
      %p368 = scmp.eq.s32.totalorder %s32, 1
      %p369 = por %p367, %p368
      %p370 = scmp.ne.s32.totalorder %s362, %s365
      %p371 = scmp.eq.s32.totalorder %s32, 0
      %p372 = por %p370, %p371
      %p373 = scmp.ne.s32.totalorder %s362, %s365
      %p374 = scmp.eq.s32.totalorder %s37, 1
      %p375 = por %p373, %p374
      %p376 = scmp.ne.s32.totalorder %s365, %s366
      %p377 = scmp.eq.s32.totalorder %s37, 0
      %p378 = por %p376, %p377
      %p379 = scmp.ne.s32.totalorder %s365, %s366
      %p380 = scmp.eq.s32.totalorder %s38, 1
      %p381 = por %p379, %p380
      %p383 = scmp.ne.s32.totalorder %s366, %s382
      %p384 = scmp.eq.s32.totalorder %s38, 0
      %p385 = por %p383, %p384
      %p386 = scmp.le.s32.totalorder 1, %s32
      %p387 = scmp.lt.s32.totalorder %s32, 3
      %p388 = pnand %p386, %p387
      %p389 = pneg %p388
      // Predicated region
      $region9: #{tpu_custom_call.1} parent=5 // pred_check
        _
      $region10: #{tpu_custom_call.1} parent=5 // pred_check_branch
        %391 = sbr.rel (%p388) target = $region12
      $region11: #{tpu_custom_call.1} parent=5 // pred_region
        %s392 = ssub.s32 %s32, 1
        // Predicated region
        $region13: #{tpu_custom_call.1} parent=11 // pred_check
          %p393 = pneg %p79
        $region14: #{tpu_custom_call.1} parent=11 // pred_check_branch
          %395 = sbr.rel (%p393) target = $region16
        $region15: #{tpu_custom_call.1} parent=11 // pred_region
          %397 = vsyncadd [#allocation10], 0
          %s399 = sshll.u32 %s1, 4
          %s400 = int_to_ptr.hbm [resolvable:$true] %s399
          %s401 = sshll.u32 [#allocation9], 4
          %s402 = int_to_ptr.vmem [resolvable:$true] %s401
          %404 = dma.hbm_to_vmem [thread:$0]  %s400, 16, %s402, [#allocation10]
        $region16: #{tpu_custom_call.1} parent=11 // pred_fallthru
          _
        // Predicated region
        $region17: #{tpu_custom_call.1} parent=11 // pred_check
          %p405 = pneg %p100
        $region18: #{tpu_custom_call.1} parent=11 // pred_check_branch
          %407 = sbr.rel (%p405) target = $region20
        $region19: #{tpu_custom_call.1} parent=11 // pred_region
          _
        $region20: #{tpu_custom_call.1} parent=11 // pred_fallthru
          _
        // Predicated region
        $region21: #{tpu_custom_call.1} parent=11 // pred_check
          %p408 = pneg %p121
        $region22: #{tpu_custom_call.1} parent=11 // pred_check_branch
          %410 = sbr.rel (%p408) target = $region24
        $region23: #{tpu_custom_call.1} parent=11 // pred_region
          _
        $region24: #{tpu_custom_call.1} parent=11 // pred_fallthru
          _
        // Predicated region
        $region25: #{tpu_custom_call.1} parent=11 // pred_check
          %p411 = pneg %p142
        $region26: #{tpu_custom_call.1} parent=11 // pred_check_branch
          %413 = sbr.rel (%p411) target = $region28
        $region27: #{tpu_custom_call.1} parent=11 // pred_region
          _
        $region28: #{tpu_custom_call.1} parent=11 // pred_fallthru
          _
        // Predicated region
        $region29: #{tpu_custom_call.1} parent=11 // pred_check
          %p414 = pneg %p163
        $region30: #{tpu_custom_call.1} parent=11 // pred_check_branch
          %416 = sbr.rel (%p414) target = $region32
        $region31: #{tpu_custom_call.1} parent=11 // pred_region
          %418 = vsyncadd [#allocation10], 0
          %s419 = sshll.u32 %s5, 4
          %s420 = int_to_ptr.hbm [resolvable:$true] %s419
          %s421 = sshll.u32 [#allocation11], 4
          %s422 = int_to_ptr.vmem [resolvable:$true] %s421
          %427 = dma.hbm_to_vmem [thread:$0]  %s420, 256, %s422, [#allocation10], 64, 64, 4
        $region32: #{tpu_custom_call.1} parent=11 // pred_fallthru
          _
        // Predicated region
        $region33: #{tpu_custom_call.1} parent=11 // pred_check
          %p428 = pneg %p184
        $region34: #{tpu_custom_call.1} parent=11 // pred_check_branch
          %430 = sbr.rel (%p428) target = $region36
        $region35: #{tpu_custom_call.1} parent=11 // pred_region
          %432 = vsyncadd [#allocation13], 0
          %s433 = sshll.u32 %s6, 4
          %s434 = int_to_ptr.hbm [resolvable:$true] %s433
          %s435 = sshll.u32 [#allocation12], 4
          %s436 = int_to_ptr.vmem [resolvable:$true] %s435
          %441 = dma.hbm_to_vmem [thread:$0]  %s434, 256, %s436, [#allocation13], 64, 64, 4
        $region36: #{tpu_custom_call.1} parent=11 // pred_fallthru
          _
        // Predicated region
        $region37: #{tpu_custom_call.1} parent=11 // pred_check
          %p442 = pneg %p205
        $region38: #{tpu_custom_call.1} parent=11 // pred_check_branch
          %444 = sbr.rel (%p442) target = $region40
        $region39: #{tpu_custom_call.1} parent=11 // pred_region
          %446 = vsyncadd [#allocation13], 0
          %s447 = sshll.u32 %s7, 4
          %s448 = int_to_ptr.hbm [resolvable:$true] %s447
          %s449 = sshll.u32 [#allocation14], 4
          %s450 = int_to_ptr.vmem [resolvable:$true] %s449
          %455 = dma.hbm_to_vmem [thread:$0]  %s448, 256, %s450, [#allocation13], 64, 64, 4
        $region40: #{tpu_custom_call.1} parent=11 // pred_fallthru
          _
        // Predicated region
        $region41: #{tpu_custom_call.1} parent=11 // pred_check
          %p456 = pneg %p226
        $region42: #{tpu_custom_call.1} parent=11 // pred_check_branch
          %458 = sbr.rel (%p456) target = $region44
        $region43: #{tpu_custom_call.1} parent=11 // pred_region
          %460 = vsyncadd [#allocation16], 0
          %s461 = sshll.u32 %s8, 4
          %s462 = int_to_ptr.hbm [resolvable:$true] %s461
          %s463 = sshll.u32 [#allocation15], 4
          %s464 = int_to_ptr.vmem [resolvable:$true] %s463
          %469 = dma.hbm_to_vmem [thread:$0]  %s462, 256, %s464, [#allocation16], 64, 64, 4
        $region44: #{tpu_custom_call.1} parent=11 // pred_fallthru
          _
        // Predicated region
        $region45: #{tpu_custom_call.1} parent=11 // pred_check
          %p470 = pneg %p247
        $region46: #{tpu_custom_call.1} parent=11 // pred_check_branch
          %472 = sbr.rel (%p470) target = $region48
        $region47: #{tpu_custom_call.1} parent=11 // pred_region
          _
        $region48: #{tpu_custom_call.1} parent=11 // pred_fallthru
          _
        // Predicated region
        $region49: #{tpu_custom_call.1} parent=11 // pred_check
          %p473 = pneg %p268
        $region50: #{tpu_custom_call.1} parent=11 // pred_check_branch
          %475 = sbr.rel (%p473) target = $region52
        $region51: #{tpu_custom_call.1} parent=11 // pred_region
          %477 = vsyncadd [#allocation16], 0
          %s478 = sshll.u32 %s10, 4
          %s479 = int_to_ptr.hbm [resolvable:$true] %s478
          %s480 = sshll.u32 [#allocation17], 4
          %s481 = int_to_ptr.vmem [resolvable:$true] %s480
          %486 = dma.hbm_to_vmem [thread:$0]  %s479, 256, %s481, [#allocation16], 64, 64, 4
        $region52: #{tpu_custom_call.1} parent=11 // pred_fallthru
          _
        // Predicated region
        $region53: #{tpu_custom_call.1} parent=11 // pred_check
          %p487 = pneg %p289
        $region54: #{tpu_custom_call.1} parent=11 // pred_check_branch
          %489 = sbr.rel (%p487) target = $region56
        $region55: #{tpu_custom_call.1} parent=11 // pred_region
          %491 = vsyncadd [#allocation19], 0
          %s492 = sshll.u32 %s11, 4
          %s493 = int_to_ptr.hbm [resolvable:$true] %s492
          %s494 = sshll.u32 [#allocation18], 4
          %s495 = int_to_ptr.vmem [resolvable:$true] %s494
          %500 = dma.hbm_to_vmem [thread:$0]  %s493, 256, %s495, [#allocation19], 64, 64, 4
        $region56: #{tpu_custom_call.1} parent=11 // pred_fallthru
          _
        // Predicated region
        $region57: #{tpu_custom_call.1} parent=11 // pred_check
          %p501 = pneg %p310
        $region58: #{tpu_custom_call.1} parent=11 // pred_check_branch
          %503 = sbr.rel (%p501) target = $region60
        $region59: #{tpu_custom_call.1} parent=11 // pred_region
          %505 = vsyncadd [#allocation19], 0
          %s506 = sshll.u32 %s12, 4
          %s507 = int_to_ptr.hbm [resolvable:$true] %s506
          %s508 = sshll.u32 [#allocation20], 4
          %s509 = int_to_ptr.vmem [resolvable:$true] %s508
          %514 = dma.hbm_to_vmem [thread:$0]  %s507, 256, %s509, [#allocation19], 64, 64, 4
        $region60: #{tpu_custom_call.1} parent=11 // pred_fallthru
          _
        // Predicated region
        $region61: #{tpu_custom_call.1} parent=11 // pred_check
          %p515 = pneg %p331
        $region62: #{tpu_custom_call.1} parent=11 // pred_check_branch
          %517 = sbr.rel (%p515) target = $region64
        $region63: #{tpu_custom_call.1} parent=11 // pred_region
          %519 = vsyncadd [#allocation22], 0
          %s520 = sshll.u32 %s13, 4
          %s521 = int_to_ptr.hbm [resolvable:$true] %s520
          %s522 = sshll.u32 [#allocation21], 4
          %s523 = int_to_ptr.vmem [resolvable:$true] %s522
          %528 = dma.hbm_to_vmem [thread:$0]  %s521, 256, %s523, [#allocation22], 64, 64, 4
        $region64: #{tpu_custom_call.1} parent=11 // pred_fallthru
          _
        // Predicated region
        $region65: #{tpu_custom_call.1} parent=11 // pred_check
          %p529 = pneg %p352
        $region66: #{tpu_custom_call.1} parent=11 // pred_check_branch
          %531 = sbr.rel (%p529) target = $region68
        $region67: #{tpu_custom_call.1} parent=11 // pred_region
          _
        $region68: #{tpu_custom_call.1} parent=11 // pred_fallthru
          _
      $region12: #{tpu_custom_call.1} parent=5 // pred_fallthru
        _
      %p532 = scmp.lt.s32.totalorder %s32, 2
      // Predicated region
      $region69: #{tpu_custom_call.1} parent=5 // pred_check
        %p533 = pneg %p532
      $region70: #{tpu_custom_call.1} parent=5 // pred_check_branch
        %535 = sbr.rel (%p533) target = $region72
      $region71: #{tpu_custom_call.1} parent=5 // pred_region
        // Predicated region
        $region73: #{tpu_custom_call.1} parent=71 // pred_check
          %p536 = pneg %p52
        $region74: #{tpu_custom_call.1} parent=71 // pred_check_branch
          %538 = sbr.rel (%p536) target = $region76
        $region75: #{tpu_custom_call.1} parent=71 // pred_region
          %s539 = sand.u32 %s42, 1
          %s540 = scalar_lea.sflag [#allocation7], %s539
          %s541 = sand.u32 %s42, 1
          %s542 = smul.addr %s541, 8
          %s543 = scalar_lea.vmem [#allocation6], %s542
          %545 = vsyncadd %s540, 0
          %s546 = smul.addr %s32, 8
          %s547 = scalar_lea.hbm %s0, %s546
          %s549 = sshll.u32 %s547, 4
          %s550 = int_to_ptr.hbm [resolvable:$true] %s549
          %s551 = sshll.u32 %s543, 4
          %s552 = int_to_ptr.vmem [resolvable:$true] %s551
          %554 = dma.hbm_to_vmem [thread:$0]  %s550, 128, %s552, %s540
        $region76: #{tpu_custom_call.1} parent=71 // pred_fallthru
          _
      $region72: #{tpu_custom_call.1} parent=5 // pred_fallthru
        _
      %p555 = scmp.le.s32.totalorder 1, %s32
      %p556 = scmp.lt.s32.totalorder %s32, 3
      %p557 = pnand %p555, %p556
      %p558 = pneg %p557
      // Predicated region
      $region77: #{tpu_custom_call.1} parent=5 // pred_check
        _
      $region78: #{tpu_custom_call.1} parent=5 // pred_check_branch
        %560 = sbr.rel (%p557) target = $region80
      $region79: #{tpu_custom_call.1} parent=5 // pred_region
        %s561 = ssub.s32 %s32, 1
        %s562 = sand.u32 %s45, 1
        %s563 = scalar_lea.sflag [#allocation7], %s562
        %s564 = sand.u32 %s45, 1
        %s565 = smul.addr %s564, 8
        %s566 = scalar_lea.vmem [#allocation6], %s565
        // Predicated region
        $region81: #{tpu_custom_call.1} parent=79 // pred_check
          %p567 = pneg %p58
        $region82: #{tpu_custom_call.1} parent=79 // pred_check_branch
          %569 = sbr.rel (%p567) target = $region84
        $region83: #{tpu_custom_call.1} parent=79 // pred_region
          %571 = dma.done %s563, 128
        $region84: #{tpu_custom_call.1} parent=79 // pred_fallthru
          _
        // Predicated region
        $region85: #{tpu_custom_call.1} parent=79 // pred_check
          %p572 = pneg %p79
        $region86: #{tpu_custom_call.1} parent=79 // pred_check_branch
          %574 = sbr.rel (%p572) target = $region88
        $region87: #{tpu_custom_call.1} parent=79 // pred_region
          %576 = dma.done [#allocation10], 16
        $region88: #{tpu_custom_call.1} parent=79 // pred_fallthru
          _
        // Predicated region
        $region89: #{tpu_custom_call.1} parent=79 // pred_check
          %p577 = pneg %p163
        $region90: #{tpu_custom_call.1} parent=79 // pred_check_branch
          %579 = sbr.rel (%p577) target = $region92
        $region91: #{tpu_custom_call.1} parent=79 // pred_region
          %581 = dma.done [#allocation10], 256
        $region92: #{tpu_custom_call.1} parent=79 // pred_fallthru
          _
        // Predicated region
        $region93: #{tpu_custom_call.1} parent=79 // pred_check
          %p582 = pneg %p184
        $region94: #{tpu_custom_call.1} parent=79 // pred_check_branch
          %584 = sbr.rel (%p582) target = $region96
        $region95: #{tpu_custom_call.1} parent=79 // pred_region
          %586 = dma.done [#allocation13], 256
        $region96: #{tpu_custom_call.1} parent=79 // pred_fallthru
          _
        // Predicated region
        $region97: #{tpu_custom_call.1} parent=79 // pred_check
          %p587 = pneg %p205
        $region98: #{tpu_custom_call.1} parent=79 // pred_check_branch
          %589 = sbr.rel (%p587) target = $region100
        $region99: #{tpu_custom_call.1} parent=79 // pred_region
          %591 = dma.done [#allocation13], 256
        $region100: #{tpu_custom_call.1} parent=79 // pred_fallthru
          _
        // Predicated region
        $region101: #{tpu_custom_call.1} parent=79 // pred_check
          %p592 = pneg %p226
        $region102: #{tpu_custom_call.1} parent=79 // pred_check_branch
          %594 = sbr.rel (%p592) target = $region104
        $region103: #{tpu_custom_call.1} parent=79 // pred_region
          %596 = dma.done [#allocation16], 256
        $region104: #{tpu_custom_call.1} parent=79 // pred_fallthru
          _
        // Predicated region
        $region105: #{tpu_custom_call.1} parent=79 // pred_check
          %p597 = pneg %p268
        $region106: #{tpu_custom_call.1} parent=79 // pred_check_branch
          %599 = sbr.rel (%p597) target = $region108
        $region107: #{tpu_custom_call.1} parent=79 // pred_region
          %601 = dma.done [#allocation16], 256
        $region108: #{tpu_custom_call.1} parent=79 // pred_fallthru
          _
        // Predicated region
        $region109: #{tpu_custom_call.1} parent=79 // pred_check
          %p602 = pneg %p289
        $region110: #{tpu_custom_call.1} parent=79 // pred_check_branch
          %604 = sbr.rel (%p602) target = $region112
        $region111: #{tpu_custom_call.1} parent=79 // pred_region
          %606 = dma.done [#allocation19], 256
        $region112: #{tpu_custom_call.1} parent=79 // pred_fallthru
          _
        // Predicated region
        $region113: #{tpu_custom_call.1} parent=79 // pred_check
          %p607 = pneg %p310
        $region114: #{tpu_custom_call.1} parent=79 // pred_check_branch
          %609 = sbr.rel (%p607) target = $region116
        $region115: #{tpu_custom_call.1} parent=79 // pred_region
          %611 = dma.done [#allocation19], 256
        $region116: #{tpu_custom_call.1} parent=79 // pred_fallthru
          _
        // Predicated region
        $region117: #{tpu_custom_call.1} parent=79 // pred_check
          %p612 = pneg %p331
        $region118: #{tpu_custom_call.1} parent=79 // pred_check_branch
          %614 = sbr.rel (%p612) target = $region120
        $region119: #{tpu_custom_call.1} parent=79 // pred_region
          %616 = dma.done [#allocation22], 256
        $region120: #{tpu_custom_call.1} parent=79 // pred_fallthru
          _
        %s617 = sand.u32 %s45, 1
        %s618 = scalar_lea.sflag [#allocation7], %s617
        %s619 = sand.u32 %s45, 1
        %s620 = smul.addr %s619, 8
        %s621 = scalar_lea.vmem [#allocation6], %s620
        %p622 = pneg %p58
        %p623 = pneg %p55
        %p624 = pneg %p79
        %p625 = pneg %p76
        %p626 = pneg %p100
        %p627 = pneg %p97
        %p628 = pneg %p121
        %p629 = pneg %p118
        %p630 = pneg %p142
        %p631 = pneg %p139
        %p632 = pneg %p163
        %p633 = pneg %p160
        %p634 = pneg %p184
        %p635 = pneg %p181
        %p636 = pneg %p205
        %p637 = pneg %p202
        %p638 = pneg %p226
        %p639 = pneg %p223
        %p640 = pneg %p247
        %p641 = pneg %p244
        %p642 = pneg %p268
        %p643 = pneg %p265
        %p644 = pneg %p289
        %p645 = pneg %p286
        %p646 = pneg %p310
        %p647 = pneg %p307
        %p648 = pneg %p331
        %p649 = pneg %p328
        %p650 = pneg %p352
        %p651 = pneg %p349
        %p652 = pneg %p378
        %p653 = pneg %p375
        %s654 = sand.u32 %s365, 1
        %s655 = scalar_lea.sflag [#allocation8], %s654
        %s656 = sand.u32 %s365, 1
        %s657 = smul.addr %s656, 8
        %s658 = scalar_lea.vmem [#allocation23], %s657
        %v660 = vld [vmem:[%s566] sm:$0xff]
        %vm661 = vcmask 261120
        %v662 = vsel %vm661, %v660, 0.0
        %663 = vadd.xlane.f32.xlu0 %v662
        %v664 = vpop.xlane.xlu0 %663
        %v665 = vrcp.pop 32.0
        %v666 = vmul.f32 32.0, %v665
        %v667 = vsub.f32 1.0, %v666
        %v668 = vmul.f32 %v665, %v667
        %v669 = vadd.f32 %v665, %v668
        %vm670 = vweird.f32 %v665
        %v671 = vsel %vm670, %v665, %v669
        %v672 = vmul.f32 %v664, %v671
        %v673 = vsub.f32 %v660, %v672
        %v674 = vmul.f32 %v673, %v673
        %v675 = vsel %vm661, %v674, 0.0
        %676 = vadd.xlane.f32.xlu0 %v675
        %v677 = vpop.xlane.xlu0 %676
        %v678 = vmul.f32 %v677, %v671
        %v679 = vadd.f32 %v678, 1e-05
        %v680 = vrsqrt.pop %v679
        %v681 = vmul.f32 %v680, %v679
        %v682 = vmul.f32 %v681, %v680
        %v683 = vmul.f32 0.5, %v682
        %v684 = vsub.f32 1.5, %v683
        %v685 = vmul.f32 %v680, %v684
        %vm686 = vweird.f32 %v679
        %vm687 = vweird.f32 %v680
        %vm688 = vmor %vm686, %vm687
        %v689 = vsel %vm688, %v680, %v685
        %v690 = vmul.f32 %v673, %v689
        %v691 = vld [vmem:[#allocation9] sm:$0x1]
        %v693 = vperm.slane %v691, 0
        %v695 = vmul.f32 %v690, %v693
        %v696 = vld [vmem:[%s2] sm:$0x1]
        %v698 = vperm.slane %v696, 0
        %v700 = vadd.f32 %v695, %v698
        %v701 = vpack.c.bf16 %v700, %v700
        %v702 = vld [vmem:[#allocation11] sm:$0xf]
        %v703 = vld [vmem:[#allocation11 + $0x4] sm:$0xf]
        %v704 = vld [vmem:[#allocation11 + $0x8] sm:$0xf]
        %v705 = vld [vmem:[#allocation11 + $0xc] sm:$0xf]
        %v710 = vunpack.c.l.b16 %v702
        %v711 = vunpack.c.l.b16 %v703
        %v712 = vunpack.c.l.b16 %v704
        %v713 = vunpack.c.l.b16 %v705
        %v714 = vpack.c.b16 %v711, %v710
        %v715 = vpack.c.b16 %v713, %v712
        %v719 = vsel %vm661, %v701, 0
        %721 = vmatpush.bf16.msra.mxu0 0
        %722 = vmatpush.bf16.msra.mxu0 0
        %723 = vmatpush.bf16.msra.mxu0 0
        %724 = vmatpush.bf16.msra.mxu0 0
        %725 = vmatpush.bf16.msra.mxu0 0
        %726 = vmatpush.bf16.msra.mxu0 0
        %727 = vmatpush.bf16.msra.mxu0 %v715
        %728 = vmatpush.bf16.msra.mxu0 %v714
        %729 = vmatmul.bf16.gmra.mxu0 %v719
        %v730 = vpop.f32.mrf.mxu0
        %v731 = vadd.f32 0.0, %v730
        %v732 = vpop.f32.mrf.mxu0
        %733 = vdwg.mxu0
        %v734 = vpack.c.bf16 %v731, %v731
        %vm735 = vcmask 257024
        %736 = vst.msk [vmem:[#allocation2] sm:$0xf] %vm735, %v734
        %v737 = vld [vmem:[#allocation12] sm:$0xf]
        %v738 = vld [vmem:[#allocation12 + $0x4] sm:$0xf]
        %v739 = vld [vmem:[#allocation12 + $0x8] sm:$0xf]
        %v740 = vld [vmem:[#allocation12 + $0xc] sm:$0xf]
        %v745 = vunpack.c.l.b16 %v737
        %v746 = vunpack.c.l.b16 %v738
        %v747 = vunpack.c.l.b16 %v739
        %v748 = vunpack.c.l.b16 %v740
        %v749 = vpack.c.b16 %v746, %v745
        %v750 = vpack.c.b16 %v748, %v747
        %753 = vmatpush.bf16.msra.mxu0 0
        %754 = vmatpush.bf16.msra.mxu0 0
        %755 = vmatpush.bf16.msra.mxu0 0
        %756 = vmatpush.bf16.msra.mxu0 0
        %757 = vmatpush.bf16.msra.mxu0 0
        %758 = vmatpush.bf16.msra.mxu0 0
        %759 = vmatpush.bf16.msra.mxu0 %v750
        %760 = vmatpush.bf16.msra.mxu0 %v749
        %761 = vmatmul.bf16.gmra.mxu0 %v719
        %v762 = vpop.f32.mrf.mxu0
        %v763 = vadd.f32 0.0, %v762
        %v764 = vpop.f32.mrf.mxu0
        %765 = vdwg.mxu0
        %v766 = vpack.c.bf16 %v763, %v763
        %767 = vst.msk [vmem:[#allocation3] sm:$0xf] %vm735, %v766
        %v768 = vld [vmem:[#allocation14] sm:$0xf]
        %v769 = vld [vmem:[#allocation14 + $0x4] sm:$0xf]
        %v770 = vld [vmem:[#allocation14 + $0x8] sm:$0xf]
        %v771 = vld [vmem:[#allocation14 + $0xc] sm:$0xf]
        %v776 = vunpack.c.l.b16 %v768
        %v777 = vunpack.c.l.b16 %v769
        %v778 = vunpack.c.l.b16 %v770
        %v779 = vunpack.c.l.b16 %v771
        %v780 = vpack.c.b16 %v777, %v776
        %v781 = vpack.c.b16 %v779, %v778
        %784 = vmatpush.bf16.msra.mxu0 0
        %785 = vmatpush.bf16.msra.mxu0 0
        %786 = vmatpush.bf16.msra.mxu0 0
        %787 = vmatpush.bf16.msra.mxu0 0
        %788 = vmatpush.bf16.msra.mxu0 0
        %789 = vmatpush.bf16.msra.mxu0 0
        %790 = vmatpush.bf16.msra.mxu0 %v781
        %791 = vmatpush.bf16.msra.mxu0 %v780
        %792 = vmatmul.bf16.gmra.mxu0 %v719
        %v793 = vpop.f32.mrf.mxu0
        %v794 = vadd.f32 0.0, %v793
        %v795 = vpop.f32.mrf.mxu0
        %796 = vdwg.mxu0
        %v797 = vpack.c.bf16 %v794, %v794
        %798 = vst.msk [vmem:[#allocation4] sm:$0xf] %vm735, %v797
        %v799 = vld [vmem:[#allocation2] sm:$0xf]
        %v800 = vld [vmem:[#allocation3] sm:$0xf]
        %v801 = vld [vmem:[#allocation4] sm:$0xf]
        %vm802 = vcmask 64512
        %v804 = vsel %vm802, %v799, 0
        %v807 = vsel %vm802, %v800, 0
        %809 = vmatpush.bf16.xpose.msra.mxu0 0
        %810 = vmatpush.bf16.xpose.msra.mxu0 0
        %811 = vmatpush.bf16.xpose.msra.mxu0 0
        %812 = vmatpush.bf16.xpose.msra.mxu0 0
        %813 = vmatpush.bf16.xpose.msra.mxu0 0
        %814 = vmatpush.bf16.xpose.msra.mxu0 0
        %815 = vmatpush.bf16.xpose.msra.mxu0 0
        %816 = vmatpush.bf16.xpose.msra.mxu0 %v807
        %817 = vmatmul.bf16.gmra.mxu0 %v804
        %v818 = vpop.f32.mrf.mxu0
        %v819 = vadd.f32 0.0, %v818
        %v820 = vpop.f32.mrf.mxu0
        %821 = vdwg.mxu0
        %v822 = vsel %vm802, %v819, -inf
        %823 = vmax.xlane.f32.xlu0 %v822
        %v824 = vpop.xlane.xlu0 %823
        %v825 = vsub.f32 %v819, %v824
        %v826 = vmul.f32 %v825, 1.442695
        %v827 = vpow.pop %v826
        %v828 = vsel %vm802, %v827, 0.0
        %829 = vadd.xlane.f32.xlu0 %v828
        %v830 = vpop.xlane.xlu0 %829
        %v831 = vrcp.pop %v830
        %v832 = vmul.f32 %v827, %v831
        %v833 = vpack.c.bf16 %v832, %v832
        %v835 = vsel %vm802, %v833, 0
        %vm837 = vcmask 1043456
        %v839 = vsel %vm837, %v801, 0
        %841 = vmatpush.bf16.msra.mxu0 0
        %842 = vmatpush.bf16.msra.mxu0 0
        %843 = vmatpush.bf16.msra.mxu0 0
        %844 = vmatpush.bf16.msra.mxu0 0
        %845 = vmatpush.bf16.msra.mxu0 0
        %846 = vmatpush.bf16.msra.mxu0 0
        %847 = vmatpush.bf16.msra.mxu0 0
        %848 = vmatpush.bf16.msra.mxu0 %v839
        %849 = vmatmul.bf16.gmra.mxu0 %v835
        %v850 = vpop.f32.mrf.mxu0
        %v851 = vadd.f32 0.0, %v850
        %v852 = vpop.f32.mrf.mxu0
        %853 = vdwg.mxu0
        %v854 = vpack.c.bf16 %v851, %v851
        %vm855 = vcmask 60416
        %856 = vst.msk [vmem:[#allocation5] sm:$0xf] %vm855, %v854
        %v857 = vld [vmem:[#allocation2] sm:$0xf]
        %v858 = vld [vmem:[#allocation3] sm:$0xf]
        %v859 = vld [vmem:[#allocation4] sm:$0xf]
        %v861 = vunpack.c.l.b16 %v857
        %v862 = vpack.c.b16 %v861, %v861
        %863 = vrot.lane.b32.xlu0 %v862, 120
        %v864 = vpop.permute.xlu0 %863
        %v866 = vunpack.c.l.b16 %v858
        %v867 = vpack.c.b16 %v866, %v866
        %868 = vrot.lane.b32.xlu0 %v867, 120
        %v869 = vpop.permute.xlu0 %868
        %v871 = vsel %vm802, %v864, 0
        %v874 = vsel %vm802, %v869, 0
        %876 = vmatpush.bf16.xpose.msra.mxu0 0
        %877 = vmatpush.bf16.xpose.msra.mxu0 0
        %878 = vmatpush.bf16.xpose.msra.mxu0 0
        %879 = vmatpush.bf16.xpose.msra.mxu0 0
        %880 = vmatpush.bf16.xpose.msra.mxu0 0
        %881 = vmatpush.bf16.xpose.msra.mxu0 0
        %882 = vmatpush.bf16.xpose.msra.mxu0 0
        %883 = vmatpush.bf16.xpose.msra.mxu0 %v874
        %884 = vmatmul.bf16.gmra.mxu0 %v871
        %v885 = vpop.f32.mrf.mxu0
        %v886 = vadd.f32 0.0, %v885
        %v887 = vpop.f32.mrf.mxu0
        %888 = vdwg.mxu0
        %v889 = vsel %vm802, %v886, -inf
        %890 = vmax.xlane.f32.xlu0 %v889
        %v891 = vpop.xlane.xlu0 %890
        %v892 = vsub.f32 %v886, %v891
        %v893 = vmul.f32 %v892, 1.442695
        %v894 = vpow.pop %v893
        %v895 = vsel %vm802, %v894, 0.0
        %896 = vadd.xlane.f32.xlu0 %v895
        %v897 = vpop.xlane.xlu0 %896
        %v898 = vrcp.pop %v897
        %v899 = vmul.f32 %v894, %v898
        %v900 = vpack.c.bf16 %v899, %v899
        %v902 = vunpack.c.l.b16 %v859
        %v903 = vpack.c.b16 %v902, %v902
        %904 = vrot.lane.b32.xlu0 %v903, 120
        %v905 = vpop.permute.xlu0 %904
        %v907 = vsel %vm802, %v900, 0
        %v910 = vsel %vm837, %v905, 0
        %912 = vmatpush.bf16.msra.mxu0 0
        %913 = vmatpush.bf16.msra.mxu0 0
        %914 = vmatpush.bf16.msra.mxu0 0
        %915 = vmatpush.bf16.msra.mxu0 0
        %916 = vmatpush.bf16.msra.mxu0 0
        %917 = vmatpush.bf16.msra.mxu0 0
        %918 = vmatpush.bf16.msra.mxu0 0
        %919 = vmatpush.bf16.msra.mxu0 %v910
        %920 = vmatmul.bf16.gmra.mxu0 %v907
        %v921 = vpop.f32.mrf.mxu0
        %v922 = vadd.f32 0.0, %v921
        %v923 = vpop.f32.mrf.mxu0
        %924 = vdwg.mxu0
        %v925 = vpack.c.bf16 %v922, %v922
        %927 = vrot.lane.b32.xlu0 %v925, 8
        %v928 = vpop.permute.xlu0 %927
        %vm930 = vcmask 126016
        %931 = vst.msk [vmem:[#allocation5] sm:$0xf] %vm930, %v928
        %v932 = vld [vmem:[#allocation2] sm:$0xf]
        %v933 = vld [vmem:[#allocation3] sm:$0xf]
        %v934 = vld [vmem:[#allocation4] sm:$0xf]
        %v936 = vunpack.c.l.b16 %v932
        %v937 = vpack.c.b16 %v936, %v936
        %938 = vrot.lane.b32.xlu0 %v937, 112
        %v939 = vpop.permute.xlu0 %938
        %v941 = vunpack.c.l.b16 %v933
        %v942 = vpack.c.b16 %v941, %v941
        %943 = vrot.lane.b32.xlu0 %v942, 112
        %v944 = vpop.permute.xlu0 %943
        %v946 = vsel %vm802, %v939, 0
        %v949 = vsel %vm802, %v944, 0
        %951 = vmatpush.bf16.xpose.msra.mxu0 0
        %952 = vmatpush.bf16.xpose.msra.mxu0 0
        %953 = vmatpush.bf16.xpose.msra.mxu0 0
        %954 = vmatpush.bf16.xpose.msra.mxu0 0
        %955 = vmatpush.bf16.xpose.msra.mxu0 0
        %956 = vmatpush.bf16.xpose.msra.mxu0 0
        %957 = vmatpush.bf16.xpose.msra.mxu0 0
        %958 = vmatpush.bf16.xpose.msra.mxu0 %v949
        %959 = vmatmul.bf16.gmra.mxu0 %v946
        %v960 = vpop.f32.mrf.mxu0
        %v961 = vadd.f32 0.0, %v960
        %v962 = vpop.f32.mrf.mxu0
        %963 = vdwg.mxu0
        %v964 = vsel %vm802, %v961, -inf
        %965 = vmax.xlane.f32.xlu0 %v964
        %v966 = vpop.xlane.xlu0 %965
        %v967 = vsub.f32 %v961, %v966
        %v968 = vmul.f32 %v967, 1.442695
        %v969 = vpow.pop %v968
        %v970 = vsel %vm802, %v969, 0.0
        %971 = vadd.xlane.f32.xlu0 %v970
        %v972 = vpop.xlane.xlu0 %971
        %v973 = vrcp.pop %v972
        %v974 = vmul.f32 %v969, %v973
        %v975 = vpack.c.bf16 %v974, %v974
        %v977 = vunpack.c.l.b16 %v934
        %v978 = vpack.c.b16 %v977, %v977
        %979 = vrot.lane.b32.xlu0 %v978, 112
        %v980 = vpop.permute.xlu0 %979
        %v982 = vsel %vm802, %v975, 0
        %v985 = vsel %vm837, %v980, 0
        %987 = vmatpush.bf16.msra.mxu0 0
        %988 = vmatpush.bf16.msra.mxu0 0
        %989 = vmatpush.bf16.msra.mxu0 0
        %990 = vmatpush.bf16.msra.mxu0 0
        %991 = vmatpush.bf16.msra.mxu0 0
        %992 = vmatpush.bf16.msra.mxu0 0
        %993 = vmatpush.bf16.msra.mxu0 0
        %994 = vmatpush.bf16.msra.mxu0 %v985
        %995 = vmatmul.bf16.gmra.mxu0 %v982
        %v996 = vpop.f32.mrf.mxu0
        %v997 = vadd.f32 0.0, %v996
        %v998 = vpop.f32.mrf.mxu0
        %999 = vdwg.mxu0
        %v1000 = vpack.c.bf16 %v997, %v997
        %1002 = vrot.lane.b32.xlu0 %v1000, 16
        %v1003 = vpop.permute.xlu0 %1002
        %vm1005 = vcmask 191616
        %1006 = vst.msk [vmem:[#allocation5] sm:$0xf] %vm1005, %v1003
        %v1007 = vld [vmem:[#allocation2] sm:$0xf]
        %v1008 = vld [vmem:[#allocation3] sm:$0xf]
        %v1009 = vld [vmem:[#allocation4] sm:$0xf]
        %v1011 = vunpack.c.l.b16 %v1007
        %v1012 = vpack.c.b16 %v1011, %v1011
        %1013 = vrot.lane.b32.xlu0 %v1012, 104
        %v1014 = vpop.permute.xlu0 %1013
        %v1016 = vunpack.c.l.b16 %v1008
        %v1017 = vpack.c.b16 %v1016, %v1016
        %1018 = vrot.lane.b32.xlu0 %v1017, 104
        %v1019 = vpop.permute.xlu0 %1018
        %v1021 = vsel %vm802, %v1014, 0
        %v1024 = vsel %vm802, %v1019, 0
        %1026 = vmatpush.bf16.xpose.msra.mxu0 0
        %1027 = vmatpush.bf16.xpose.msra.mxu0 0
        %1028 = vmatpush.bf16.xpose.msra.mxu0 0
        %1029 = vmatpush.bf16.xpose.msra.mxu0 0
        %1030 = vmatpush.bf16.xpose.msra.mxu0 0
        %1031 = vmatpush.bf16.xpose.msra.mxu0 0
        %1032 = vmatpush.bf16.xpose.msra.mxu0 0
        %1033 = vmatpush.bf16.xpose.msra.mxu0 %v1024
        %1034 = vmatmul.bf16.gmra.mxu0 %v1021
        %v1035 = vpop.f32.mrf.mxu0
        %v1036 = vadd.f32 0.0, %v1035
        %v1037 = vpop.f32.mrf.mxu0
        %1038 = vdwg.mxu0
        %v1039 = vsel %vm802, %v1036, -inf
        %1040 = vmax.xlane.f32.xlu0 %v1039
        %v1041 = vpop.xlane.xlu0 %1040
        %v1042 = vsub.f32 %v1036, %v1041
        %v1043 = vmul.f32 %v1042, 1.442695
        %v1044 = vpow.pop %v1043
        %v1045 = vsel %vm802, %v1044, 0.0
        %1046 = vadd.xlane.f32.xlu0 %v1045
        %v1047 = vpop.xlane.xlu0 %1046
        %v1048 = vrcp.pop %v1047
        %v1049 = vmul.f32 %v1044, %v1048
        %v1050 = vpack.c.bf16 %v1049, %v1049
        %v1052 = vunpack.c.l.b16 %v1009
        %v1053 = vpack.c.b16 %v1052, %v1052
        %1054 = vrot.lane.b32.xlu0 %v1053, 104
        %v1055 = vpop.permute.xlu0 %1054
        %v1057 = vsel %vm802, %v1050, 0
        %v1060 = vsel %vm837, %v1055, 0
        %1062 = vmatpush.bf16.msra.mxu0 0
        %1063 = vmatpush.bf16.msra.mxu0 0
        %1064 = vmatpush.bf16.msra.mxu0 0
        %1065 = vmatpush.bf16.msra.mxu0 0
        %1066 = vmatpush.bf16.msra.mxu0 0
        %1067 = vmatpush.bf16.msra.mxu0 0
        %1068 = vmatpush.bf16.msra.mxu0 0
        %1069 = vmatpush.bf16.msra.mxu0 %v1060
        %1070 = vmatmul.bf16.gmra.mxu0 %v1057
        %v1071 = vpop.f32.mrf.mxu0
        %v1072 = vadd.f32 0.0, %v1071
        %v1073 = vpop.f32.mrf.mxu0
        %1074 = vdwg.mxu0
        %v1075 = vpack.c.bf16 %v1072, %v1072
        %1077 = vrot.lane.b32.xlu0 %v1075, 24
        %v1078 = vpop.permute.xlu0 %1077
        %vm1080 = vcmask 257216
        %1081 = vst.msk [vmem:[#allocation5] sm:$0xf] %vm1080, %v1078
        %v1082 = vld [vmem:[#allocation5] sm:$0xf]
        %v1083 = vld [vmem:[#allocation15] sm:$0xf]
        %v1084 = vld [vmem:[#allocation15 + $0x4] sm:$0xf]
        %v1085 = vld [vmem:[#allocation15 + $0x8] sm:$0xf]
        %v1086 = vld [vmem:[#allocation15 + $0xc] sm:$0xf]
        %v1087 = vld [vmem:[%s9] sm:$0x1]
        %v1089 = vperm.slane %v1087, 0
        %v1095 = vunpack.c.l.b16 %v1083
        %v1096 = vunpack.c.l.b16 %v1084
        %v1097 = vunpack.c.l.b16 %v1085
        %v1098 = vunpack.c.l.b16 %v1086
        %v1099 = vpack.c.b16 %v1096, %v1095
        %v1100 = vpack.c.b16 %v1098, %v1097
        %v1104 = vsel %vm661, %v1082, 0
        %1106 = vmatpush.bf16.msra.mxu0 0
        %1107 = vmatpush.bf16.msra.mxu0 0
        %1108 = vmatpush.bf16.msra.mxu0 0
        %1109 = vmatpush.bf16.msra.mxu0 0
        %1110 = vmatpush.bf16.msra.mxu0 0
        %1111 = vmatpush.bf16.msra.mxu0 0
        %1112 = vmatpush.bf16.msra.mxu0 %v1100
        %1113 = vmatpush.bf16.msra.mxu0 %v1099
        %1114 = vmatmul.bf16.gmra.mxu0 %v1104
        %v1115 = vpop.f32.mrf.mxu0
        %v1116 = vadd.f32 %v1089, %v1115
        %v1117 = vpop.f32.mrf.mxu0
        %1118 = vdwg.mxu0
        %v1119 = vld [vmem:[%s3] sm:$0x1]
        %v1121 = vperm.slane %v1119, 0
        %v1123 = vmul.f32 %v690, %v1121
        %v1124 = vld [vmem:[%s4] sm:$0x1]
        %v1126 = vperm.slane %v1124, 0
        %v1128 = vadd.f32 %v1123, %v1126
        %v1129 = vpack.c.bf16 %v1128, %v1128
        %v1130 = vld [vmem:[#allocation17] sm:$0xf]
        %v1131 = vld [vmem:[#allocation17 + $0x4] sm:$0xf]
        %v1132 = vld [vmem:[#allocation17 + $0x8] sm:$0xf]
        %v1133 = vld [vmem:[#allocation17 + $0xc] sm:$0xf]
        %v1138 = vunpack.c.l.b16 %v1130
        %v1139 = vunpack.c.l.b16 %v1131
        %v1140 = vunpack.c.l.b16 %v1132
        %v1141 = vunpack.c.l.b16 %v1133
        %v1142 = vpack.c.b16 %v1139, %v1138
        %v1143 = vpack.c.b16 %v1141, %v1140
        %v1147 = vsel %vm661, %v1129, 0
        %1149 = vmatpush.bf16.msra.mxu0 0
        %1150 = vmatpush.bf16.msra.mxu0 0
        %1151 = vmatpush.bf16.msra.mxu0 0
        %1152 = vmatpush.bf16.msra.mxu0 0
        %1153 = vmatpush.bf16.msra.mxu0 0
        %1154 = vmatpush.bf16.msra.mxu0 0
        %1155 = vmatpush.bf16.msra.mxu0 %v1143
        %1156 = vmatpush.bf16.msra.mxu0 %v1142
        %1157 = vmatmul.bf16.gmra.mxu0 %v1147
        %v1158 = vpop.f32.mrf.mxu0
        %v1159 = vadd.f32 0.0, %v1158
        %v1160 = vpop.f32.mrf.mxu0
        %1161 = vdwg.mxu0
        %v1162 = vpack.c.bf16 %v1159, %v1159
        %1163 = vst.msk [vmem:[#allocation2] sm:$0xf] %vm735, %v1162
        %v1164 = vld [vmem:[#allocation18] sm:$0xf]
        %v1165 = vld [vmem:[#allocation18 + $0x4] sm:$0xf]
        %v1166 = vld [vmem:[#allocation18 + $0x8] sm:$0xf]
        %v1167 = vld [vmem:[#allocation18 + $0xc] sm:$0xf]
        %v1172 = vunpack.c.l.b16 %v1164
        %v1173 = vunpack.c.l.b16 %v1165
        %v1174 = vunpack.c.l.b16 %v1166
        %v1175 = vunpack.c.l.b16 %v1167
        %v1176 = vpack.c.b16 %v1173, %v1172
        %v1177 = vpack.c.b16 %v1175, %v1174
        %1180 = vmatpush.bf16.msra.mxu0 0
        %1181 = vmatpush.bf16.msra.mxu0 0
        %1182 = vmatpush.bf16.msra.mxu0 0
        %1183 = vmatpush.bf16.msra.mxu0 0
        %1184 = vmatpush.bf16.msra.mxu0 0
        %1185 = vmatpush.bf16.msra.mxu0 0
        %1186 = vmatpush.bf16.msra.mxu0 %v1177
        %1187 = vmatpush.bf16.msra.mxu0 %v1176
        %1188 = vmatmul.bf16.gmra.mxu0 %v1147
        %v1189 = vpop.f32.mrf.mxu0
        %v1190 = vadd.f32 0.0, %v1189
        %v1191 = vpop.f32.mrf.mxu0
        %1192 = vdwg.mxu0
        %v1193 = vpack.c.bf16 %v1190, %v1190
        %1194 = vst.msk [vmem:[#allocation3] sm:$0xf] %vm735, %v1193
        %v1195 = vld [vmem:[#allocation20] sm:$0xf]
        %v1196 = vld [vmem:[#allocation20 + $0x4] sm:$0xf]
        %v1197 = vld [vmem:[#allocation20 + $0x8] sm:$0xf]
        %v1198 = vld [vmem:[#allocation20 + $0xc] sm:$0xf]
        %v1203 = vunpack.c.l.b16 %v1195
        %v1204 = vunpack.c.l.b16 %v1196
        %v1205 = vunpack.c.l.b16 %v1197
        %v1206 = vunpack.c.l.b16 %v1198
        %v1207 = vpack.c.b16 %v1204, %v1203
        %v1208 = vpack.c.b16 %v1206, %v1205
        %1211 = vmatpush.bf16.msra.mxu0 0
        %1212 = vmatpush.bf16.msra.mxu0 0
        %1213 = vmatpush.bf16.msra.mxu0 0
        %1214 = vmatpush.bf16.msra.mxu0 0
        %1215 = vmatpush.bf16.msra.mxu0 0
        %1216 = vmatpush.bf16.msra.mxu0 0
        %1217 = vmatpush.bf16.msra.mxu0 %v1208
        %1218 = vmatpush.bf16.msra.mxu0 %v1207
        %1219 = vmatmul.bf16.gmra.mxu0 %v1147
        %v1220 = vpop.f32.mrf.mxu0
        %v1221 = vadd.f32 0.0, %v1220
        %v1222 = vpop.f32.mrf.mxu0
        %1223 = vdwg.mxu0
        %v1224 = vpack.c.bf16 %v1221, %v1221
        %1225 = vst.msk [vmem:[#allocation4] sm:$0xf] %vm735, %v1224
        %v1226 = vld [vmem:[#allocation2] sm:$0xf]
        %v1227 = vld [vmem:[#allocation3] sm:$0xf]
        %v1228 = vld [vmem:[#allocation4] sm:$0xf]
        %v1230 = vsel %vm802, %v1226, 0
        %v1233 = vsel %vm802, %v1227, 0
        %1235 = vmatpush.bf16.xpose.msra.mxu0 0
        %1236 = vmatpush.bf16.xpose.msra.mxu0 0
        %1237 = vmatpush.bf16.xpose.msra.mxu0 0
        %1238 = vmatpush.bf16.xpose.msra.mxu0 0
        %1239 = vmatpush.bf16.xpose.msra.mxu0 0
        %1240 = vmatpush.bf16.xpose.msra.mxu0 0
        %1241 = vmatpush.bf16.xpose.msra.mxu0 0
        %1242 = vmatpush.bf16.xpose.msra.mxu0 %v1233
        %1243 = vmatmul.bf16.gmra.mxu0 %v1230
        %v1244 = vpop.f32.mrf.mxu0
        %v1245 = vadd.f32 0.0, %v1244
        %v1246 = vpop.f32.mrf.mxu0
        %1247 = vdwg.mxu0
        %v1248 = vsel %vm802, %v1245, -inf
        %1249 = vmax.xlane.f32.xlu0 %v1248
        %v1250 = vpop.xlane.xlu0 %1249
        %v1251 = vsub.f32 %v1245, %v1250
        %v1252 = vmul.f32 %v1251, 1.442695
        %v1253 = vpow.pop %v1252
        %v1254 = vsel %vm802, %v1253, 0.0
        %1255 = vadd.xlane.f32.xlu0 %v1254
        %v1256 = vpop.xlane.xlu0 %1255
        %v1257 = vrcp.pop %v1256
        %v1258 = vmul.f32 %v1253, %v1257
        %v1259 = vpack.c.bf16 %v1258, %v1258
        %v1261 = vsel %vm802, %v1259, 0
        %v1264 = vsel %vm837, %v1228, 0
        %1266 = vmatpush.bf16.msra.mxu0 0
        %1267 = vmatpush.bf16.msra.mxu0 0
        %1268 = vmatpush.bf16.msra.mxu0 0
        %1269 = vmatpush.bf16.msra.mxu0 0
        %1270 = vmatpush.bf16.msra.mxu0 0
        %1271 = vmatpush.bf16.msra.mxu0 0
        %1272 = vmatpush.bf16.msra.mxu0 0
        %1273 = vmatpush.bf16.msra.mxu0 %v1264
        %1274 = vmatmul.bf16.gmra.mxu0 %v1261
        %v1275 = vpop.f32.mrf.mxu0
        %v1276 = vadd.f32 0.0, %v1275
        %v1277 = vpop.f32.mrf.mxu0
        %1278 = vdwg.mxu0
        %v1279 = vpack.c.bf16 %v1276, %v1276
        %1280 = vst.msk [vmem:[#allocation5] sm:$0xf] %vm855, %v1279
        %v1281 = vld [vmem:[#allocation2] sm:$0xf]
        %v1282 = vld [vmem:[#allocation3] sm:$0xf]
        %v1283 = vld [vmem:[#allocation4] sm:$0xf]
        %v1285 = vunpack.c.l.b16 %v1281
        %v1286 = vpack.c.b16 %v1285, %v1285
        %1287 = vrot.lane.b32.xlu0 %v1286, 120
        %v1288 = vpop.permute.xlu0 %1287
        %v1290 = vunpack.c.l.b16 %v1282
        %v1291 = vpack.c.b16 %v1290, %v1290
        %1292 = vrot.lane.b32.xlu0 %v1291, 120
        %v1293 = vpop.permute.xlu0 %1292
        %v1295 = vsel %vm802, %v1288, 0
        %v1298 = vsel %vm802, %v1293, 0
        %1300 = vmatpush.bf16.xpose.msra.mxu0 0
        %1301 = vmatpush.bf16.xpose.msra.mxu0 0
        %1302 = vmatpush.bf16.xpose.msra.mxu0 0
        %1303 = vmatpush.bf16.xpose.msra.mxu0 0
        %1304 = vmatpush.bf16.xpose.msra.mxu0 0
        %1305 = vmatpush.bf16.xpose.msra.mxu0 0
        %1306 = vmatpush.bf16.xpose.msra.mxu0 0
        %1307 = vmatpush.bf16.xpose.msra.mxu0 %v1298
        %1308 = vmatmul.bf16.gmra.mxu0 %v1295
        %v1309 = vpop.f32.mrf.mxu0
        %v1310 = vadd.f32 0.0, %v1309
        %v1311 = vpop.f32.mrf.mxu0
        %1312 = vdwg.mxu0
        %v1313 = vsel %vm802, %v1310, -inf
        %1314 = vmax.xlane.f32.xlu0 %v1313
        %v1315 = vpop.xlane.xlu0 %1314
        %v1316 = vsub.f32 %v1310, %v1315
        %v1317 = vmul.f32 %v1316, 1.442695
        %v1318 = vpow.pop %v1317
        %v1319 = vsel %vm802, %v1318, 0.0
        %1320 = vadd.xlane.f32.xlu0 %v1319
        %v1321 = vpop.xlane.xlu0 %1320
        %v1322 = vrcp.pop %v1321
        %v1323 = vmul.f32 %v1318, %v1322
        %v1324 = vpack.c.bf16 %v1323, %v1323
        %v1326 = vunpack.c.l.b16 %v1283
        %v1327 = vpack.c.b16 %v1326, %v1326
        %1328 = vrot.lane.b32.xlu0 %v1327, 120
        %v1329 = vpop.permute.xlu0 %1328
        %v1331 = vsel %vm802, %v1324, 0
        %v1334 = vsel %vm837, %v1329, 0
        %1336 = vmatpush.bf16.msra.mxu0 0
        %1337 = vmatpush.bf16.msra.mxu0 0
        %1338 = vmatpush.bf16.msra.mxu0 0
        %1339 = vmatpush.bf16.msra.mxu0 0
        %1340 = vmatpush.bf16.msra.mxu0 0
        %1341 = vmatpush.bf16.msra.mxu0 0
        %1342 = vmatpush.bf16.msra.mxu0 0
        %1343 = vmatpush.bf16.msra.mxu0 %v1334
        %1344 = vmatmul.bf16.gmra.mxu0 %v1331
        %v1345 = vpop.f32.mrf.mxu0
        %v1346 = vadd.f32 0.0, %v1345
        %v1347 = vpop.f32.mrf.mxu0
        %1348 = vdwg.mxu0
        %v1349 = vpack.c.bf16 %v1346, %v1346
        %1351 = vrot.lane.b32.xlu0 %v1349, 8
        %v1352 = vpop.permute.xlu0 %1351
        %1354 = vst.msk [vmem:[#allocation5] sm:$0xf] %vm930, %v1352
        %v1355 = vld [vmem:[#allocation2] sm:$0xf]
        %v1356 = vld [vmem:[#allocation3] sm:$0xf]
        %v1357 = vld [vmem:[#allocation4] sm:$0xf]
        %v1359 = vunpack.c.l.b16 %v1355
        %v1360 = vpack.c.b16 %v1359, %v1359
        %1361 = vrot.lane.b32.xlu0 %v1360, 112
        %v1362 = vpop.permute.xlu0 %1361
        %v1364 = vunpack.c.l.b16 %v1356
        %v1365 = vpack.c.b16 %v1364, %v1364
        %1366 = vrot.lane.b32.xlu0 %v1365, 112
        %v1367 = vpop.permute.xlu0 %1366
        %v1369 = vsel %vm802, %v1362, 0
        %v1372 = vsel %vm802, %v1367, 0
        %1374 = vmatpush.bf16.xpose.msra.mxu0 0
        %1375 = vmatpush.bf16.xpose.msra.mxu0 0
        %1376 = vmatpush.bf16.xpose.msra.mxu0 0
        %1377 = vmatpush.bf16.xpose.msra.mxu0 0
        %1378 = vmatpush.bf16.xpose.msra.mxu0 0
        %1379 = vmatpush.bf16.xpose.msra.mxu0 0
        %1380 = vmatpush.bf16.xpose.msra.mxu0 0
        %1381 = vmatpush.bf16.xpose.msra.mxu0 %v1372
        %1382 = vmatmul.bf16.gmra.mxu0 %v1369
        %v1383 = vpop.f32.mrf.mxu0
        %v1384 = vadd.f32 0.0, %v1383
        %v1385 = vpop.f32.mrf.mxu0
        %1386 = vdwg.mxu0
        %v1387 = vsel %vm802, %v1384, -inf
        %1388 = vmax.xlane.f32.xlu0 %v1387
        %v1389 = vpop.xlane.xlu0 %1388
        %v1390 = vsub.f32 %v1384, %v1389
        %v1391 = vmul.f32 %v1390, 1.442695
        %v1392 = vpow.pop %v1391
        %v1393 = vsel %vm802, %v1392, 0.0
        %1394 = vadd.xlane.f32.xlu0 %v1393
        %v1395 = vpop.xlane.xlu0 %1394
        %v1396 = vrcp.pop %v1395
        %v1397 = vmul.f32 %v1392, %v1396
        %v1398 = vpack.c.bf16 %v1397, %v1397
        %v1400 = vunpack.c.l.b16 %v1357
        %v1401 = vpack.c.b16 %v1400, %v1400
        %1402 = vrot.lane.b32.xlu0 %v1401, 112
        %v1403 = vpop.permute.xlu0 %1402
        %v1405 = vsel %vm802, %v1398, 0
        %v1408 = vsel %vm837, %v1403, 0
        %1410 = vmatpush.bf16.msra.mxu0 0
        %1411 = vmatpush.bf16.msra.mxu0 0
        %1412 = vmatpush.bf16.msra.mxu0 0
        %1413 = vmatpush.bf16.msra.mxu0 0
        %1414 = vmatpush.bf16.msra.mxu0 0
        %1415 = vmatpush.bf16.msra.mxu0 0
        %1416 = vmatpush.bf16.msra.mxu0 0
        %1417 = vmatpush.bf16.msra.mxu0 %v1408
        %1418 = vmatmul.bf16.gmra.mxu0 %v1405
        %v1419 = vpop.f32.mrf.mxu0
        %v1420 = vadd.f32 0.0, %v1419
        %v1421 = vpop.f32.mrf.mxu0
        %1422 = vdwg.mxu0
        %v1423 = vpack.c.bf16 %v1420, %v1420
        %1425 = vrot.lane.b32.xlu0 %v1423, 16
        %v1426 = vpop.permute.xlu0 %1425
        %1428 = vst.msk [vmem:[#allocation5] sm:$0xf] %vm1005, %v1426
        %v1429 = vld [vmem:[#allocation2] sm:$0xf]
        %v1430 = vld [vmem:[#allocation3] sm:$0xf]
        %v1431 = vld [vmem:[#allocation4] sm:$0xf]
        %v1433 = vunpack.c.l.b16 %v1429
        %v1434 = vpack.c.b16 %v1433, %v1433
        %1435 = vrot.lane.b32.xlu0 %v1434, 104
        %v1436 = vpop.permute.xlu0 %1435
        %v1438 = vunpack.c.l.b16 %v1430
        %v1439 = vpack.c.b16 %v1438, %v1438
        %1440 = vrot.lane.b32.xlu0 %v1439, 104
        %v1441 = vpop.permute.xlu0 %1440
        %v1443 = vsel %vm802, %v1436, 0
        %v1446 = vsel %vm802, %v1441, 0
        %1448 = vmatpush.bf16.xpose.msra.mxu0 0
        %1449 = vmatpush.bf16.xpose.msra.mxu0 0
        %1450 = vmatpush.bf16.xpose.msra.mxu0 0
        %1451 = vmatpush.bf16.xpose.msra.mxu0 0
        %1452 = vmatpush.bf16.xpose.msra.mxu0 0
        %1453 = vmatpush.bf16.xpose.msra.mxu0 0
        %1454 = vmatpush.bf16.xpose.msra.mxu0 0
        %1455 = vmatpush.bf16.xpose.msra.mxu0 %v1446
        %1456 = vmatmul.bf16.gmra.mxu0 %v1443
        %v1457 = vpop.f32.mrf.mxu0
        %v1458 = vadd.f32 0.0, %v1457
        %v1459 = vpop.f32.mrf.mxu0
        %1460 = vdwg.mxu0
        %v1461 = vsel %vm802, %v1458, -inf
        %1462 = vmax.xlane.f32.xlu0 %v1461
        %v1463 = vpop.xlane.xlu0 %1462
        %v1464 = vsub.f32 %v1458, %v1463
        %v1465 = vmul.f32 %v1464, 1.442695
        %v1466 = vpow.pop %v1465
        %v1467 = vsel %vm802, %v1466, 0.0
        %1468 = vadd.xlane.f32.xlu0 %v1467
        %v1469 = vpop.xlane.xlu0 %1468
        %v1470 = vrcp.pop %v1469
        %v1471 = vmul.f32 %v1466, %v1470
        %v1472 = vpack.c.bf16 %v1471, %v1471
        %v1474 = vunpack.c.l.b16 %v1431
        %v1475 = vpack.c.b16 %v1474, %v1474
        %1476 = vrot.lane.b32.xlu0 %v1475, 104
        %v1477 = vpop.permute.xlu0 %1476
        %v1479 = vsel %vm802, %v1472, 0
        %v1482 = vsel %vm837, %v1477, 0
        %1484 = vmatpush.bf16.msra.mxu0 0
        %1485 = vmatpush.bf16.msra.mxu0 0
        %1486 = vmatpush.bf16.msra.mxu0 0
        %1487 = vmatpush.bf16.msra.mxu0 0
        %1488 = vmatpush.bf16.msra.mxu0 0
        %1489 = vmatpush.bf16.msra.mxu0 0
        %1490 = vmatpush.bf16.msra.mxu0 0
        %1491 = vmatpush.bf16.msra.mxu0 %v1482
        %1492 = vmatmul.bf16.gmra.mxu0 %v1479
        %v1493 = vpop.f32.mrf.mxu0
        %v1494 = vadd.f32 0.0, %v1493
        %v1495 = vpop.f32.mrf.mxu0
        %1496 = vdwg.mxu0
        %v1497 = vpack.c.bf16 %v1494, %v1494
        %1499 = vrot.lane.b32.xlu0 %v1497, 24
        %v1500 = vpop.permute.xlu0 %1499
        %1502 = vst.msk [vmem:[#allocation5] sm:$0xf] %vm1080, %v1500
        %v1503 = vld [vmem:[#allocation5] sm:$0xf]
        %v1504 = vld [vmem:[#allocation21] sm:$0xf]
        %v1505 = vld [vmem:[#allocation21 + $0x4] sm:$0xf]
        %v1506 = vld [vmem:[#allocation21 + $0x8] sm:$0xf]
        %v1507 = vld [vmem:[#allocation21 + $0xc] sm:$0xf]
        %v1508 = vld [vmem:[%s14] sm:$0x1]
        %v1510 = vperm.slane %v1508, 0
        %v1516 = vunpack.c.l.b16 %v1504
        %v1517 = vunpack.c.l.b16 %v1505
        %v1518 = vunpack.c.l.b16 %v1506
        %v1519 = vunpack.c.l.b16 %v1507
        %v1520 = vpack.c.b16 %v1517, %v1516
        %v1521 = vpack.c.b16 %v1519, %v1518
        %v1525 = vsel %vm661, %v1503, 0
        %1527 = vmatpush.bf16.msra.mxu0 0
        %1528 = vmatpush.bf16.msra.mxu0 0
        %1529 = vmatpush.bf16.msra.mxu0 0
        %1530 = vmatpush.bf16.msra.mxu0 0
        %1531 = vmatpush.bf16.msra.mxu0 0
        %1532 = vmatpush.bf16.msra.mxu0 0
        %1533 = vmatpush.bf16.msra.mxu0 %v1521
        %1534 = vmatpush.bf16.msra.mxu0 %v1520
        %1535 = vmatmul.bf16.gmra.mxu0 %v1525
        %v1536 = vpop.f32.mrf.mxu0
        %v1537 = vadd.f32 %v1510, %v1536
        %v1538 = vpop.f32.mrf.mxu0
        %1539 = vdwg.mxu0
        %v1540 = vadd.f32 %v660, %v1116
        %v1541 = vadd.f32 %v1540, %v1537
        %1542 = vst.msk [vmem:[%s658] sm:$0xff] %vm661, %v1541
        %s1543 = sand.u32 %s365, 1
        %s1544 = scalar_lea.sflag [#allocation8], %s1543
        %s1545 = sand.u32 %s365, 1
        %s1546 = smul.addr %s1545, 8
        %s1547 = scalar_lea.vmem [#allocation23], %s1546
        // Predicated region
        $region121: #{tpu_custom_call.1} parent=79 // pred_check
          %p1548 = pneg %p375
        $region122: #{tpu_custom_call.1} parent=79 // pred_check_branch
          %1550 = sbr.rel (%p1548) target = $region124
        $region123: #{tpu_custom_call.1} parent=79 // pred_region
          %1552 = vsyncadd %s1544, 0
          %s1553 = smul.addr %s37, 8
          %s1554 = scalar_lea.hbm %s15, %s1553
          %s1556 = sshll.u32 %s1547, 4
          %s1557 = int_to_ptr.vmem [resolvable:$true] %s1556
          %s1558 = sshll.u32 %s1554, 4
          %s1559 = int_to_ptr.hbm [resolvable:$true] %s1558
          %1561 = dma.vmem_to_hbm [thread:$0]  %s1557, 128, %s1559, %s1544
        $region124: #{tpu_custom_call.1} parent=79 // pred_fallthru
          _
      $region80: #{tpu_custom_call.1} parent=5 // pred_fallthru
        _
      %p1562 = scmp.le.s32.totalorder 2, %s32
      // Predicated region
      $region125: #{tpu_custom_call.1} parent=5 // pred_check
        %p1563 = pneg %p1562
      $region126: #{tpu_custom_call.1} parent=5 // pred_check_branch
        %1565 = sbr.rel (%p1563) target = $region128
      $region127: #{tpu_custom_call.1} parent=5 // pred_region
        %s1566 = ssub.s32 %s32, 2
        // Predicated region
        $region129: #{tpu_custom_call.1} parent=127 // pred_check
          %p1567 = pneg %p381
        $region130: #{tpu_custom_call.1} parent=127 // pred_check_branch
          %1569 = sbr.rel (%p1567) target = $region132
        $region131: #{tpu_custom_call.1} parent=127 // pred_region
          %s1570 = sand.u32 %s366, 1
          %s1571 = scalar_lea.sflag [#allocation8], %s1570
          %s1572 = sand.u32 %s366, 1
          %s1573 = smul.addr %s1572, 8
          %s1574 = scalar_lea.vmem [#allocation23], %s1573
          %1576 = dma.done %s1571, 128
        $region132: #{tpu_custom_call.1} parent=127 // pred_fallthru
          _
      $region128: #{tpu_custom_call.1} parent=5 // pred_fallthru
        _
    $region6: #{tpu_custom_call.1} parent=1 // loop_footer
      %s36 = sadd.s32 1, %s32
    $region7: #{tpu_custom_call.1} parent=1 // loop_footer_branch
      %31 = sbr.rel target = $region3
    $region8: #{tpu_custom_call.1} parent=1 // loop_exit
      _
    %1577 = vsyncpa [#allocation7], 1
    %s1578 = scalar_lea.sflag [#allocation7], 1
    %1579 = vsyncpa %s1578, 1
    %1580 = vsyncpa [#allocation10], 1
    %1581 = vsyncpa [#allocation13], 1
    %1582 = vsyncpa [#allocation16], 1
    %1583 = vsyncpa [#allocation19], 1
    %1584 = vsyncpa [#allocation22], 1
    %1585 = vsyncpa [#allocation8], 1
    %s1586 = scalar_lea.sflag [#allocation8], 1
    %1587 = vsyncpa %s1586, 1

</llo_original>
